<compile_context>
chip_gen: v5e
topology: v5e:2x2
jax: 0.10.0
libtpu: 0.0.40
codegen_flags: <defaults>
</compile_context>

<pallas_src>
import math

import numpy as np
import jax
import jax.numpy as jnp
from jax.experimental import pallas as pl
from jax.experimental.pallas import tpu as pltpu  # noqa: F401  (TPU backend)

# ----------------------------- configuration -------------------------------
D_MODEL = 32          # input_text_emb.shape[1]
D_K = 16              # K_V_dim
D_V = 16
N_HEADS = 2
D_FF = 64             # dim_feedforward / opinion_dim_feedforward
N_ENC_LAYERS = 2      # opt.opinion_encoder_layers
N_DEC_LAYERS = 2      # n_layers
HIDDEN_DIM = 100      # hard-coded in AttriEncoder
ASPECT_DIM = 8
LABEL_DIM = 8
USER_DIM = 8
BUS_DIM = 8
PAD_IDX = 0

VOCAB_KEY = 20
VOCAB_ASP = 5
VOCAB_LAB = 4
VOCAB_USR = 6
VOCAB_BUS = 6
VOCAB_PAS = 20

LN_EPS = 1e-5          # torch.nn.LayerNorm default
NEG_INF = -1e9         # masked_fill value in the reference
HDK = N_HEADS * D_K    # 32
HDV = N_HEADS * D_V    # 32
_GELU_C = math.sqrt(2.0 / math.pi)

# TODO(synk): the reference constructs a VAE member but never uses it in
# forward (KL_reconstruct is the constant 0), so it is not implemented here.


# -------------------------- in-kernel building blocks ------------------------
def _add_ln(y2, resid2, gamma, beta):
    """residual add + LayerNorm over the last dim; 2-D (rows, d_model) operands."""
    r = y2 + resid2
    mean = jnp.mean(r, axis=-1, keepdims=True)
    var = jnp.mean((r - mean) ** 2, axis=-1, keepdims=True)
    return (r - mean) * jax.lax.rsqrt(var + LN_EPS) * gamma + beta


def _mha_core(x_q2, qp2, kp2, vp2, mask_add, wo, bo, gamma, beta, Lq, Lk, want_attn):
    """Multi-head attention given already-projected Q/K/V.

    x_q2:  (B*Lq, dm)   residual / layer input
    qp2:   (B*Lq, HDK)  kp2: (B*Lk, HDK)  vp2: (B*Lk, HDV)
    mask_add: (B, Lq, Lk) additive float mask (0 or -1e9)
    Returns (y2, attn) with y2 (B*Lq, dm) and attn (B, H, Lq, Lk) or None.
    """
    B = mask_add.shape[0]
    qp = qp2.reshape(B, Lq, HDK)
    kp = kp2.reshape(B, Lk, HDK)
    vp = vp2.reshape(B, Lk, HDV)
    scale = 1.0 / math.sqrt(D_K)

    proj = None
    attns = []
    for h in range(N_HEADS):                       # static unroll over heads
        qh = qp[:, :, h * D_K:(h + 1) * D_K]
        kh = kp[:, :, h * D_K:(h + 1) * D_K]
        vh = vp[:, :, h * D_V:(h + 1) * D_V]
        # contraction over the feature dim, no transpose materialized
        scores = jnp.einsum('bqd,bkd->bqk', qh, kh,
                            preferred_element_type=jnp.float32) * scale + mask_add
        mx = jnp.max(scores, axis=-1, keepdims=True)
        e = jnp.exp(scores - mx)
        attn = e * pl.reciprocal(jnp.sum(e, axis=-1, keepdims=True), approx=True)
        if want_attn:
            attns.append(attn)
        ctx = jnp.einsum('bqk,bkd->bqd', attn, vh,
                         preferred_element_type=jnp.float32).reshape(B * Lq, D_V)
        # per-head slice of the output projection -> accumulate (no head concat)
        ph = jnp.dot(ctx, wo[h * D_V:(h + 1) * D_V, :],
                     preferred_element_type=jnp.float32)
        proj = ph if proj is None else proj + ph

    y2 = _add_ln(proj + bo, x_q2, gamma, beta)
    attn_out = jnp.stack(attns, axis=1) if want_attn else None   # (B, H, Lq, Lk)
    return y2, attn_out


def _ffn_block(x2, w1, b1, w2, b2, gamma, beta):
    """PoswiseFeedForwardNet: linear -> tanh-GELU -> linear -> residual + LN."""
    h = jnp.dot(x2, w1, preferred_element_type=jnp.float32) + b1
    h = 0.5 * h * (1.0 + jnp.tanh(_GELU_C * (h + 0.044715 * h * h * h)))
    o = jnp.dot(h, w2, preferred_element_type=jnp.float32) + b2
    return _add_ln(o, x2, gamma, beta)


# ------------------------------ fused kernels --------------------------------
def _encoder_kernel(key_emb_ref, label_ref, other_ref, mask_ref,
                    ow_ref, ob_ref, wkey_ref, wlab_ref, woth_ref, outb_ref,
                    wqkv_ref, bqkv_ref, wo_ref, bo_ref, g1_ref, be1_ref,
                    w1_ref, b1_ref, w2_ref, b2_ref, g2_ref, be2_ref,
                    enc_ref):
    """AttriEncoder MLPs + full N_ENC_LAYERS Concat_Encoder stack, one launch."""
    key_emb = key_emb_ref[...]                       # (B, L, dm)
    B, L, dm = key_emb.shape
    mask_add = mask_ref[...]                         # (B, L, L) additive

    # other_MLP (tanh) on the concatenated attribute embeddings
    other_hidden = jnp.tanh(
        jnp.dot(other_ref[...], ow_ref[...], preferred_element_type=jnp.float32)
        + ob_ref[...])                               # (B, HIDDEN)

    # out_encoder_liner with the concat decomposed into partial matmuls:
    #   cat([key_emb, label_emb, other_hidden]) @ W == key_emb@W_key + label@W_lab + other@W_oth
    per_batch = (jnp.dot(label_ref[...], wlab_ref[...], preferred_element_type=jnp.float32)
                 + jnp.dot(other_hidden, woth_ref[...], preferred_element_type=jnp.float32)
                 + outb_ref[...])                    # (B, dm)
    key_proj = jnp.dot(key_emb.reshape(B * L, dm), wkey_ref[...],
                       preferred_element_type=jnp.float32).reshape(B, L, dm)
    x2 = (key_proj + per_batch[:, None, :]).reshape(B * L, dm)

    for l in range(N_ENC_LAYERS):                    # static unroll over layers
        qkv = jnp.dot(x2, wqkv_ref[l], preferred_element_type=jnp.float32) + bqkv_ref[l]
        x2, _ = _mha_core(x2,
                          qkv[:, :HDK], qkv[:, HDK:2 * HDK], qkv[:, 2 * HDK:],
                          mask_add,
                          wo_ref[l], bo_ref[l], g1_ref[l], be1_ref[l],
                          L, L, want_attn=False)     # encoder attn maps are discarded
        x2 = _ffn_block(x2, w1_ref[l], b1_ref[l], w2_ref[l], b2_ref[l],
                        g2_ref[l], be2_ref[l])

    enc_ref[...] = x2.reshape(B, L, dm)


def _decoder_kernel(dec_in_ref, enc_ref, smask_ref, cmask_ref,
                    s_wqkv_ref, s_bqkv_ref, s_wo_ref, s_bo_ref, s_g_ref, s_b_ref,
                    c_wq_ref, c_bq_ref, c_wkv_ref, c_bkv_ref, c_wo_ref, c_bo_ref,
                    c_g_ref, c_b_ref,
                    w1_ref, b1_ref, w2_ref, b2_ref, f_g_ref, f_b_ref,
                    dec_out_ref, sattn_ref, cattn_ref):
    """Full N_DEC_LAYERS decoder stack (self-MHA + cross-MHA + FFN), one launch."""
    dec = dec_in_ref[...]                            # (B, Ld, dm)  (emb + pos enc)
    enc = enc_ref[...]                               # (B, Lk, dm)
    B, Ld, dm = dec.shape
    Lk = enc.shape[1]
    smask = smask_ref[...]                           # (B, Ld, Ld)
    cmask = cmask_ref[...]                           # (B, Ld, Lk)

    x2 = dec.reshape(B * Ld, dm)
    enc2 = enc.reshape(B * Lk, dm)

    for l in range(N_DEC_LAYERS):                    # static unroll over layers
        # masked self-attention (packed QKV projection)
        qkv = jnp.dot(x2, s_wqkv_ref[l], preferred_element_type=jnp.float32) + s_bqkv_ref[l]
        x2, sa = _mha_core(x2,
                           qkv[:, :HDK], qkv[:, HDK:2 * HDK], qkv[:, 2 * HDK:],
                           smask,
                           s_wo_ref[l], s_bo_ref[l], s_g_ref[l], s_b_ref[l],
                           Ld, Ld, want_attn=True)
        # cross-attention: Q from decoder state, packed KV from encoder output
        qp = jnp.dot(x2, c_wq_ref[l], preferred_element_type=jnp.float32) + c_bq_ref[l]
        kv = jnp.dot(enc2, c_wkv_ref[l], preferred_element_type=jnp.float32) + c_bkv_ref[l]
        x2, ca = _mha_core(x2,
                           qp, kv[:, :HDK], kv[:, HDK:],
                           cmask,
                           c_wo_ref[l], c_bo_ref[l], c_g_ref[l], c_b_ref[l],
                           Ld, Lk, want_attn=True)
        # position-wise feed-forward
        x2 = _ffn_block(x2, w1_ref[l], b1_ref[l], w2_ref[l], b2_ref[l],
                        f_g_ref[l], f_b_ref[l])

        sattn_ref[l] = sa                            # one store per layer (B,H,Ld,Ld)
        cattn_ref[l] = ca                            # one store per layer (B,H,Ld,Lk)

    dec_out_ref[...] = x2.reshape(B, Ld, dm)


# ------------------------------ kernel wrappers -------------------------------
def encoder_forward(key_emb, label_emb, other_in, mask_add, ep):
    B, L, dm = key_emb.shape
    return pl.pallas_call(
        _encoder_kernel,
        out_shape=jax.ShapeDtypeStruct((B, L, dm), jnp.float32),
    )(key_emb, label_emb, other_in, mask_add,
      ep['other_w'], ep['other_b'], ep['w_key'], ep['w_lab'], ep['w_oth'], ep['out_b'],
      ep['wqkv'], ep['bqkv'], ep['wo'], ep['bo'], ep['ln1_g'], ep['ln1_b'],
      ep['w1'], ep['b1'], ep['w2'], ep['b2'], ep['ln2_g'], ep['ln2_b'])


def decoder_forward(dec_in, enc_out, self_mask, cross_mask, dp):
    B, Ld, dm = dec_in.shape
    Lk = enc_out.shape[1]
    out_shapes = (
        jax.ShapeDtypeStruct((B, Ld, dm), jnp.float32),
        jax.ShapeDtypeStruct((N_DEC_LAYERS, B, N_HEADS, Ld, Ld), jnp.float32),
        jax.ShapeDtypeStruct((N_DEC_LAYERS, B, N_HEADS, Ld, Lk), jnp.float32),
    )
    return pl.pallas_call(
        _decoder_kernel,
        out_shape=out_shapes,
    )(dec_in, enc_out, self_mask, cross_mask,
      dp['s_wqkv'], dp['s_bqkv'], dp['s_wo'], dp['s_bo'], dp['s_g'], dp['s_b'],
      dp['c_wq'], dp['c_bq'], dp['c_wkv'], dp['c_bkv'], dp['c_wo'], dp['c_bo'],
      dp['c_g'], dp['c_b'],
      dp['w1'], dp['b1'], dp['w2'], dp['b2'], dp['f_g'], dp['f_b'])


# ------------------------------ glue (plain JAX) ------------------------------
def positional_encoding(L, dim):
    pos = np.arange(L, dtype=np.float32)[:, None]
    div = np.exp(np.arange(0, dim, 2, dtype=np.float32) * -(math.log(10000.0) / dim))
    pe = np.zeros((L, dim), np.float32)
    pe[:, 0::2] = np.sin(pos * div)
    pe[:, 1::2] = np.cos(pos * div)
    return jnp.asarray(pe)


# ------------------------------ parameter init --------------------------------
def init_linear_params(key, din, dout):
    k1, k2 = jax.random.split(key)
    bound = 1.0 / math.sqrt(din)
    w = jax.random.uniform(k1, (din, dout), jnp.float32, -bound, bound)
    b = jax.random.uniform(k2, (1, dout), jnp.float32, -bound, bound)
    return w, b


def init_mha_params(key, dm):
    ks = jax.random.split(key, 4)
    wq, bq = init_linear_params(ks[0], dm, N_HEADS * D_K)
    wk, bk = init_linear_params(ks[1], dm, N_HEADS * D_K)
    wv, bv = init_linear_params(ks[2], dm, N_HEADS * D_V)
    wo, bo = init_linear_params(ks[3], N_HEADS * D_V, dm)
    return dict(wq=wq, bq=bq, wk=wk, bk=bk, wv=wv, bv=bv, wo=wo, bo=bo,
                gamma=jnp.ones((1, dm), jnp.float32),
                beta=jnp.zeros((1, dm), jnp.float32))


def init_ffn_params(key, dm, dff):
    k1, k2 = jax.random.split(key)
    w1, b1 = init_linear_params(k1, dm, dff)
    w2, b2 = init_linear_params(k2, dff, dm)
    return dict(w1=w1, b1=b1, w2=w2, b2=b2,
                gamma=jnp.ones((1, dm), jnp.float32),
                beta=jnp.zeros((1, dm), jnp.float32))


def init_params(key):
    ks = jax.random.split(key, 16)
    p = {}
    p['keyword_table'] = jax.random.normal(ks[0], (VOCAB_KEY, D_MODEL), jnp.float32) * 0.1
    p['aspect_table'] = jax.random.normal(ks[1], (VOCAB_ASP, ASPECT_DIM), jnp.float32) * 0.1
    p['label_table'] = jax.random.normal(ks[2], (VOCAB_LAB, LABEL_DIM), jnp.float32) * 0.1
    p['user_table'] = jax.random.normal(ks[3], (VOCAB_USR, USER_DIM), jnp.float32) * 0.1
    p['business_table'] = jax.random.normal(ks[4], (VOCAB_BUS, BUS_DIM), jnp.float32) * 0.1
    p['passage_table'] = jax.random.normal(ks[5], (VOCAB_PAS, D_MODEL), jnp.float32) * 0.1
    p['other_w'], p['other_b'] = init_linear_params(
        ks[6], ASPECT_DIM + USER_DIM + BUS_DIM, HIDDEN_DIM)
    p['out_w'], p['out_b'] = init_linear_params(
        ks[7], D_MODEL + HIDDEN_DIM + LABEL_DIM, D_MODEL)
    # NOTE: user_bus_MLP and AttriEncoder.pos_emb exist in __init__ but are unused in forward.
    enc_layers = []
    for i in range(N_ENC_LAYERS):
        k1, k2 = jax.random.split(ks[8 + i])
        enc_layers.append(dict(mha=init_mha_params(k1, D_MODEL),
                               ffn=init_ffn_params(k2, D_MODEL, D_FF)))
    p['enc_layers'] = enc_layers
    dec_layers = []
    for i in range(N_DEC_LAYERS):
        k1, k2, k3 = jax.random.split(ks[10 + i], 3)
        dec_layers.append(dict(self_mha=init_mha_params(k1, D_MODEL),
                               cross_mha=init_mha_params(k2, D_MODEL),
                               ffn=init_ffn_params(k3, D_MODEL, D_FF)))
    p['dec_layers'] = dec_layers
    return p


def pack_params(p):
    """Stack per-layer weights along a leading layer axis; pack QKV matrices;
    split the out_encoder_liner weight so the concat can be decomposed."""
    st = lambda xs: jnp.stack(xs, axis=0)
    cat = lambda xs: jnp.concatenate(xs, axis=1)

    ep = {
        'other_w': p['other_w'], 'other_b': p['other_b'],
        'w_key': p['out_w'][:D_MODEL],                        # rows for key_emb
        'w_lab': p['out_w'][D_MODEL:D_MODEL + LABEL_DIM],     # rows for label_emb
        'w_oth': p['out_w'][D_MODEL + LABEL_DIM:],            # rows for other_hidden
        'out_b': p['out_b'],
    }
    enc = p['enc_layers']
    ep['wqkv'] = st([cat([l['mha']['wq'], l['mha']['wk'], l['mha']['wv']]) for l in enc])
    ep['bqkv'] = st([cat([l['mha']['bq'], l['mha']['bk'], l['mha']['bv']]) for l in enc])
    ep['wo'] = st([l['mha']['wo'] for l in enc])
    ep['bo'] = st([l['mha']['bo'] for l in enc])
    ep['ln1_g'] = st([l['mha']['gamma'] for l in enc])
    ep['ln1_b'] = st([l['mha']['beta'] for l in enc])
    ep['w1'] = st([l['ffn']['w1'] for l in enc])
    ep['b1'] = st([l['ffn']['b1'] for l in enc])
    ep['w2'] = st([l['ffn']['w2'] for l in enc])
    ep['b2'] = st([l['ffn']['b2'] for l in enc])
    ep['ln2_g'] = st([l['ffn']['gamma'] for l in enc])
    ep['ln2_b'] = st([l['ffn']['beta'] for l in enc])

    dec = p['dec_layers']
    dp = {}
    dp['s_wqkv'] = st([cat([l['self_mha']['wq'], l['self_mha']['wk'], l['self_mha']['wv']]) for l in dec])
    dp['s_bqkv'] = st([cat([l['self_mha']['bq'], l['self_mha']['bk'], l['self_mha']['bv']]) for l in dec])
    dp['s_wo'] = st([l['self_mha']['wo'] for l in dec])
    dp['s_bo'] = st([l['self_mha']['bo'] for l in dec])
    dp['s_g'] = st([l['self_mha']['gamma'] for l in dec])
    dp['s_b'] = st([l['self_mha']['beta'] for l in dec])
    dp['c_wq'] = st([l['cross_mha']['wq'] for l in dec])
    dp['c_bq'] = st([l['cross_mha']['bq'] for l in dec])
    dp['c_wkv'] = st([cat([l['cross_mha']['wk'], l['cross_mha']['wv']]) for l in dec])
    dp['c_bkv'] = st([cat([l['cross_mha']['bk'], l['cross_mha']['bv']]) for l in dec])
    dp['c_wo'] = st([l['cross_mha']['wo'] for l in dec])
    dp['c_bo'] = st([l['cross_mha']['bo'] for l in dec])
    dp['c_g'] = st([l['cross_mha']['gamma'] for l in dec])
    dp['c_b'] = st([l['cross_mha']['beta'] for l in dec])
    dp['w1'] = st([l['ffn']['w1'] for l in dec])
    dp['b1'] = st([l['ffn']['b1'] for l in dec])
    dp['w2'] = st([l['ffn']['w2'] for l in dec])
    dp['b2'] = st([l['ffn']['b2'] for l in dec])
    dp['f_g'] = st([l['ffn']['gamma'] for l in dec])
    dp['f_b'] = st([l['ffn']['beta'] for l in dec])
    return ep, dp


# ------------------------------ model forward ---------------------------------
def opinion_transformer_forward(params, enc_p, dec_p,
                                input_text, aspect_type, label,
                                user_id, business_id, passage_list):
    # --- embedding lookups (glue) ---  (aspect/label unsqueeze->squeeze is identity)
    aspect_emb = params['aspect_table'][aspect_type]          # (B, aspect_dim)
    label_emb = params['label_table'][label]                  # (B, label_dim)
    user_emb = params['user_table'][user_id]                  # (B, user_dim)
    bus_emb = params['business_table'][business_id]           # (B, bus_dim)
    key_emb = params['keyword_table'][input_text]             # (B, Lk, d_model)
    other_in = jnp.concatenate([aspect_emb, user_emb, bus_emb], axis=-1)

    B, Lk = input_text.shape
    Ld = passage_list.shape[1]

    # --- additive float masks (0 / -1e9), built once in glue ---
    enc_pad = (input_text == PAD_IDX)                                      # (B, Lk)
    enc_mask = jnp.broadcast_to(
        jnp.where(enc_pad[:, None, :], NEG_INF, 0.0).astype(jnp.float32), (B, Lk, Lk))

    dec_pad = (passage_list == PAD_IDX)[:, None, :]                        # (B, 1, Ld)
    sub = (jnp.triu(jnp.ones((Ld, Ld), jnp.int32), k=1) > 0)[None]         # (1, Ld, Ld)
    self_masked = jnp.logical_or(jnp.broadcast_to(dec_pad, (B, Ld, Ld)), sub)
    self_mask = jnp.where(self_masked, NEG_INF, 0.0).astype(jnp.float32)   # (B, Ld, Ld)
    cross_mask = jnp.broadcast_to(
        jnp.where(enc_pad[:, None, :], NEG_INF, 0.0).astype(jnp.float32), (B, Ld, Lk))

    # --- fused AttriEncoder + Concat_Encoder stack (use_keywords == 'yes') ---
    enc_out = encoder_forward(key_emb, label_emb, other_in, enc_mask, enc_p)

    # --- fused Decoder stack ---
    dec_in = params['passage_table'][passage_list] + positional_encoding(Ld, D_MODEL)[None]
    dec_out, sattn, cattn = decoder_forward(dec_in, enc_out, self_mask, cross_mask, dec_p)

    dec_self_attns = jnp.transpose(sattn, (1, 0, 2, 3, 4))   # (B, NL, H, Ld, Ld)
    dec_enc_attns = jnp.transpose(cattn, (1, 0, 2, 3, 4))    # (B, NL, H, Ld, Lk)
    KL_reconstruct = 0                                       # VAE unused in forward
    return dec_out, dec_self_attns, dec_enc_attns, KL_reconstruct


# ----------------------------------- main -------------------------------------
if __name__ == "__main__":
    key = jax.random.PRNGKey(0)
    k_in, k_asp, k_lab, k_usr, k_bus, k_pas, k_par = jax.random.split(key, 7)

    B = 2
    KEY_LEN = 8      # length of input_text (keywords)
    DEC_LEN = 8      # length of passage_list

    input_text = jax.random.randint(k_in, (B, KEY_LEN), 1, VOCAB_KEY)
    input_text = input_text.at[:, -1].set(PAD_IDX)            # exercise pad mask
    aspect_type = jax.random.randint(k_asp, (B,), 1, VOCAB_ASP)
    label = jax.random.randint(k_lab, (B,), 1, VOCAB_LAB)
    user_id = jax.random.randint(k_usr, (B,), 1, VOCAB_USR)
    business_id = jax.random.randint(k_bus, (B,), 1, VOCAB_BUS)
    passage_list = jax.random.randint(k_pas, (B, DEC_LEN), 1, VOCAB_PAS)
    passage_list = passage_list.at[:, -1].set(PAD_IDX)

    params = init_params(k_par)
    enc_p, dec_p = pack_params(params)

    fwd = jax.jit(opinion_transformer_forward)
    dec_out, dsa, dea, kl = fwd(params, enc_p, dec_p,
                                input_text, aspect_type, label,
                                user_id, business_id, passage_list)

    jax.block_until_ready(dec_out)
    jax.block_until_ready(dsa)
    jax.block_until_ready(dea)

    assert dec_out.shape == (B, DEC_LEN, D_MODEL)
    assert dsa.shape == (B, N_DEC_LAYERS, N_HEADS, DEC_LEN, DEC_LEN)
    assert dea.shape == (B, N_DEC_LAYERS, N_HEADS, DEC_LEN, KEY_LEN)
    assert bool(jnp.all(jnp.isfinite(dec_out)))
    assert bool(jnp.all(jnp.isfinite(dsa)))
    assert bool(jnp.all(jnp.isfinite(dea)))

    print("KERNEL_OK")
</pallas_src>

<mosaic_0001>
module attributes {stable_mosaic.version = 11 : i64} {
  func.func @_encoder_kernel(%arg0: memref<2x8x32xf32, #tpu.memory_space<vmem>>, %arg1: memref<2x8xf32, #tpu.memory_space<vmem>>, %arg2: memref<2x24xf32, #tpu.memory_space<vmem>>, %arg3: memref<2x8x8xf32, #tpu.memory_space<vmem>>, %arg4: memref<24x100xf32, #tpu.memory_space<vmem>>, %arg5: memref<1x100xf32, #tpu.memory_space<vmem>>, %arg6: memref<32x32xf32, #tpu.memory_space<vmem>>, %arg7: memref<8x32xf32, #tpu.memory_space<vmem>>, %arg8: memref<100x32xf32, #tpu.memory_space<vmem>>, %arg9: memref<1x32xf32, #tpu.memory_space<vmem>>, %arg10: memref<2x32x96xf32, #tpu.memory_space<vmem>>, %arg11: memref<2x1x96xf32, #tpu.memory_space<vmem>>, %arg12: memref<2x32x32xf32, #tpu.memory_space<vmem>>, %arg13: memref<2x1x32xf32, #tpu.memory_space<vmem>>, %arg14: memref<2x1x32xf32, #tpu.memory_space<vmem>>, %arg15: memref<2x1x32xf32, #tpu.memory_space<vmem>>, %arg16: memref<2x32x64xf32, #tpu.memory_space<vmem>>, %arg17: memref<2x1x64xf32, #tpu.memory_space<vmem>>, %arg18: memref<2x64x32xf32, #tpu.memory_space<vmem>>, %arg19: memref<2x1x32xf32, #tpu.memory_space<vmem>>, %arg20: memref<2x1x32xf32, #tpu.memory_space<vmem>>, %arg21: memref<2x1x32xf32, #tpu.memory_space<vmem>>, %arg22: memref<2x8x32xf32, #tpu.memory_space<vmem>>) attributes {dimension_semantics = [], scalar_prefetch = 0 : i64, scratch_operands = 0 : i64, tpu.core_type = #tpu.core_type<tc>} {
    %c0 = arith.constant 0 : index
    %c0_0 = arith.constant 0 : index
    %c0_1 = arith.constant 0 : index
    %0 = vector.load %arg0[%c0, %c0_0, %c0_1] : memref<2x8x32xf32, #tpu.memory_space<vmem>>, vector<2x8x32xf32>
    %c0_2 = arith.constant 0 : index
    %c0_3 = arith.constant 0 : index
    %c0_4 = arith.constant 0 : index
    %1 = vector.load %arg3[%c0_2, %c0_3, %c0_4] : memref<2x8x8xf32, #tpu.memory_space<vmem>>, vector<2x8x8xf32>
    %c0_5 = arith.constant 0 : index
    %c0_6 = arith.constant 0 : index
    %2 = vector.load %arg2[%c0_5, %c0_6] : memref<2x24xf32, #tpu.memory_space<vmem>>, vector<2x24xf32>
    %c0_7 = arith.constant 0 : index
    %c0_8 = arith.constant 0 : index
    %3 = vector.load %arg4[%c0_7, %c0_8] : memref<24x100xf32, #tpu.memory_space<vmem>>, vector<24x100xf32>
    %cst = arith.constant dense<0.000000e+00> : vector<2x100xf32>
    %4 = tpu.matmul %2, %3, %cst {dimension_numbers = #tpu.dot_dimension_numbers<[1], [0], [0], [1], [0, 0, 1, 1], [], []>} : vector<2x24xf32>, vector<24x100xf32>, vector<2x100xf32> -> vector<2x100xf32>
    %c0_9 = arith.constant 0 : index
    %c0_10 = arith.constant 0 : index
    %5 = vector.load %arg5[%c0_9, %c0_10] : memref<1x100xf32, #tpu.memory_space<vmem>>, vector<1x100xf32>
    %6 = vector.broadcast %5 : vector<1x100xf32> to vector<2x100xf32>
    %7 = arith.addf %4, %6 : vector<2x100xf32>
    %8 = math.tanh %7 : vector<2x100xf32>
    %c0_11 = arith.constant 0 : index
    %c0_12 = arith.constant 0 : index
    %9 = vector.load %arg1[%c0_11, %c0_12] : memref<2x8xf32, #tpu.memory_space<vmem>>, vector<2x8xf32>
    %c0_13 = arith.constant 0 : index
    %c0_14 = arith.constant 0 : index
    %10 = vector.load %arg7[%c0_13, %c0_14] : memref<8x32xf32, #tpu.memory_space<vmem>>, vector<8x32xf32>
    %cst_15 = arith.constant dense<0.000000e+00> : vector<2x32xf32>
    %11 = tpu.matmul %9, %10, %cst_15 {dimension_numbers = #tpu.dot_dimension_numbers<[1], [0], [0], [1], [0, 0, 1, 1], [], []>} : vector<2x8xf32>, vector<8x32xf32>, vector<2x32xf32> -> vector<2x32xf32>
    %c0_16 = arith.constant 0 : index
    %c0_17 = arith.constant 0 : index
    %12 = vector.load %arg8[%c0_16, %c0_17] : memref<100x32xf32, #tpu.memory_space<vmem>>, vector<100x32xf32>
    %cst_18 = arith.constant dense<0.000000e+00> : vector<2x32xf32>
    %13 = tpu.matmul %8, %12, %cst_18 {dimension_numbers = #tpu.dot_dimension_numbers<[1], [0], [0], [1], [0, 0, 1, 1], [], []>} : vector<2x100xf32>, vector<100x32xf32>, vector<2x32xf32> -> vector<2x32xf32>
    %14 = arith.addf %11, %13 : vector<2x32xf32>
    %c0_19 = arith.constant 0 : index
    %c0_20 = arith.constant 0 : index
    %15 = vector.load %arg9[%c0_19, %c0_20] : memref<1x32xf32, #tpu.memory_space<vmem>>, vector<1x32xf32>
    %16 = vector.broadcast %15 : vector<1x32xf32> to vector<2x32xf32>
    %17 = arith.addf %14, %16 : vector<2x32xf32>
    %18 = vector.shape_cast %0 : vector<2x8x32xf32> to vector<16x32xf32>
    %c0_21 = arith.constant 0 : index
    %c0_22 = arith.constant 0 : index
    %19 = vector.load %arg6[%c0_21, %c0_22] : memref<32x32xf32, #tpu.memory_space<vmem>>, vector<32x32xf32>
    %cst_23 = arith.constant dense<0.000000e+00> : vector<16x32xf32>
    %20 = tpu.matmul %18, %19, %cst_23 {dimension_numbers = #tpu.dot_dimension_numbers<[1], [0], [0], [1], [0, 0, 1, 1], [], []>} : vector<16x32xf32>, vector<32x32xf32>, vector<16x32xf32> -> vector<16x32xf32>
    %21 = vector.shape_cast %20 : vector<16x32xf32> to vector<2x8x32xf32>
    %22 = vector.shape_cast %17 : vector<2x32xf32> to vector<2x1x32xf32>
    %23 = vector.broadcast %22 : vector<2x1x32xf32> to vector<2x8x32xf32>
    %24 = arith.addf %21, %23 : vector<2x8x32xf32>
    %25 = vector.shape_cast %24 : vector<2x8x32xf32> to vector<16x32xf32>
    %c0_24 = arith.constant 0 : index
    %c0_25 = arith.constant 0 : index
    %c0_26 = arith.constant 0 : index
    %26 = vector.load %arg10[%c0_24, %c0_25, %c0_26] : memref<2x32x96xf32, #tpu.memory_space<vmem>>, vector<1x32x96xf32>
    %27 = vector.shape_cast %26 : vector<1x32x96xf32> to vector<32x96xf32>
    %cst_27 = arith.constant dense<0.000000e+00> : vector<16x96xf32>
    %28 = tpu.matmul %25, %27, %cst_27 {dimension_numbers = #tpu.dot_dimension_numbers<[1], [0], [0], [1], [0, 0, 1, 1], [], []>} : vector<16x32xf32>, vector<32x96xf32>, vector<16x96xf32> -> vector<16x96xf32>
    %c0_28 = arith.constant 0 : index
    %c0_29 = arith.constant 0 : index
    %c0_30 = arith.constant 0 : index
    %29 = vector.load %arg11[%c0_28, %c0_29, %c0_30] : memref<2x1x96xf32, #tpu.memory_space<vmem>>, vector<1x1x96xf32>
    %30 = vector.shape_cast %29 : vector<1x1x96xf32> to vector<1x96xf32>
    %31 = vector.broadcast %30 : vector<1x96xf32> to vector<16x96xf32>
    %32 = arith.addf %28, %31 : vector<16x96xf32>
    %33 = vector.extract_strided_slice %32 {offsets = [0, 0], sizes = [16, 32], strides = [1, 1]} : vector<16x96xf32> to vector<16x32xf32>
    %34 = vector.extract_strided_slice %32 {offsets = [0, 32], sizes = [16, 32], strides = [1, 1]} : vector<16x96xf32> to vector<16x32xf32>
    %35 = vector.extract_strided_slice %32 {offsets = [0, 64], sizes = [16, 32], strides = [1, 1]} : vector<16x96xf32> to vector<16x32xf32>
    %c0_31 = arith.constant 0 : index
    %c0_32 = arith.constant 0 : index
    %c0_33 = arith.constant 0 : index
    %36 = vector.load %arg12[%c0_31, %c0_32, %c0_33] : memref<2x32x32xf32, #tpu.memory_space<vmem>>, vector<1x32x32xf32>
    %37 = vector.shape_cast %36 : vector<1x32x32xf32> to vector<32x32xf32>
    %c0_34 = arith.constant 0 : index
    %c0_35 = arith.constant 0 : index
    %c0_36 = arith.constant 0 : index
    %38 = vector.load %arg13[%c0_34, %c0_35, %c0_36] : memref<2x1x32xf32, #tpu.memory_space<vmem>>, vector<1x1x32xf32>
    %39 = vector.shape_cast %38 : vector<1x1x32xf32> to vector<1x32xf32>
    %c0_37 = arith.constant 0 : index
    %c0_38 = arith.constant 0 : index
    %c0_39 = arith.constant 0 : index
    %40 = vector.load %arg14[%c0_37, %c0_38, %c0_39] : memref<2x1x32xf32, #tpu.memory_space<vmem>>, vector<1x1x32xf32>
    %41 = vector.shape_cast %40 : vector<1x1x32xf32> to vector<1x32xf32>
    %c0_40 = arith.constant 0 : index
    %c0_41 = arith.constant 0 : index
    %c0_42 = arith.constant 0 : index
    %42 = vector.load %arg15[%c0_40, %c0_41, %c0_42] : memref<2x1x32xf32, #tpu.memory_space<vmem>>, vector<1x1x32xf32>
    %43 = vector.shape_cast %42 : vector<1x1x32xf32> to vector<1x32xf32>
    %44 = vector.shape_cast %33 : vector<16x32xf32> to vector<2x8x32xf32>
    %45 = vector.shape_cast %34 : vector<16x32xf32> to vector<2x8x32xf32>
    %46 = vector.shape_cast %35 : vector<16x32xf32> to vector<2x8x32xf32>
    %47 = vector.extract_strided_slice %44 {offsets = [0, 0, 0], sizes = [2, 8, 16], strides = [1, 1, 1]} : vector<2x8x32xf32> to vector<2x8x16xf32>
    %48 = vector.extract_strided_slice %45 {offsets = [0, 0, 0], sizes = [2, 8, 16], strides = [1, 1, 1]} : vector<2x8x32xf32> to vector<2x8x16xf32>
    %49 = vector.extract_strided_slice %46 {offsets = [0, 0, 0], sizes = [2, 8, 16], strides = [1, 1, 1]} : vector<2x8x32xf32> to vector<2x8x16xf32>
    "tpu.trace_start"() <{level = 10 : i32, message = "bqd,bkd->bqk"}> : () -> ()
    %cst_43 = arith.constant dense<0.000000e+00> : vector<2x8x8xf32>
    %50 = tpu.matmul %47, %48, %cst_43 {dimension_numbers = #tpu.dot_dimension_numbers<[2], [2], [1], [1], [0, 0, 0, 1, 1, 1], [0], [0]>} : vector<2x8x16xf32>, vector<2x8x16xf32>, vector<2x8x8xf32> -> vector<2x8x8xf32>
    "tpu.trace_stop"() : () -> ()
    %cst_44 = arith.constant 2.500000e-01 : f32
    %51 = vector.broadcast %cst_44 : f32 to vector<2x8x8xf32>
    %52 = arith.mulf %50, %51 : vector<2x8x8xf32>
    %53 = arith.addf %52, %1 : vector<2x8x8xf32>
    %cst_45 = arith.constant dense<0xFF800000> : vector<2x8xf32>
    %54 = vector.multi_reduction <maximumf>, %53, %cst_45 [2] : vector<2x8x8xf32> to vector<2x8xf32>
    %55 = vector.shape_cast %54 : vector<2x8xf32> to vector<2x8x1xf32>
    %56 = vector.broadcast %55 : vector<2x8x1xf32> to vector<2x8x8xf32>
    %57 = arith.subf %53, %56 : vector<2x8x8xf32>
    %58 = math.exp %57 : vector<2x8x8xf32>
    %cst_46 = arith.constant dense<0.000000e+00> : vector<2x8xf32>
    %59 = vector.multi_reduction <add>, %58, %cst_46 [2] : vector<2x8x8xf32> to vector<2x8xf32>
    %60 = vector.shape_cast %59 : vector<2x8xf32> to vector<2x8x1xf32>
    %61 = tpu.reciprocal %60 {approx = true} : vector<2x8x1xf32> -> vector<2x8x1xf32>
    %62 = vector.broadcast %61 : vector<2x8x1xf32> to vector<2x8x8xf32>
    %63 = arith.mulf %58, %62 : vector<2x8x8xf32>
    "tpu.trace_start"() <{level = 10 : i32, message = "bqk,bkd->bqd"}> : () -> ()
    %cst_47 = arith.constant dense<0.000000e+00> : vector<2x8x16xf32>
    %64 = tpu.matmul %63, %49, %cst_47 {dimension_numbers = #tpu.dot_dimension_numbers<[2], [1], [1], [2], [0, 0, 0, 1, 1, 2], [0], [0]>} : vector<2x8x8xf32>, vector<2x8x16xf32>, vector<2x8x16xf32> -> vector<2x8x16xf32>
    "tpu.trace_stop"() : () -> ()
    %65 = vector.shape_cast %64 : vector<2x8x16xf32> to vector<16x16xf32>
    %66 = vector.extract_strided_slice %37 {offsets = [0, 0], sizes = [16, 32], strides = [1, 1]} : vector<32x32xf32> to vector<16x32xf32>
    %cst_48 = arith.constant dense<0.000000e+00> : vector<16x32xf32>
    %67 = tpu.matmul %65, %66, %cst_48 {dimension_numbers = #tpu.dot_dimension_numbers<[1], [0], [0], [1], [0, 0, 1, 1], [], []>} : vector<16x16xf32>, vector<16x32xf32>, vector<16x32xf32> -> vector<16x32xf32>
    %68 = vector.extract_strided_slice %44 {offsets = [0, 0, 16], sizes = [2, 8, 16], strides = [1, 1, 1]} : vector<2x8x32xf32> to vector<2x8x16xf32>
    %69 = vector.extract_strided_slice %45 {offsets = [0, 0, 16], sizes = [2, 8, 16], strides = [1, 1, 1]} : vector<2x8x32xf32> to vector<2x8x16xf32>
    %70 = vector.extract_strided_slice %46 {offsets = [0, 0, 16], sizes = [2, 8, 16], strides = [1, 1, 1]} : vector<2x8x32xf32> to vector<2x8x16xf32>
    "tpu.trace_start"() <{level = 10 : i32, message = "bqd,bkd->bqk"}> : () -> ()
    %cst_49 = arith.constant dense<0.000000e+00> : vector<2x8x8xf32>
    %71 = tpu.matmul %68, %69, %cst_49 {dimension_numbers = #tpu.dot_dimension_numbers<[2], [2], [1], [1], [0, 0, 0, 1, 1, 1], [0], [0]>} : vector<2x8x16xf32>, vector<2x8x16xf32>, vector<2x8x8xf32> -> vector<2x8x8xf32>
    "tpu.trace_stop"() : () -> ()
    %cst_50 = arith.constant 2.500000e-01 : f32
    %72 = vector.broadcast %cst_50 : f32 to vector<2x8x8xf32>
    %73 = arith.mulf %71, %72 : vector<2x8x8xf32>
    %74 = arith.addf %73, %1 : vector<2x8x8xf32>
    %cst_51 = arith.constant dense<0xFF800000> : vector<2x8xf32>
    %75 = vector.multi_reduction <maximumf>, %74, %cst_51 [2] : vector<2x8x8xf32> to vector<2x8xf32>
    %76 = vector.shape_cast %75 : vector<2x8xf32> to vector<2x8x1xf32>
    %77 = vector.broadcast %76 : vector<2x8x1xf32> to vector<2x8x8xf32>
    %78 = arith.subf %74, %77 : vector<2x8x8xf32>
    %79 = math.exp %78 : vector<2x8x8xf32>
    %cst_52 = arith.constant dense<0.000000e+00> : vector<2x8xf32>
    %80 = vector.multi_reduction <add>, %79, %cst_52 [2] : vector<2x8x8xf32> to vector<2x8xf32>
    %81 = vector.shape_cast %80 : vector<2x8xf32> to vector<2x8x1xf32>
    %82 = tpu.reciprocal %81 {approx = true} : vector<2x8x1xf32> -> vector<2x8x1xf32>
    %83 = vector.broadcast %82 : vector<2x8x1xf32> to vector<2x8x8xf32>
    %84 = arith.mulf %79, %83 : vector<2x8x8xf32>
    "tpu.trace_start"() <{level = 10 : i32, message = "bqk,bkd->bqd"}> : () -> ()
    %cst_53 = arith.constant dense<0.000000e+00> : vector<2x8x16xf32>
    %85 = tpu.matmul %84, %70, %cst_53 {dimension_numbers = #tpu.dot_dimension_numbers<[2], [1], [1], [2], [0, 0, 0, 1, 1, 2], [0], [0]>} : vector<2x8x8xf32>, vector<2x8x16xf32>, vector<2x8x16xf32> -> vector<2x8x16xf32>
    "tpu.trace_stop"() : () -> ()
    %86 = vector.shape_cast %85 : vector<2x8x16xf32> to vector<16x16xf32>
    %87 = vector.extract_strided_slice %37 {offsets = [16, 0], sizes = [16, 32], strides = [1, 1]} : vector<32x32xf32> to vector<16x32xf32>
    %cst_54 = arith.constant dense<0.000000e+00> : vector<16x32xf32>
    %88 = tpu.matmul %86, %87, %cst_54 {dimension_numbers = #tpu.dot_dimension_numbers<[1], [0], [0], [1], [0, 0, 1, 1], [], []>} : vector<16x16xf32>, vector<16x32xf32>, vector<16x32xf32> -> vector<16x32xf32>
    %89 = arith.addf %67, %88 : vector<16x32xf32>
    %90 = vector.broadcast %39 : vector<1x32xf32> to vector<16x32xf32>
    %91 = arith.addf %89, %90 : vector<16x32xf32>
    %92 = arith.addf %91, %25 : vector<16x32xf32>
    %cst_55 = arith.constant dense<0.000000e+00> : vector<16xf32>
    %93 = vector.multi_reduction <add>, %92, %cst_55 [1] : vector<16x32xf32> to vector<16xf32>
    %94 = vector.shape_cast %93 : vector<16xf32> to vector<16x1xf32>
    %cst_56 = arith.constant 3.200000e+01 : f32
    %95 = vector.broadcast %cst_56 : f32 to vector<16x1xf32>
    %96 = arith.divf %94, %95 : vector<16x1xf32>
    %97 = vector.broadcast %96 : vector<16x1xf32> to vector<16x32xf32>
    %98 = arith.subf %92, %97 : vector<16x32xf32>
    %99 = arith.mulf %98, %98 : vector<16x32xf32>
    %cst_57 = arith.constant dense<0.000000e+00> : vector<16xf32>
    %100 = vector.multi_reduction <add>, %99, %cst_57 [1] : vector<16x32xf32> to vector<16xf32>
    %101 = vector.shape_cast %100 : vector<16xf32> to vector<16x1xf32>
    %cst_58 = arith.constant 3.200000e+01 : f32
    %102 = vector.broadcast %cst_58 : f32 to vector<16x1xf32>
    %103 = arith.divf %101, %102 : vector<16x1xf32>
    %104 = vector.broadcast %96 : vector<16x1xf32> to vector<16x32xf32>
    %105 = arith.subf %92, %104 : vector<16x32xf32>
    %cst_59 = arith.constant 9.99999974E-6 : f32
    %106 = vector.broadcast %cst_59 : f32 to vector<16x1xf32>
    %107 = arith.addf %103, %106 : vector<16x1xf32>
    %108 = math.rsqrt %107 : vector<16x1xf32>
    %109 = vector.broadcast %108 : vector<16x1xf32> to vector<16x32xf32>
    %110 = arith.mulf %105, %109 : vector<16x32xf32>
    %111 = vector.broadcast %41 : vector<1x32xf32> to vector<16x32xf32>
    %112 = arith.mulf %110, %111 : vector<16x32xf32>
    %113 = vector.broadcast %43 : vector<1x32xf32> to vector<16x32xf32>
    %114 = arith.addf %112, %113 : vector<16x32xf32>
    %c0_60 = arith.constant 0 : index
    %c0_61 = arith.constant 0 : index
    %c0_62 = arith.constant 0 : index
    %115 = vector.load %arg16[%c0_60, %c0_61, %c0_62] : memref<2x32x64xf32, #tpu.memory_space<vmem>>, vector<1x32x64xf32>
    %116 = vector.shape_cast %115 : vector<1x32x64xf32> to vector<32x64xf32>
    %c0_63 = arith.constant 0 : index
    %c0_64 = arith.constant 0 : index
    %c0_65 = arith.constant 0 : index
    %117 = vector.load %arg17[%c0_63, %c0_64, %c0_65] : memref<2x1x64xf32, #tpu.memory_space<vmem>>, vector<1x1x64xf32>
    %118 = vector.shape_cast %117 : vector<1x1x64xf32> to vector<1x64xf32>
    %c0_66 = arith.constant 0 : index
    %c0_67 = arith.constant 0 : index
    %c0_68 = arith.constant 0 : index
    %119 = vector.load %arg18[%c0_66, %c0_67, %c0_68] : memref<2x64x32xf32, #tpu.memory_space<vmem>>, vector<1x64x32xf32>
    %120 = vector.shape_cast %119 : vector<1x64x32xf32> to vector<64x32xf32>
    %c0_69 = arith.constant 0 : index
    %c0_70 = arith.constant 0 : index
    %c0_71 = arith.constant 0 : index
    %121 = vector.load %arg19[%c0_69, %c0_70, %c0_71] : memref<2x1x32xf32, #tpu.memory_space<vmem>>, vector<1x1x32xf32>
    %122 = vector.shape_cast %121 : vector<1x1x32xf32> to vector<1x32xf32>
    %c0_72 = arith.constant 0 : index
    %c0_73 = arith.constant 0 : index
    %c0_74 = arith.constant 0 : index
    %123 = vector.load %arg20[%c0_72, %c0_73, %c0_74] : memref<2x1x32xf32, #tpu.memory_space<vmem>>, vector<1x1x32xf32>
    %124 = vector.shape_cast %123 : vector<1x1x32xf32> to vector<1x32xf32>
    %c0_75 = arith.constant 0 : index
    %c0_76 = arith.constant 0 : index
    %c0_77 = arith.constant 0 : index
    %125 = vector.load %arg21[%c0_75, %c0_76, %c0_77] : memref<2x1x32xf32, #tpu.memory_space<vmem>>, vector<1x1x32xf32>
    %126 = vector.shape_cast %125 : vector<1x1x32xf32> to vector<1x32xf32>
    %cst_78 = arith.constant dense<0.000000e+00> : vector<16x64xf32>
    %127 = tpu.matmul %114, %116, %cst_78 {dimension_numbers = #tpu.dot_dimension_numbers<[1], [0], [0], [1], [0, 0, 1, 1], [], []>} : vector<16x32xf32>, vector<32x64xf32>, vector<16x64xf32> -> vector<16x64xf32>
    %128 = vector.broadcast %118 : vector<1x64xf32> to vector<16x64xf32>
    %129 = arith.addf %127, %128 : vector<16x64xf32>
    %cst_79 = arith.constant 5.000000e-01 : f32
    %130 = vector.broadcast %cst_79 : f32 to vector<16x64xf32>
    %131 = arith.mulf %130, %129 : vector<16x64xf32>
    %cst_80 = arith.constant 4.471500e-02 : f32
    %132 = vector.broadcast %cst_80 : f32 to vector<16x64xf32>
    %133 = arith.mulf %132, %129 : vector<16x64xf32>
    %134 = arith.mulf %133, %129 : vector<16x64xf32>
    %135 = arith.mulf %134, %129 : vector<16x64xf32>
    %136 = arith.addf %129, %135 : vector<16x64xf32>
    %cst_81 = arith.constant 0.797884583 : f32
    %137 = vector.broadcast %cst_81 : f32 to vector<16x64xf32>
    %138 = arith.mulf %137, %136 : vector<16x64xf32>
    %139 = math.tanh %138 : vector<16x64xf32>
    %cst_82 = arith.constant 1.000000e+00 : f32
    %140 = vector.broadcast %cst_82 : f32 to vector<16x64xf32>
    %141 = arith.addf %140, %139 : vector<16x64xf32>
    %142 = arith.mulf %131, %141 : vector<16x64xf32>
    %cst_83 = arith.constant dense<0.000000e+00> : vector<16x32xf32>
    %143 = tpu.matmul %142, %120, %cst_83 {dimension_numbers = #tpu.dot_dimension_numbers<[1], [0], [0], [1], [0, 0, 1, 1], [], []>} : vector<16x64xf32>, vector<64x32xf32>, vector<16x32xf32> -> vector<16x32xf32>
    %144 = vector.broadcast %122 : vector<1x32xf32> to vector<16x32xf32>
    %145 = arith.addf %143, %144 : vector<16x32xf32>
    %146 = arith.addf %145, %114 : vector<16x32xf32>
    %cst_84 = arith.constant dense<0.000000e+00> : vector<16xf32>
    %147 = vector.multi_reduction <add>, %146, %cst_84 [1] : vector<16x32xf32> to vector<16xf32>
    %148 = vector.shape_cast %147 : vector<16xf32> to vector<16x1xf32>
    %cst_85 = arith.constant 3.200000e+01 : f32
    %149 = vector.broadcast %cst_85 : f32 to vector<16x1xf32>
    %150 = arith.divf %148, %149 : vector<16x1xf32>
    %151 = vector.broadcast %150 : vector<16x1xf32> to vector<16x32xf32>
    %152 = arith.subf %146, %151 : vector<16x32xf32>
    %153 = arith.mulf %152, %152 : vector<16x32xf32>
    %cst_86 = arith.constant dense<0.000000e+00> : vector<16xf32>
    %154 = vector.multi_reduction <add>, %153, %cst_86 [1] : vector<16x32xf32> to vector<16xf32>
    %155 = vector.shape_cast %154 : vector<16xf32> to vector<16x1xf32>
    %cst_87 = arith.constant 3.200000e+01 : f32
    %156 = vector.broadcast %cst_87 : f32 to vector<16x1xf32>
    %157 = arith.divf %155, %156 : vector<16x1xf32>
    %158 = vector.broadcast %150 : vector<16x1xf32> to vector<16x32xf32>
    %159 = arith.subf %146, %158 : vector<16x32xf32>
    %cst_88 = arith.constant 9.99999974E-6 : f32
    %160 = vector.broadcast %cst_88 : f32 to vector<16x1xf32>
    %161 = arith.addf %157, %160 : vector<16x1xf32>
    %162 = math.rsqrt %161 : vector<16x1xf32>
    %163 = vector.broadcast %162 : vector<16x1xf32> to vector<16x32xf32>
    %164 = arith.mulf %159, %163 : vector<16x32xf32>
    %165 = vector.broadcast %124 : vector<1x32xf32> to vector<16x32xf32>
    %166 = arith.mulf %164, %165 : vector<16x32xf32>
    %167 = vector.broadcast %126 : vector<1x32xf32> to vector<16x32xf32>
    %168 = arith.addf %166, %167 : vector<16x32xf32>
    %c1 = arith.constant 1 : index
    %c0_89 = arith.constant 0 : index
    %c0_90 = arith.constant 0 : index
    %169 = vector.load %arg10[%c1, %c0_89, %c0_90] : memref<2x32x96xf32, #tpu.memory_space<vmem>>, vector<1x32x96xf32>
    %170 = vector.shape_cast %169 : vector<1x32x96xf32> to vector<32x96xf32>
    %cst_91 = arith.constant dense<0.000000e+00> : vector<16x96xf32>
    %171 = tpu.matmul %168, %170, %cst_91 {dimension_numbers = #tpu.dot_dimension_numbers<[1], [0], [0], [1], [0, 0, 1, 1], [], []>} : vector<16x32xf32>, vector<32x96xf32>, vector<16x96xf32> -> vector<16x96xf32>
    %c1_92 = arith.constant 1 : index
    %c0_93 = arith.constant 0 : index
    %c0_94 = arith.constant 0 : index
    %172 = vector.load %arg11[%c1_92, %c0_93, %c0_94] : memref<2x1x96xf32, #tpu.memory_space<vmem>>, vector<1x1x96xf32>
    %173 = vector.shape_cast %172 : vector<1x1x96xf32> to vector<1x96xf32>
    %174 = vector.broadcast %173 : vector<1x96xf32> to vector<16x96xf32>
    %175 = arith.addf %171, %174 : vector<16x96xf32>
    %176 = vector.extract_strided_slice %175 {offsets = [0, 0], sizes = [16, 32], strides = [1, 1]} : vector<16x96xf32> to vector<16x32xf32>
    %177 = vector.extract_strided_slice %175 {offsets = [0, 32], sizes = [16, 32], strides = [1, 1]} : vector<16x96xf32> to vector<16x32xf32>
    %178 = vector.extract_strided_slice %175 {offsets = [0, 64], sizes = [16, 32], strides = [1, 1]} : vector<16x96xf32> to vector<16x32xf32>
    %c1_95 = arith.constant 1 : index
    %c0_96 = arith.constant 0 : index
    %c0_97 = arith.constant 0 : index
    %179 = vector.load %arg12[%c1_95, %c0_96, %c0_97] : memref<2x32x32xf32, #tpu.memory_space<vmem>>, vector<1x32x32xf32>
    %180 = vector.shape_cast %179 : vector<1x32x32xf32> to vector<32x32xf32>
    %c1_98 = arith.constant 1 : index
    %c0_99 = arith.constant 0 : index
    %c0_100 = arith.constant 0 : index
    %181 = vector.load %arg13[%c1_98, %c0_99, %c0_100] : memref<2x1x32xf32, #tpu.memory_space<vmem>>, vector<1x1x32xf32>
    %182 = vector.shape_cast %181 : vector<1x1x32xf32> to vector<1x32xf32>
    %c1_101 = arith.constant 1 : index
    %c0_102 = arith.constant 0 : index
    %c0_103 = arith.constant 0 : index
    %183 = vector.load %arg14[%c1_101, %c0_102, %c0_103] : memref<2x1x32xf32, #tpu.memory_space<vmem>>, vector<1x1x32xf32>
    %184 = vector.shape_cast %183 : vector<1x1x32xf32> to vector<1x32xf32>
    %c1_104 = arith.constant 1 : index
    %c0_105 = arith.constant 0 : index
    %c0_106 = arith.constant 0 : index
    %185 = vector.load %arg15[%c1_104, %c0_105, %c0_106] : memref<2x1x32xf32, #tpu.memory_space<vmem>>, vector<1x1x32xf32>
    %186 = vector.shape_cast %185 : vector<1x1x32xf32> to vector<1x32xf32>
    %187 = vector.shape_cast %176 : vector<16x32xf32> to vector<2x8x32xf32>
    %188 = vector.shape_cast %177 : vector<16x32xf32> to vector<2x8x32xf32>
    %189 = vector.shape_cast %178 : vector<16x32xf32> to vector<2x8x32xf32>
    %190 = vector.extract_strided_slice %187 {offsets = [0, 0, 0], sizes = [2, 8, 16], strides = [1, 1, 1]} : vector<2x8x32xf32> to vector<2x8x16xf32>
    %191 = vector.extract_strided_slice %188 {offsets = [0, 0, 0], sizes = [2, 8, 16], strides = [1, 1, 1]} : vector<2x8x32xf32> to vector<2x8x16xf32>
    %192 = vector.extract_strided_slice %189 {offsets = [0, 0, 0], sizes = [2, 8, 16], strides = [1, 1, 1]} : vector<2x8x32xf32> to vector<2x8x16xf32>
    "tpu.trace_start"() <{level = 10 : i32, message = "bqd,bkd->bqk"}> : () -> ()
    %cst_107 = arith.constant dense<0.000000e+00> : vector<2x8x8xf32>
    %193 = tpu.matmul %190, %191, %cst_107 {dimension_numbers = #tpu.dot_dimension_numbers<[2], [2], [1], [1], [0, 0, 0, 1, 1, 1], [0], [0]>} : vector<2x8x16xf32>, vector<2x8x16xf32>, vector<2x8x8xf32> -> vector<2x8x8xf32>
    "tpu.trace_stop"() : () -> ()
    %cst_108 = arith.constant 2.500000e-01 : f32
    %194 = vector.broadcast %cst_108 : f32 to vector<2x8x8xf32>
    %195 = arith.mulf %193, %194 : vector<2x8x8xf32>
    %196 = arith.addf %195, %1 : vector<2x8x8xf32>
    %cst_109 = arith.constant dense<0xFF800000> : vector<2x8xf32>
    %197 = vector.multi_reduction <maximumf>, %196, %cst_109 [2] : vector<2x8x8xf32> to vector<2x8xf32>
    %198 = vector.shape_cast %197 : vector<2x8xf32> to vector<2x8x1xf32>
    %199 = vector.broadcast %198 : vector<2x8x1xf32> to vector<2x8x8xf32>
    %200 = arith.subf %196, %199 : vector<2x8x8xf32>
    %201 = math.exp %200 : vector<2x8x8xf32>
    %cst_110 = arith.constant dense<0.000000e+00> : vector<2x8xf32>
    %202 = vector.multi_reduction <add>, %201, %cst_110 [2] : vector<2x8x8xf32> to vector<2x8xf32>
    %203 = vector.shape_cast %202 : vector<2x8xf32> to vector<2x8x1xf32>
    %204 = tpu.reciprocal %203 {approx = true} : vector<2x8x1xf32> -> vector<2x8x1xf32>
    %205 = vector.broadcast %204 : vector<2x8x1xf32> to vector<2x8x8xf32>
    %206 = arith.mulf %201, %205 : vector<2x8x8xf32>
    "tpu.trace_start"() <{level = 10 : i32, message = "bqk,bkd->bqd"}> : () -> ()
    %cst_111 = arith.constant dense<0.000000e+00> : vector<2x8x16xf32>
    %207 = tpu.matmul %206, %192, %cst_111 {dimension_numbers = #tpu.dot_dimension_numbers<[2], [1], [1], [2], [0, 0, 0, 1, 1, 2], [0], [0]>} : vector<2x8x8xf32>, vector<2x8x16xf32>, vector<2x8x16xf32> -> vector<2x8x16xf32>
    "tpu.trace_stop"() : () -> ()
    %208 = vector.shape_cast %207 : vector<2x8x16xf32> to vector<16x16xf32>
    %209 = vector.extract_strided_slice %180 {offsets = [0, 0], sizes = [16, 32], strides = [1, 1]} : vector<32x32xf32> to vector<16x32xf32>
    %cst_112 = arith.constant dense<0.000000e+00> : vector<16x32xf32>
    %210 = tpu.matmul %208, %209, %cst_112 {dimension_numbers = #tpu.dot_dimension_numbers<[1], [0], [0], [1], [0, 0, 1, 1], [], []>} : vector<16x16xf32>, vector<16x32xf32>, vector<16x32xf32> -> vector<16x32xf32>
    %211 = vector.extract_strided_slice %187 {offsets = [0, 0, 16], sizes = [2, 8, 16], strides = [1, 1, 1]} : vector<2x8x32xf32> to vector<2x8x16xf32>
    %212 = vector.extract_strided_slice %188 {offsets = [0, 0, 16], sizes = [2, 8, 16], strides = [1, 1, 1]} : vector<2x8x32xf32> to vector<2x8x16xf32>
    %213 = vector.extract_strided_slice %189 {offsets = [0, 0, 16], sizes = [2, 8, 16], strides = [1, 1, 1]} : vector<2x8x32xf32> to vector<2x8x16xf32>
    "tpu.trace_start"() <{level = 10 : i32, message = "bqd,bkd->bqk"}> : () -> ()
    %cst_113 = arith.constant dense<0.000000e+00> : vector<2x8x8xf32>
    %214 = tpu.matmul %211, %212, %cst_113 {dimension_numbers = #tpu.dot_dimension_numbers<[2], [2], [1], [1], [0, 0, 0, 1, 1, 1], [0], [0]>} : vector<2x8x16xf32>, vector<2x8x16xf32>, vector<2x8x8xf32> -> vector<2x8x8xf32>
    "tpu.trace_stop"() : () -> ()
    %cst_114 = arith.constant 2.500000e-01 : f32
    %215 = vector.broadcast %cst_114 : f32 to vector<2x8x8xf32>
    %216 = arith.mulf %214, %215 : vector<2x8x8xf32>
    %217 = arith.addf %216, %1 : vector<2x8x8xf32>
    %cst_115 = arith.constant dense<0xFF800000> : vector<2x8xf32>
    %218 = vector.multi_reduction <maximumf>, %217, %cst_115 [2] : vector<2x8x8xf32> to vector<2x8xf32>
    %219 = vector.shape_cast %218 : vector<2x8xf32> to vector<2x8x1xf32>
    %220 = vector.broadcast %219 : vector<2x8x1xf32> to vector<2x8x8xf32>
    %221 = arith.subf %217, %220 : vector<2x8x8xf32>
    %222 = math.exp %221 : vector<2x8x8xf32>
    %cst_116 = arith.constant dense<0.000000e+00> : vector<2x8xf32>
    %223 = vector.multi_reduction <add>, %222, %cst_116 [2] : vector<2x8x8xf32> to vector<2x8xf32>
    %224 = vector.shape_cast %223 : vector<2x8xf32> to vector<2x8x1xf32>
    %225 = tpu.reciprocal %224 {approx = true} : vector<2x8x1xf32> -> vector<2x8x1xf32>
    %226 = vector.broadcast %225 : vector<2x8x1xf32> to vector<2x8x8xf32>
    %227 = arith.mulf %222, %226 : vector<2x8x8xf32>
    "tpu.trace_start"() <{level = 10 : i32, message = "bqk,bkd->bqd"}> : () -> ()
    %cst_117 = arith.constant dense<0.000000e+00> : vector<2x8x16xf32>
    %228 = tpu.matmul %227, %213, %cst_117 {dimension_numbers = #tpu.dot_dimension_numbers<[2], [1], [1], [2], [0, 0, 0, 1, 1, 2], [0], [0]>} : vector<2x8x8xf32>, vector<2x8x16xf32>, vector<2x8x16xf32> -> vector<2x8x16xf32>
    "tpu.trace_stop"() : () -> ()
    %229 = vector.shape_cast %228 : vector<2x8x16xf32> to vector<16x16xf32>
    %230 = vector.extract_strided_slice %180 {offsets = [16, 0], sizes = [16, 32], strides = [1, 1]} : vector<32x32xf32> to vector<16x32xf32>
    %cst_118 = arith.constant dense<0.000000e+00> : vector<16x32xf32>
    %231 = tpu.matmul %229, %230, %cst_118 {dimension_numbers = #tpu.dot_dimension_numbers<[1], [0], [0], [1], [0, 0, 1, 1], [], []>} : vector<16x16xf32>, vector<16x32xf32>, vector<16x32xf32> -> vector<16x32xf32>
    %232 = arith.addf %210, %231 : vector<16x32xf32>
    %233 = vector.broadcast %182 : vector<1x32xf32> to vector<16x32xf32>
    %234 = arith.addf %232, %233 : vector<16x32xf32>
    %235 = arith.addf %234, %168 : vector<16x32xf32>
    %cst_119 = arith.constant dense<0.000000e+00> : vector<16xf32>
    %236 = vector.multi_reduction <add>, %235, %cst_119 [1] : vector<16x32xf32> to vector<16xf32>
    %237 = vector.shape_cast %236 : vector<16xf32> to vector<16x1xf32>
    %cst_120 = arith.constant 3.200000e+01 : f32
    %238 = vector.broadcast %cst_120 : f32 to vector<16x1xf32>
    %239 = arith.divf %237, %238 : vector<16x1xf32>
    %240 = vector.broadcast %239 : vector<16x1xf32> to vector<16x32xf32>
    %241 = arith.subf %235, %240 : vector<16x32xf32>
    %242 = arith.mulf %241, %241 : vector<16x32xf32>
    %cst_121 = arith.constant dense<0.000000e+00> : vector<16xf32>
    %243 = vector.multi_reduction <add>, %242, %cst_121 [1] : vector<16x32xf32> to vector<16xf32>
    %244 = vector.shape_cast %243 : vector<16xf32> to vector<16x1xf32>
    %cst_122 = arith.constant 3.200000e+01 : f32
    %245 = vector.broadcast %cst_122 : f32 to vector<16x1xf32>
    %246 = arith.divf %244, %245 : vector<16x1xf32>
    %247 = vector.broadcast %239 : vector<16x1xf32> to vector<16x32xf32>
    %248 = arith.subf %235, %247 : vector<16x32xf32>
    %cst_123 = arith.constant 9.99999974E-6 : f32
    %249 = vector.broadcast %cst_123 : f32 to vector<16x1xf32>
    %250 = arith.addf %246, %249 : vector<16x1xf32>
    %251 = math.rsqrt %250 : vector<16x1xf32>
    %252 = vector.broadcast %251 : vector<16x1xf32> to vector<16x32xf32>
    %253 = arith.mulf %248, %252 : vector<16x32xf32>
    %254 = vector.broadcast %184 : vector<1x32xf32> to vector<16x32xf32>
    %255 = arith.mulf %253, %254 : vector<16x32xf32>
    %256 = vector.broadcast %186 : vector<1x32xf32> to vector<16x32xf32>
    %257 = arith.addf %255, %256 : vector<16x32xf32>
    %c1_124 = arith.constant 1 : index
    %c0_125 = arith.constant 0 : index
    %c0_126 = arith.constant 0 : index
    %258 = vector.load %arg16[%c1_124, %c0_125, %c0_126] : memref<2x32x64xf32, #tpu.memory_space<vmem>>, vector<1x32x64xf32>
    %259 = vector.shape_cast %258 : vector<1x32x64xf32> to vector<32x64xf32>
    %c1_127 = arith.constant 1 : index
    %c0_128 = arith.constant 0 : index
    %c0_129 = arith.constant 0 : index
    %260 = vector.load %arg17[%c1_127, %c0_128, %c0_129] : memref<2x1x64xf32, #tpu.memory_space<vmem>>, vector<1x1x64xf32>
    %261 = vector.shape_cast %260 : vector<1x1x64xf32> to vector<1x64xf32>
    %c1_130 = arith.constant 1 : index
    %c0_131 = arith.constant 0 : index
    %c0_132 = arith.constant 0 : index
    %262 = vector.load %arg18[%c1_130, %c0_131, %c0_132] : memref<2x64x32xf32, #tpu.memory_space<vmem>>, vector<1x64x32xf32>
    %263 = vector.shape_cast %262 : vector<1x64x32xf32> to vector<64x32xf32>
    %c1_133 = arith.constant 1 : index
    %c0_134 = arith.constant 0 : index
    %c0_135 = arith.constant 0 : index
    %264 = vector.load %arg19[%c1_133, %c0_134, %c0_135] : memref<2x1x32xf32, #tpu.memory_space<vmem>>, vector<1x1x32xf32>
    %265 = vector.shape_cast %264 : vector<1x1x32xf32> to vector<1x32xf32>
    %c1_136 = arith.constant 1 : index
    %c0_137 = arith.constant 0 : index
    %c0_138 = arith.constant 0 : index
    %266 = vector.load %arg20[%c1_136, %c0_137, %c0_138] : memref<2x1x32xf32, #tpu.memory_space<vmem>>, vector<1x1x32xf32>
    %267 = vector.shape_cast %266 : vector<1x1x32xf32> to vector<1x32xf32>
    %c1_139 = arith.constant 1 : index
    %c0_140 = arith.constant 0 : index
    %c0_141 = arith.constant 0 : index
    %268 = vector.load %arg21[%c1_139, %c0_140, %c0_141] : memref<2x1x32xf32, #tpu.memory_space<vmem>>, vector<1x1x32xf32>
    %269 = vector.shape_cast %268 : vector<1x1x32xf32> to vector<1x32xf32>
    %cst_142 = arith.constant dense<0.000000e+00> : vector<16x64xf32>
    %270 = tpu.matmul %257, %259, %cst_142 {dimension_numbers = #tpu.dot_dimension_numbers<[1], [0], [0], [1], [0, 0, 1, 1], [], []>} : vector<16x32xf32>, vector<32x64xf32>, vector<16x64xf32> -> vector<16x64xf32>
    %271 = vector.broadcast %261 : vector<1x64xf32> to vector<16x64xf32>
    %272 = arith.addf %270, %271 : vector<16x64xf32>
    %cst_143 = arith.constant 5.000000e-01 : f32
    %273 = vector.broadcast %cst_143 : f32 to vector<16x64xf32>
    %274 = arith.mulf %273, %272 : vector<16x64xf32>
    %cst_144 = arith.constant 4.471500e-02 : f32
    %275 = vector.broadcast %cst_144 : f32 to vector<16x64xf32>
    %276 = arith.mulf %275, %272 : vector<16x64xf32>
    %277 = arith.mulf %276, %272 : vector<16x64xf32>
    %278 = arith.mulf %277, %272 : vector<16x64xf32>
    %279 = arith.addf %272, %278 : vector<16x64xf32>
    %cst_145 = arith.constant 0.797884583 : f32
    %280 = vector.broadcast %cst_145 : f32 to vector<16x64xf32>
    %281 = arith.mulf %280, %279 : vector<16x64xf32>
    %282 = math.tanh %281 : vector<16x64xf32>
    %cst_146 = arith.constant 1.000000e+00 : f32
    %283 = vector.broadcast %cst_146 : f32 to vector<16x64xf32>
    %284 = arith.addf %283, %282 : vector<16x64xf32>
    %285 = arith.mulf %274, %284 : vector<16x64xf32>
    %cst_147 = arith.constant dense<0.000000e+00> : vector<16x32xf32>
    %286 = tpu.matmul %285, %263, %cst_147 {dimension_numbers = #tpu.dot_dimension_numbers<[1], [0], [0], [1], [0, 0, 1, 1], [], []>} : vector<16x64xf32>, vector<64x32xf32>, vector<16x32xf32> -> vector<16x32xf32>
    %287 = vector.broadcast %265 : vector<1x32xf32> to vector<16x32xf32>
    %288 = arith.addf %286, %287 : vector<16x32xf32>
    %289 = arith.addf %288, %257 : vector<16x32xf32>
    %cst_148 = arith.constant dense<0.000000e+00> : vector<16xf32>
    %290 = vector.multi_reduction <add>, %289, %cst_148 [1] : vector<16x32xf32> to vector<16xf32>
    %291 = vector.shape_cast %290 : vector<16xf32> to vector<16x1xf32>
    %cst_149 = arith.constant 3.200000e+01 : f32
    %292 = vector.broadcast %cst_149 : f32 to vector<16x1xf32>
    %293 = arith.divf %291, %292 : vector<16x1xf32>
    %294 = vector.broadcast %293 : vector<16x1xf32> to vector<16x32xf32>
    %295 = arith.subf %289, %294 : vector<16x32xf32>
    %296 = arith.mulf %295, %295 : vector<16x32xf32>
    %cst_150 = arith.constant dense<0.000000e+00> : vector<16xf32>
    %297 = vector.multi_reduction <add>, %296, %cst_150 [1] : vector<16x32xf32> to vector<16xf32>
    %298 = vector.shape_cast %297 : vector<16xf32> to vector<16x1xf32>
    %cst_151 = arith.constant 3.200000e+01 : f32
    %299 = vector.broadcast %cst_151 : f32 to vector<16x1xf32>
    %300 = arith.divf %298, %299 : vector<16x1xf32>
    %301 = vector.broadcast %293 : vector<16x1xf32> to vector<16x32xf32>
    %302 = arith.subf %289, %301 : vector<16x32xf32>
    %cst_152 = arith.constant 9.99999974E-6 : f32
    %303 = vector.broadcast %cst_152 : f32 to vector<16x1xf32>
    %304 = arith.addf %300, %303 : vector<16x1xf32>
    %305 = math.rsqrt %304 : vector<16x1xf32>
    %306 = vector.broadcast %305 : vector<16x1xf32> to vector<16x32xf32>
    %307 = arith.mulf %302, %306 : vector<16x32xf32>
    %308 = vector.broadcast %267 : vector<1x32xf32> to vector<16x32xf32>
    %309 = arith.mulf %307, %308 : vector<16x32xf32>
    %310 = vector.broadcast %269 : vector<1x32xf32> to vector<16x32xf32>
    %311 = arith.addf %309, %310 : vector<16x32xf32>
    %312 = vector.shape_cast %311 : vector<16x32xf32> to vector<2x8x32xf32>
    %c0_153 = arith.constant 0 : index
    %c0_154 = arith.constant 0 : index
    %c0_155 = arith.constant 0 : index
    %313 = vector.load %arg22[%c0_153, %c0_154, %c0_155] : memref<2x8x32xf32, #tpu.memory_space<vmem>>, vector<2x8x32xf32>
    tpu.vector_store %arg22[%c0_153, %c0_154, %c0_155], %312 {strides = array<i32>} : memref<2x8x32xf32, #tpu.memory_space<vmem>>, vector<2x8x32xf32>,
    return
  }
}

module attributes {stable_mosaic.version = 11 : i64} {
  func.func @_decoder_kernel(%arg0: memref<2x8x32xf32, #tpu.memory_space<vmem>>, %arg1: memref<2x8x32xf32, #tpu.memory_space<vmem>>, %arg2: memref<2x8x8xf32, #tpu.memory_space<vmem>>, %arg3: memref<2x8x8xf32, #tpu.memory_space<vmem>>, %arg4: memref<2x32x96xf32, #tpu.memory_space<vmem>>, %arg5: memref<2x1x96xf32, #tpu.memory_space<vmem>>, %arg6: memref<2x32x32xf32, #tpu.memory_space<vmem>>, %arg7: memref<2x1x32xf32, #tpu.memory_space<vmem>>, %arg8: memref<2x1x32xf32, #tpu.memory_space<vmem>>, %arg9: memref<2x1x32xf32, #tpu.memory_space<vmem>>, %arg10: memref<2x32x32xf32, #tpu.memory_space<vmem>>, %arg11: memref<2x1x32xf32, #tpu.memory_space<vmem>>, %arg12: memref<2x32x64xf32, #tpu.memory_space<vmem>>, %arg13: memref<2x1x64xf32, #tpu.memory_space<vmem>>, %arg14: memref<2x32x32xf32, #tpu.memory_space<vmem>>, %arg15: memref<2x1x32xf32, #tpu.memory_space<vmem>>, %arg16: memref<2x1x32xf32, #tpu.memory_space<vmem>>, %arg17: memref<2x1x32xf32, #tpu.memory_space<vmem>>, %arg18: memref<2x32x64xf32, #tpu.memory_space<vmem>>, %arg19: memref<2x1x64xf32, #tpu.memory_space<vmem>>, %arg20: memref<2x64x32xf32, #tpu.memory_space<vmem>>, %arg21: memref<2x1x32xf32, #tpu.memory_space<vmem>>, %arg22: memref<2x1x32xf32, #tpu.memory_space<vmem>>, %arg23: memref<2x1x32xf32, #tpu.memory_space<vmem>>, %arg24: memref<2x8x32xf32, #tpu.memory_space<vmem>>, %arg25: memref<2x2x2x8x8xf32, #tpu.memory_space<vmem>>, %arg26: memref<2x2x2x8x8xf32, #tpu.memory_space<vmem>>) attributes {dimension_semantics = [], scalar_prefetch = 0 : i64, scratch_operands = 0 : i64, tpu.core_type = #tpu.core_type<tc>} {
    %c0 = arith.constant 0 : index
    %c0_0 = arith.constant 0 : index
    %c0_1 = arith.constant 0 : index
    %0 = vector.load %arg0[%c0, %c0_0, %c0_1] : memref<2x8x32xf32, #tpu.memory_space<vmem>>, vector<2x8x32xf32>
    %c0_2 = arith.constant 0 : index
    %c0_3 = arith.constant 0 : index
    %c0_4 = arith.constant 0 : index
    %1 = vector.load %arg1[%c0_2, %c0_3, %c0_4] : memref<2x8x32xf32, #tpu.memory_space<vmem>>, vector<2x8x32xf32>
    %c0_5 = arith.constant 0 : index
    %c0_6 = arith.constant 0 : index
    %c0_7 = arith.constant 0 : index
    %2 = vector.load %arg2[%c0_5, %c0_6, %c0_7] : memref<2x8x8xf32, #tpu.memory_space<vmem>>, vector<2x8x8xf32>
    %c0_8 = arith.constant 0 : index
    %c0_9 = arith.constant 0 : index
    %c0_10 = arith.constant 0 : index
    %3 = vector.load %arg3[%c0_8, %c0_9, %c0_10] : memref<2x8x8xf32, #tpu.memory_space<vmem>>, vector<2x8x8xf32>
    %4 = vector.shape_cast %0 : vector<2x8x32xf32> to vector<16x32xf32>
    %5 = vector.shape_cast %1 : vector<2x8x32xf32> to vector<16x32xf32>
    %c0_11 = arith.constant 0 : index
    %c0_12 = arith.constant 0 : index
    %c0_13 = arith.constant 0 : index
    %6 = vector.load %arg4[%c0_11, %c0_12, %c0_13] : memref<2x32x96xf32, #tpu.memory_space<vmem>>, vector<1x32x96xf32>
    %7 = vector.shape_cast %6 : vector<1x32x96xf32> to vector<32x96xf32>
    %cst = arith.constant dense<0.000000e+00> : vector<16x96xf32>
    %8 = tpu.matmul %4, %7, %cst {dimension_numbers = #tpu.dot_dimension_numbers<[1], [0], [0], [1], [0, 0, 1, 1], [], []>} : vector<16x32xf32>, vector<32x96xf32>, vector<16x96xf32> -> vector<16x96xf32>
    %c0_14 = arith.constant 0 : index
    %c0_15 = arith.constant 0 : index
    %c0_16 = arith.constant 0 : index
    %9 = vector.load %arg5[%c0_14, %c0_15, %c0_16] : memref<2x1x96xf32, #tpu.memory_space<vmem>>, vector<1x1x96xf32>
    %10 = vector.shape_cast %9 : vector<1x1x96xf32> to vector<1x96xf32>
    %11 = vector.broadcast %10 : vector<1x96xf32> to vector<16x96xf32>
    %12 = arith.addf %8, %11 : vector<16x96xf32>
    %13 = vector.extract_strided_slice %12 {offsets = [0, 0], sizes = [16, 32], strides = [1, 1]} : vector<16x96xf32> to vector<16x32xf32>
    %14 = vector.extract_strided_slice %12 {offsets = [0, 32], sizes = [16, 32], strides = [1, 1]} : vector<16x96xf32> to vector<16x32xf32>
    %15 = vector.extract_strided_slice %12 {offsets = [0, 64], sizes = [16, 32], strides = [1, 1]} : vector<16x96xf32> to vector<16x32xf32>
    %c0_17 = arith.constant 0 : index
    %c0_18 = arith.constant 0 : index
    %c0_19 = arith.constant 0 : index
    %16 = vector.load %arg6[%c0_17, %c0_18, %c0_19] : memref<2x32x32xf32, #tpu.memory_space<vmem>>, vector<1x32x32xf32>
    %17 = vector.shape_cast %16 : vector<1x32x32xf32> to vector<32x32xf32>
    %c0_20 = arith.constant 0 : index
    %c0_21 = arith.constant 0 : index
    %c0_22 = arith.constant 0 : index
    %18 = vector.load %arg7[%c0_20, %c0_21, %c0_22] : memref<2x1x32xf32, #tpu.memory_space<vmem>>, vector<1x1x32xf32>
    %19 = vector.shape_cast %18 : vector<1x1x32xf32> to vector<1x32xf32>
    %c0_23 = arith.constant 0 : index
    %c0_24 = arith.constant 0 : index
    %c0_25 = arith.constant 0 : index
    %20 = vector.load %arg8[%c0_23, %c0_24, %c0_25] : memref<2x1x32xf32, #tpu.memory_space<vmem>>, vector<1x1x32xf32>
    %21 = vector.shape_cast %20 : vector<1x1x32xf32> to vector<1x32xf32>
    %c0_26 = arith.constant 0 : index
    %c0_27 = arith.constant 0 : index
    %c0_28 = arith.constant 0 : index
    %22 = vector.load %arg9[%c0_26, %c0_27, %c0_28] : memref<2x1x32xf32, #tpu.memory_space<vmem>>, vector<1x1x32xf32>
    %23 = vector.shape_cast %22 : vector<1x1x32xf32> to vector<1x32xf32>
    %24 = vector.shape_cast %13 : vector<16x32xf32> to vector<2x8x32xf32>
    %25 = vector.shape_cast %14 : vector<16x32xf32> to vector<2x8x32xf32>
    %26 = vector.shape_cast %15 : vector<16x32xf32> to vector<2x8x32xf32>
    %27 = vector.extract_strided_slice %24 {offsets = [0, 0, 0], sizes = [2, 8, 16], strides = [1, 1, 1]} : vector<2x8x32xf32> to vector<2x8x16xf32>
    %28 = vector.extract_strided_slice %25 {offsets = [0, 0, 0], sizes = [2, 8, 16], strides = [1, 1, 1]} : vector<2x8x32xf32> to vector<2x8x16xf32>
    %29 = vector.extract_strided_slice %26 {offsets = [0, 0, 0], sizes = [2, 8, 16], strides = [1, 1, 1]} : vector<2x8x32xf32> to vector<2x8x16xf32>
    "tpu.trace_start"() <{level = 10 : i32, message = "bqd,bkd->bqk"}> : () -> ()
    %cst_29 = arith.constant dense<0.000000e+00> : vector<2x8x8xf32>
    %30 = tpu.matmul %27, %28, %cst_29 {dimension_numbers = #tpu.dot_dimension_numbers<[2], [2], [1], [1], [0, 0, 0, 1, 1, 1], [0], [0]>} : vector<2x8x16xf32>, vector<2x8x16xf32>, vector<2x8x8xf32> -> vector<2x8x8xf32>
    "tpu.trace_stop"() : () -> ()
    %cst_30 = arith.constant 2.500000e-01 : f32
    %31 = vector.broadcast %cst_30 : f32 to vector<2x8x8xf32>
    %32 = arith.mulf %30, %31 : vector<2x8x8xf32>
    %33 = arith.addf %32, %2 : vector<2x8x8xf32>
    %cst_31 = arith.constant dense<0xFF800000> : vector<2x8xf32>
    %34 = vector.multi_reduction <maximumf>, %33, %cst_31 [2] : vector<2x8x8xf32> to vector<2x8xf32>
    %35 = vector.shape_cast %34 : vector<2x8xf32> to vector<2x8x1xf32>
    %36 = vector.broadcast %35 : vector<2x8x1xf32> to vector<2x8x8xf32>
    %37 = arith.subf %33, %36 : vector<2x8x8xf32>
    %38 = math.exp %37 : vector<2x8x8xf32>
    %cst_32 = arith.constant dense<0.000000e+00> : vector<2x8xf32>
    %39 = vector.multi_reduction <add>, %38, %cst_32 [2] : vector<2x8x8xf32> to vector<2x8xf32>
    %40 = vector.shape_cast %39 : vector<2x8xf32> to vector<2x8x1xf32>
    %41 = tpu.reciprocal %40 {approx = true} : vector<2x8x1xf32> -> vector<2x8x1xf32>
    %42 = vector.broadcast %41 : vector<2x8x1xf32> to vector<2x8x8xf32>
    %43 = arith.mulf %38, %42 : vector<2x8x8xf32>
    "tpu.trace_start"() <{level = 10 : i32, message = "bqk,bkd->bqd"}> : () -> ()
    %cst_33 = arith.constant dense<0.000000e+00> : vector<2x8x16xf32>
    %44 = tpu.matmul %43, %29, %cst_33 {dimension_numbers = #tpu.dot_dimension_numbers<[2], [1], [1], [2], [0, 0, 0, 1, 1, 2], [0], [0]>} : vector<2x8x8xf32>, vector<2x8x16xf32>, vector<2x8x16xf32> -> vector<2x8x16xf32>
    "tpu.trace_stop"() : () -> ()
    %45 = vector.shape_cast %44 : vector<2x8x16xf32> to vector<16x16xf32>
    %46 = vector.extract_strided_slice %17 {offsets = [0, 0], sizes = [16, 32], strides = [1, 1]} : vector<32x32xf32> to vector<16x32xf32>
    %cst_34 = arith.constant dense<0.000000e+00> : vector<16x32xf32>
    %47 = tpu.matmul %45, %46, %cst_34 {dimension_numbers = #tpu.dot_dimension_numbers<[1], [0], [0], [1], [0, 0, 1, 1], [], []>} : vector<16x16xf32>, vector<16x32xf32>, vector<16x32xf32> -> vector<16x32xf32>
    %48 = vector.extract_strided_slice %24 {offsets = [0, 0, 16], sizes = [2, 8, 16], strides = [1, 1, 1]} : vector<2x8x32xf32> to vector<2x8x16xf32>
    %49 = vector.extract_strided_slice %25 {offsets = [0, 0, 16], sizes = [2, 8, 16], strides = [1, 1, 1]} : vector<2x8x32xf32> to vector<2x8x16xf32>
    %50 = vector.extract_strided_slice %26 {offsets = [0, 0, 16], sizes = [2, 8, 16], strides = [1, 1, 1]} : vector<2x8x32xf32> to vector<2x8x16xf32>
    "tpu.trace_start"() <{level = 10 : i32, message = "bqd,bkd->bqk"}> : () -> ()
    %cst_35 = arith.constant dense<0.000000e+00> : vector<2x8x8xf32>
    %51 = tpu.matmul %48, %49, %cst_35 {dimension_numbers = #tpu.dot_dimension_numbers<[2], [2], [1], [1], [0, 0, 0, 1, 1, 1], [0], [0]>} : vector<2x8x16xf32>, vector<2x8x16xf32>, vector<2x8x8xf32> -> vector<2x8x8xf32>
    "tpu.trace_stop"() : () -> ()
    %cst_36 = arith.constant 2.500000e-01 : f32
    %52 = vector.broadcast %cst_36 : f32 to vector<2x8x8xf32>
    %53 = arith.mulf %51, %52 : vector<2x8x8xf32>
    %54 = arith.addf %53, %2 : vector<2x8x8xf32>
    %cst_37 = arith.constant dense<0xFF800000> : vector<2x8xf32>
    %55 = vector.multi_reduction <maximumf>, %54, %cst_37 [2] : vector<2x8x8xf32> to vector<2x8xf32>
    %56 = vector.shape_cast %55 : vector<2x8xf32> to vector<2x8x1xf32>
    %57 = vector.broadcast %56 : vector<2x8x1xf32> to vector<2x8x8xf32>
    %58 = arith.subf %54, %57 : vector<2x8x8xf32>
    %59 = math.exp %58 : vector<2x8x8xf32>
    %cst_38 = arith.constant dense<0.000000e+00> : vector<2x8xf32>
    %60 = vector.multi_reduction <add>, %59, %cst_38 [2] : vector<2x8x8xf32> to vector<2x8xf32>
    %61 = vector.shape_cast %60 : vector<2x8xf32> to vector<2x8x1xf32>
    %62 = tpu.reciprocal %61 {approx = true} : vector<2x8x1xf32> -> vector<2x8x1xf32>
    %63 = vector.broadcast %62 : vector<2x8x1xf32> to vector<2x8x8xf32>
    %64 = arith.mulf %59, %63 : vector<2x8x8xf32>
    "tpu.trace_start"() <{level = 10 : i32, message = "bqk,bkd->bqd"}> : () -> ()
    %cst_39 = arith.constant dense<0.000000e+00> : vector<2x8x16xf32>
    %65 = tpu.matmul %64, %50, %cst_39 {dimension_numbers = #tpu.dot_dimension_numbers<[2], [1], [1], [2], [0, 0, 0, 1, 1, 2], [0], [0]>} : vector<2x8x8xf32>, vector<2x8x16xf32>, vector<2x8x16xf32> -> vector<2x8x16xf32>
    "tpu.trace_stop"() : () -> ()
    %66 = vector.shape_cast %65 : vector<2x8x16xf32> to vector<16x16xf32>
    %67 = vector.extract_strided_slice %17 {offsets = [16, 0], sizes = [16, 32], strides = [1, 1]} : vector<32x32xf32> to vector<16x32xf32>
    %cst_40 = arith.constant dense<0.000000e+00> : vector<16x32xf32>
    %68 = tpu.matmul %66, %67, %cst_40 {dimension_numbers = #tpu.dot_dimension_numbers<[1], [0], [0], [1], [0, 0, 1, 1], [], []>} : vector<16x16xf32>, vector<16x32xf32>, vector<16x32xf32> -> vector<16x32xf32>
    %69 = arith.addf %47, %68 : vector<16x32xf32>
    %70 = vector.broadcast %19 : vector<1x32xf32> to vector<16x32xf32>
    %71 = arith.addf %69, %70 : vector<16x32xf32>
    %72 = arith.addf %71, %4 : vector<16x32xf32>
    %cst_41 = arith.constant dense<0.000000e+00> : vector<16xf32>
    %73 = vector.multi_reduction <add>, %72, %cst_41 [1] : vector<16x32xf32> to vector<16xf32>
    %74 = vector.shape_cast %73 : vector<16xf32> to vector<16x1xf32>
    %cst_42 = arith.constant 3.200000e+01 : f32
    %75 = vector.broadcast %cst_42 : f32 to vector<16x1xf32>
    %76 = arith.divf %74, %75 : vector<16x1xf32>
    %77 = vector.broadcast %76 : vector<16x1xf32> to vector<16x32xf32>
    %78 = arith.subf %72, %77 : vector<16x32xf32>
    %79 = arith.mulf %78, %78 : vector<16x32xf32>
    %cst_43 = arith.constant dense<0.000000e+00> : vector<16xf32>
    %80 = vector.multi_reduction <add>, %79, %cst_43 [1] : vector<16x32xf32> to vector<16xf32>
    %81 = vector.shape_cast %80 : vector<16xf32> to vector<16x1xf32>
    %cst_44 = arith.constant 3.200000e+01 : f32
    %82 = vector.broadcast %cst_44 : f32 to vector<16x1xf32>
    %83 = arith.divf %81, %82 : vector<16x1xf32>
    %84 = vector.broadcast %76 : vector<16x1xf32> to vector<16x32xf32>
    %85 = arith.subf %72, %84 : vector<16x32xf32>
    %cst_45 = arith.constant 9.99999974E-6 : f32
    %86 = vector.broadcast %cst_45 : f32 to vector<16x1xf32>
    %87 = arith.addf %83, %86 : vector<16x1xf32>
    %88 = math.rsqrt %87 : vector<16x1xf32>
    %89 = vector.broadcast %88 : vector<16x1xf32> to vector<16x32xf32>
    %90 = arith.mulf %85, %89 : vector<16x32xf32>
    %91 = vector.broadcast %21 : vector<1x32xf32> to vector<16x32xf32>
    %92 = arith.mulf %90, %91 : vector<16x32xf32>
    %93 = vector.broadcast %23 : vector<1x32xf32> to vector<16x32xf32>
    %94 = arith.addf %92, %93 : vector<16x32xf32>
    %95 = vector.shape_cast %43 : vector<2x8x8xf32> to vector<2x1x8x8xf32>
    %96 = vector.shape_cast %64 : vector<2x8x8xf32> to vector<2x1x8x8xf32>
    %97 = tpu.concatenate %95, %96 in 1 : vector<2x1x8x8xf32>, vector<2x1x8x8xf32> -> vector<2x2x8x8xf32>
    %c0_46 = arith.constant 0 : index
    %c0_47 = arith.constant 0 : index
    %c0_48 = arith.constant 0 : index
    %98 = vector.load %arg10[%c0_46, %c0_47, %c0_48] : memref<2x32x32xf32, #tpu.memory_space<vmem>>, vector<1x32x32xf32>
    %99 = vector.shape_cast %98 : vector<1x32x32xf32> to vector<32x32xf32>
    %cst_49 = arith.constant dense<0.000000e+00> : vector<16x32xf32>
    %100 = tpu.matmul %94, %99, %cst_49 {dimension_numbers = #tpu.dot_dimension_numbers<[1], [0], [0], [1], [0, 0, 1, 1], [], []>} : vector<16x32xf32>, vector<32x32xf32>, vector<16x32xf32> -> vector<16x32xf32>
    %c0_50 = arith.constant 0 : index
    %c0_51 = arith.constant 0 : index
    %c0_52 = arith.constant 0 : index
    %101 = vector.load %arg11[%c0_50, %c0_51, %c0_52] : memref<2x1x32xf32, #tpu.memory_space<vmem>>, vector<1x1x32xf32>
    %102 = vector.shape_cast %101 : vector<1x1x32xf32> to vector<1x32xf32>
    %103 = vector.broadcast %102 : vector<1x32xf32> to vector<16x32xf32>
    %104 = arith.addf %100, %103 : vector<16x32xf32>
    %c0_53 = arith.constant 0 : index
    %c0_54 = arith.constant 0 : index
    %c0_55 = arith.constant 0 : index
    %105 = vector.load %arg12[%c0_53, %c0_54, %c0_55] : memref<2x32x64xf32, #tpu.memory_space<vmem>>, vector<1x32x64xf32>
    %106 = vector.shape_cast %105 : vector<1x32x64xf32> to vector<32x64xf32>
    %cst_56 = arith.constant dense<0.000000e+00> : vector<16x64xf32>
    %107 = tpu.matmul %5, %106, %cst_56 {dimension_numbers = #tpu.dot_dimension_numbers<[1], [0], [0], [1], [0, 0, 1, 1], [], []>} : vector<16x32xf32>, vector<32x64xf32>, vector<16x64xf32> -> vector<16x64xf32>
    %c0_57 = arith.constant 0 : index
    %c0_58 = arith.constant 0 : index
    %c0_59 = arith.constant 0 : index
    %108 = vector.load %arg13[%c0_57, %c0_58, %c0_59] : memref<2x1x64xf32, #tpu.memory_space<vmem>>, vector<1x1x64xf32>
    %109 = vector.shape_cast %108 : vector<1x1x64xf32> to vector<1x64xf32>
    %110 = vector.broadcast %109 : vector<1x64xf32> to vector<16x64xf32>
    %111 = arith.addf %107, %110 : vector<16x64xf32>
    %112 = vector.extract_strided_slice %111 {offsets = [0, 0], sizes = [16, 32], strides = [1, 1]} : vector<16x64xf32> to vector<16x32xf32>
    %113 = vector.extract_strided_slice %111 {offsets = [0, 32], sizes = [16, 32], strides = [1, 1]} : vector<16x64xf32> to vector<16x32xf32>
    %c0_60 = arith.constant 0 : index
    %c0_61 = arith.constant 0 : index
    %c0_62 = arith.constant 0 : index
    %114 = vector.load %arg14[%c0_60, %c0_61, %c0_62] : memref<2x32x32xf32, #tpu.memory_space<vmem>>, vector<1x32x32xf32>
    %115 = vector.shape_cast %114 : vector<1x32x32xf32> to vector<32x32xf32>
    %c0_63 = arith.constant 0 : index
    %c0_64 = arith.constant 0 : index
    %c0_65 = arith.constant 0 : index
    %116 = vector.load %arg15[%c0_63, %c0_64, %c0_65] : memref<2x1x32xf32, #tpu.memory_space<vmem>>, vector<1x1x32xf32>
    %117 = vector.shape_cast %116 : vector<1x1x32xf32> to vector<1x32xf32>
    %c0_66 = arith.constant 0 : index
    %c0_67 = arith.constant 0 : index
    %c0_68 = arith.constant 0 : index
    %118 = vector.load %arg16[%c0_66, %c0_67, %c0_68] : memref<2x1x32xf32, #tpu.memory_space<vmem>>, vector<1x1x32xf32>
    %119 = vector.shape_cast %118 : vector<1x1x32xf32> to vector<1x32xf32>
    %c0_69 = arith.constant 0 : index
    %c0_70 = arith.constant 0 : index
    %c0_71 = arith.constant 0 : index
    %120 = vector.load %arg17[%c0_69, %c0_70, %c0_71] : memref<2x1x32xf32, #tpu.memory_space<vmem>>, vector<1x1x32xf32>
    %121 = vector.shape_cast %120 : vector<1x1x32xf32> to vector<1x32xf32>
    %122 = vector.shape_cast %104 : vector<16x32xf32> to vector<2x8x32xf32>
    %123 = vector.shape_cast %112 : vector<16x32xf32> to vector<2x8x32xf32>
    %124 = vector.shape_cast %113 : vector<16x32xf32> to vector<2x8x32xf32>
    %125 = vector.extract_strided_slice %122 {offsets = [0, 0, 0], sizes = [2, 8, 16], strides = [1, 1, 1]} : vector<2x8x32xf32> to vector<2x8x16xf32>
    %126 = vector.extract_strided_slice %123 {offsets = [0, 0, 0], sizes = [2, 8, 16], strides = [1, 1, 1]} : vector<2x8x32xf32> to vector<2x8x16xf32>
    %127 = vector.extract_strided_slice %124 {offsets = [0, 0, 0], sizes = [2, 8, 16], strides = [1, 1, 1]} : vector<2x8x32xf32> to vector<2x8x16xf32>
    "tpu.trace_start"() <{level = 10 : i32, message = "bqd,bkd->bqk"}> : () -> ()
    %cst_72 = arith.constant dense<0.000000e+00> : vector<2x8x8xf32>
    %128 = tpu.matmul %125, %126, %cst_72 {dimension_numbers = #tpu.dot_dimension_numbers<[2], [2], [1], [1], [0, 0, 0, 1, 1, 1], [0], [0]>} : vector<2x8x16xf32>, vector<2x8x16xf32>, vector<2x8x8xf32> -> vector<2x8x8xf32>
    "tpu.trace_stop"() : () -> ()
    %cst_73 = arith.constant 2.500000e-01 : f32
    %129 = vector.broadcast %cst_73 : f32 to vector<2x8x8xf32>
    %130 = arith.mulf %128, %129 : vector<2x8x8xf32>
    %131 = arith.addf %130, %3 : vector<2x8x8xf32>
    %cst_74 = arith.constant dense<0xFF800000> : vector<2x8xf32>
    %132 = vector.multi_reduction <maximumf>, %131, %cst_74 [2] : vector<2x8x8xf32> to vector<2x8xf32>
    %133 = vector.shape_cast %132 : vector<2x8xf32> to vector<2x8x1xf32>
    %134 = vector.broadcast %133 : vector<2x8x1xf32> to vector<2x8x8xf32>
    %135 = arith.subf %131, %134 : vector<2x8x8xf32>
    %136 = math.exp %135 : vector<2x8x8xf32>
    %cst_75 = arith.constant dense<0.000000e+00> : vector<2x8xf32>
    %137 = vector.multi_reduction <add>, %136, %cst_75 [2] : vector<2x8x8xf32> to vector<2x8xf32>
    %138 = vector.shape_cast %137 : vector<2x8xf32> to vector<2x8x1xf32>
    %139 = tpu.reciprocal %138 {approx = true} : vector<2x8x1xf32> -> vector<2x8x1xf32>
    %140 = vector.broadcast %139 : vector<2x8x1xf32> to vector<2x8x8xf32>
    %141 = arith.mulf %136, %140 : vector<2x8x8xf32>
    "tpu.trace_start"() <{level = 10 : i32, message = "bqk,bkd->bqd"}> : () -> ()
    %cst_76 = arith.constant dense<0.000000e+00> : vector<2x8x16xf32>
    %142 = tpu.matmul %141, %127, %cst_76 {dimension_numbers = #tpu.dot_dimension_numbers<[2], [1], [1], [2], [0, 0, 0, 1, 1, 2], [0], [0]>} : vector<2x8x8xf32>, vector<2x8x16xf32>, vector<2x8x16xf32> -> vector<2x8x16xf32>
    "tpu.trace_stop"() : () -> ()
    %143 = vector.shape_cast %142 : vector<2x8x16xf32> to vector<16x16xf32>
    %144 = vector.extract_strided_slice %115 {offsets = [0, 0], sizes = [16, 32], strides = [1, 1]} : vector<32x32xf32> to vector<16x32xf32>
    %cst_77 = arith.constant dense<0.000000e+00> : vector<16x32xf32>
    %145 = tpu.matmul %143, %144, %cst_77 {dimension_numbers = #tpu.dot_dimension_numbers<[1], [0], [0], [1], [0, 0, 1, 1], [], []>} : vector<16x16xf32>, vector<16x32xf32>, vector<16x32xf32> -> vector<16x32xf32>
    %146 = vector.extract_strided_slice %122 {offsets = [0, 0, 16], sizes = [2, 8, 16], strides = [1, 1, 1]} : vector<2x8x32xf32> to vector<2x8x16xf32>
    %147 = vector.extract_strided_slice %123 {offsets = [0, 0, 16], sizes = [2, 8, 16], strides = [1, 1, 1]} : vector<2x8x32xf32> to vector<2x8x16xf32>
    %148 = vector.extract_strided_slice %124 {offsets = [0, 0, 16], sizes = [2, 8, 16], strides = [1, 1, 1]} : vector<2x8x32xf32> to vector<2x8x16xf32>
    "tpu.trace_start"() <{level = 10 : i32, message = "bqd,bkd->bqk"}> : () -> ()
    %cst_78 = arith.constant dense<0.000000e+00> : vector<2x8x8xf32>
    %149 = tpu.matmul %146, %147, %cst_78 {dimension_numbers = #tpu.dot_dimension_numbers<[2], [2], [1], [1], [0, 0, 0, 1, 1, 1], [0], [0]>} : vector<2x8x16xf32>, vector<2x8x16xf32>, vector<2x8x8xf32> -> vector<2x8x8xf32>
    "tpu.trace_stop"() : () -> ()
    %cst_79 = arith.constant 2.500000e-01 : f32
    %150 = vector.broadcast %cst_79 : f32 to vector<2x8x8xf32>
    %151 = arith.mulf %149, %150 : vector<2x8x8xf32>
    %152 = arith.addf %151, %3 : vector<2x8x8xf32>
    %cst_80 = arith.constant dense<0xFF800000> : vector<2x8xf32>
    %153 = vector.multi_reduction <maximumf>, %152, %cst_80 [2] : vector<2x8x8xf32> to vector<2x8xf32>
    %154 = vector.shape_cast %153 : vector<2x8xf32> to vector<2x8x1xf32>
    %155 = vector.broadcast %154 : vector<2x8x1xf32> to vector<2x8x8xf32>
    %156 = arith.subf %152, %155 : vector<2x8x8xf32>
    %157 = math.exp %156 : vector<2x8x8xf32>
    %cst_81 = arith.constant dense<0.000000e+00> : vector<2x8xf32>
    %158 = vector.multi_reduction <add>, %157, %cst_81 [2] : vector<2x8x8xf32> to vector<2x8xf32>
    %159 = vector.shape_cast %158 : vector<2x8xf32> to vector<2x8x1xf32>
    %160 = tpu.reciprocal %159 {approx = true} : vector<2x8x1xf32> -> vector<2x8x1xf32>
    %161 = vector.broadcast %160 : vector<2x8x1xf32> to vector<2x8x8xf32>
    %162 = arith.mulf %157, %161 : vector<2x8x8xf32>
    "tpu.trace_start"() <{level = 10 : i32, message = "bqk,bkd->bqd"}> : () -> ()
    %cst_82 = arith.constant dense<0.000000e+00> : vector<2x8x16xf32>
    %163 = tpu.matmul %162, %148, %cst_82 {dimension_numbers = #tpu.dot_dimension_numbers<[2], [1], [1], [2], [0, 0, 0, 1, 1, 2], [0], [0]>} : vector<2x8x8xf32>, vector<2x8x16xf32>, vector<2x8x16xf32> -> vector<2x8x16xf32>
    "tpu.trace_stop"() : () -> ()
    %164 = vector.shape_cast %163 : vector<2x8x16xf32> to vector<16x16xf32>
    %165 = vector.extract_strided_slice %115 {offsets = [16, 0], sizes = [16, 32], strides = [1, 1]} : vector<32x32xf32> to vector<16x32xf32>
    %cst_83 = arith.constant dense<0.000000e+00> : vector<16x32xf32>
    %166 = tpu.matmul %164, %165, %cst_83 {dimension_numbers = #tpu.dot_dimension_numbers<[1], [0], [0], [1], [0, 0, 1, 1], [], []>} : vector<16x16xf32>, vector<16x32xf32>, vector<16x32xf32> -> vector<16x32xf32>
    %167 = arith.addf %145, %166 : vector<16x32xf32>
    %168 = vector.broadcast %117 : vector<1x32xf32> to vector<16x32xf32>
    %169 = arith.addf %167, %168 : vector<16x32xf32>
    %170 = arith.addf %169, %94 : vector<16x32xf32>
    %cst_84 = arith.constant dense<0.000000e+00> : vector<16xf32>
    %171 = vector.multi_reduction <add>, %170, %cst_84 [1] : vector<16x32xf32> to vector<16xf32>
    %172 = vector.shape_cast %171 : vector<16xf32> to vector<16x1xf32>
    %cst_85 = arith.constant 3.200000e+01 : f32
    %173 = vector.broadcast %cst_85 : f32 to vector<16x1xf32>
    %174 = arith.divf %172, %173 : vector<16x1xf32>
    %175 = vector.broadcast %174 : vector<16x1xf32> to vector<16x32xf32>
    %176 = arith.subf %170, %175 : vector<16x32xf32>
    %177 = arith.mulf %176, %176 : vector<16x32xf32>
    %cst_86 = arith.constant dense<0.000000e+00> : vector<16xf32>
    %178 = vector.multi_reduction <add>, %177, %cst_86 [1] : vector<16x32xf32> to vector<16xf32>
    %179 = vector.shape_cast %178 : vector<16xf32> to vector<16x1xf32>
    %cst_87 = arith.constant 3.200000e+01 : f32
    %180 = vector.broadcast %cst_87 : f32 to vector<16x1xf32>
    %181 = arith.divf %179, %180 : vector<16x1xf32>
    %182 = vector.broadcast %174 : vector<16x1xf32> to vector<16x32xf32>
    %183 = arith.subf %170, %182 : vector<16x32xf32>
    %cst_88 = arith.constant 9.99999974E-6 : f32
    %184 = vector.broadcast %cst_88 : f32 to vector<16x1xf32>
    %185 = arith.addf %181, %184 : vector<16x1xf32>
    %186 = math.rsqrt %185 : vector<16x1xf32>
    %187 = vector.broadcast %186 : vector<16x1xf32> to vector<16x32xf32>
    %188 = arith.mulf %183, %187 : vector<16x32xf32>
    %189 = vector.broadcast %119 : vector<1x32xf32> to vector<16x32xf32>
    %190 = arith.mulf %188, %189 : vector<16x32xf32>
    %191 = vector.broadcast %121 : vector<1x32xf32> to vector<16x32xf32>
    %192 = arith.addf %190, %191 : vector<16x32xf32>
    %193 = vector.shape_cast %141 : vector<2x8x8xf32> to vector<2x1x8x8xf32>
    %194 = vector.shape_cast %162 : vector<2x8x8xf32> to vector<2x1x8x8xf32>
    %195 = tpu.concatenate %193, %194 in 1 : vector<2x1x8x8xf32>, vector<2x1x8x8xf32> -> vector<2x2x8x8xf32>
    %c0_89 = arith.constant 0 : index
    %c0_90 = arith.constant 0 : index
    %c0_91 = arith.constant 0 : index
    %196 = vector.load %arg18[%c0_89, %c0_90, %c0_91] : memref<2x32x64xf32, #tpu.memory_space<vmem>>, vector<1x32x64xf32>
    %197 = vector.shape_cast %196 : vector<1x32x64xf32> to vector<32x64xf32>
    %c0_92 = arith.constant 0 : index
    %c0_93 = arith.constant 0 : index
    %c0_94 = arith.constant 0 : index
    %198 = vector.load %arg19[%c0_92, %c0_93, %c0_94] : memref<2x1x64xf32, #tpu.memory_space<vmem>>, vector<1x1x64xf32>
    %199 = vector.shape_cast %198 : vector<1x1x64xf32> to vector<1x64xf32>
    %c0_95 = arith.constant 0 : index
    %c0_96 = arith.constant 0 : index
    %c0_97 = arith.constant 0 : index
    %200 = vector.load %arg20[%c0_95, %c0_96, %c0_97] : memref<2x64x32xf32, #tpu.memory_space<vmem>>, vector<1x64x32xf32>
    %201 = vector.shape_cast %200 : vector<1x64x32xf32> to vector<64x32xf32>
    %c0_98 = arith.constant 0 : index
    %c0_99 = arith.constant 0 : index
    %c0_100 = arith.constant 0 : index
    %202 = vector.load %arg21[%c0_98, %c0_99, %c0_100] : memref<2x1x32xf32, #tpu.memory_space<vmem>>, vector<1x1x32xf32>
    %203 = vector.shape_cast %202 : vector<1x1x32xf32> to vector<1x32xf32>
    %c0_101 = arith.constant 0 : index
    %c0_102 = arith.constant 0 : index
    %c0_103 = arith.constant 0 : index
    %204 = vector.load %arg22[%c0_101, %c0_102, %c0_103] : memref<2x1x32xf32, #tpu.memory_space<vmem>>, vector<1x1x32xf32>
    %205 = vector.shape_cast %204 : vector<1x1x32xf32> to vector<1x32xf32>
    %c0_104 = arith.constant 0 : index
    %c0_105 = arith.constant 0 : index
    %c0_106 = arith.constant 0 : index
    %206 = vector.load %arg23[%c0_104, %c0_105, %c0_106] : memref<2x1x32xf32, #tpu.memory_space<vmem>>, vector<1x1x32xf32>
    %207 = vector.shape_cast %206 : vector<1x1x32xf32> to vector<1x32xf32>
    %cst_107 = arith.constant dense<0.000000e+00> : vector<16x64xf32>
    %208 = tpu.matmul %192, %197, %cst_107 {dimension_numbers = #tpu.dot_dimension_numbers<[1], [0], [0], [1], [0, 0, 1, 1], [], []>} : vector<16x32xf32>, vector<32x64xf32>, vector<16x64xf32> -> vector<16x64xf32>
    %209 = vector.broadcast %199 : vector<1x64xf32> to vector<16x64xf32>
    %210 = arith.addf %208, %209 : vector<16x64xf32>
    %cst_108 = arith.constant 5.000000e-01 : f32
    %211 = vector.broadcast %cst_108 : f32 to vector<16x64xf32>
    %212 = arith.mulf %211, %210 : vector<16x64xf32>
    %cst_109 = arith.constant 4.471500e-02 : f32
    %213 = vector.broadcast %cst_109 : f32 to vector<16x64xf32>
    %214 = arith.mulf %213, %210 : vector<16x64xf32>
    %215 = arith.mulf %214, %210 : vector<16x64xf32>
    %216 = arith.mulf %215, %210 : vector<16x64xf32>
    %217 = arith.addf %210, %216 : vector<16x64xf32>
    %cst_110 = arith.constant 0.797884583 : f32
    %218 = vector.broadcast %cst_110 : f32 to vector<16x64xf32>
    %219 = arith.mulf %218, %217 : vector<16x64xf32>
    %220 = math.tanh %219 : vector<16x64xf32>
    %cst_111 = arith.constant 1.000000e+00 : f32
    %221 = vector.broadcast %cst_111 : f32 to vector<16x64xf32>
    %222 = arith.addf %221, %220 : vector<16x64xf32>
    %223 = arith.mulf %212, %222 : vector<16x64xf32>
    %cst_112 = arith.constant dense<0.000000e+00> : vector<16x32xf32>
    %224 = tpu.matmul %223, %201, %cst_112 {dimension_numbers = #tpu.dot_dimension_numbers<[1], [0], [0], [1], [0, 0, 1, 1], [], []>} : vector<16x64xf32>, vector<64x32xf32>, vector<16x32xf32> -> vector<16x32xf32>
    %225 = vector.broadcast %203 : vector<1x32xf32> to vector<16x32xf32>
    %226 = arith.addf %224, %225 : vector<16x32xf32>
    %227 = arith.addf %226, %192 : vector<16x32xf32>
    %cst_113 = arith.constant dense<0.000000e+00> : vector<16xf32>
    %228 = vector.multi_reduction <add>, %227, %cst_113 [1] : vector<16x32xf32> to vector<16xf32>
    %229 = vector.shape_cast %228 : vector<16xf32> to vector<16x1xf32>
    %cst_114 = arith.constant 3.200000e+01 : f32
    %230 = vector.broadcast %cst_114 : f32 to vector<16x1xf32>
    %231 = arith.divf %229, %230 : vector<16x1xf32>
    %232 = vector.broadcast %231 : vector<16x1xf32> to vector<16x32xf32>
    %233 = arith.subf %227, %232 : vector<16x32xf32>
    %234 = arith.mulf %233, %233 : vector<16x32xf32>
    %cst_115 = arith.constant dense<0.000000e+00> : vector<16xf32>
    %235 = vector.multi_reduction <add>, %234, %cst_115 [1] : vector<16x32xf32> to vector<16xf32>
    %236 = vector.shape_cast %235 : vector<16xf32> to vector<16x1xf32>
    %cst_116 = arith.constant 3.200000e+01 : f32
    %237 = vector.broadcast %cst_116 : f32 to vector<16x1xf32>
    %238 = arith.divf %236, %237 : vector<16x1xf32>
    %239 = vector.broadcast %231 : vector<16x1xf32> to vector<16x32xf32>
    %240 = arith.subf %227, %239 : vector<16x32xf32>
    %cst_117 = arith.constant 9.99999974E-6 : f32
    %241 = vector.broadcast %cst_117 : f32 to vector<16x1xf32>
    %242 = arith.addf %238, %241 : vector<16x1xf32>
    %243 = math.rsqrt %242 : vector<16x1xf32>
    %244 = vector.broadcast %243 : vector<16x1xf32> to vector<16x32xf32>
    %245 = arith.mulf %240, %244 : vector<16x32xf32>
    %246 = vector.broadcast %205 : vector<1x32xf32> to vector<16x32xf32>
    %247 = arith.mulf %245, %246 : vector<16x32xf32>
    %248 = vector.broadcast %207 : vector<1x32xf32> to vector<16x32xf32>
    %249 = arith.addf %247, %248 : vector<16x32xf32>
    %c0_118 = arith.constant 0 : index
    %c0_119 = arith.constant 0 : index
    %c0_120 = arith.constant 0 : index
    %c0_121 = arith.constant 0 : index
    %c0_122 = arith.constant 0 : index
    %250 = vector.load %arg25[%c0_118, %c0_119, %c0_120, %c0_121, %c0_122] : memref<2x2x2x8x8xf32, #tpu.memory_space<vmem>>, vector<1x2x2x8x8xf32>
    %251 = vector.shape_cast %250 : vector<1x2x2x8x8xf32> to vector<2x2x8x8xf32>
    %252 = vector.shape_cast %97 : vector<2x2x8x8xf32> to vector<1x2x2x8x8xf32>
    tpu.vector_store %arg25[%c0_118, %c0_119, %c0_120, %c0_121, %c0_122], %252 {strides = array<i32>} : memref<2x2x2x8x8xf32, #tpu.memory_space<vmem>>, vector<1x2x2x8x8xf32>,
    %c0_123 = arith.constant 0 : index
    %c0_124 = arith.constant 0 : index
    %c0_125 = arith.constant 0 : index
    %c0_126 = arith.constant 0 : index
    %c0_127 = arith.constant 0 : index
    %253 = vector.load %arg26[%c0_123, %c0_124, %c0_125, %c0_126, %c0_127] : memref<2x2x2x8x8xf32, #tpu.memory_space<vmem>>, vector<1x2x2x8x8xf32>
    %254 = vector.shape_cast %253 : vector<1x2x2x8x8xf32> to vector<2x2x8x8xf32>
    %255 = vector.shape_cast %195 : vector<2x2x8x8xf32> to vector<1x2x2x8x8xf32>
    tpu.vector_store %arg26[%c0_123, %c0_124, %c0_125, %c0_126, %c0_127], %255 {strides = array<i32>} : memref<2x2x2x8x8xf32, #tpu.memory_space<vmem>>, vector<1x2x2x8x8xf32>,
    %c1 = arith.constant 1 : index
    %c0_128 = arith.constant 0 : index
    %c0_129 = arith.constant 0 : index
    %256 = vector.load %arg4[%c1, %c0_128, %c0_129] : memref<2x32x96xf32, #tpu.memory_space<vmem>>, vector<1x32x96xf32>
    %257 = vector.shape_cast %256 : vector<1x32x96xf32> to vector<32x96xf32>
    %cst_130 = arith.constant dense<0.000000e+00> : vector<16x96xf32>
    %258 = tpu.matmul %249, %257, %cst_130 {dimension_numbers = #tpu.dot_dimension_numbers<[1], [0], [0], [1], [0, 0, 1, 1], [], []>} : vector<16x32xf32>, vector<32x96xf32>, vector<16x96xf32> -> vector<16x96xf32>
    %c1_131 = arith.constant 1 : index
    %c0_132 = arith.constant 0 : index
    %c0_133 = arith.constant 0 : index
    %259 = vector.load %arg5[%c1_131, %c0_132, %c0_133] : memref<2x1x96xf32, #tpu.memory_space<vmem>>, vector<1x1x96xf32>
    %260 = vector.shape_cast %259 : vector<1x1x96xf32> to vector<1x96xf32>
    %261 = vector.broadcast %260 : vector<1x96xf32> to vector<16x96xf32>
    %262 = arith.addf %258, %261 : vector<16x96xf32>
    %263 = vector.extract_strided_slice %262 {offsets = [0, 0], sizes = [16, 32], strides = [1, 1]} : vector<16x96xf32> to vector<16x32xf32>
    %264 = vector.extract_strided_slice %262 {offsets = [0, 32], sizes = [16, 32], strides = [1, 1]} : vector<16x96xf32> to vector<16x32xf32>
    %265 = vector.extract_strided_slice %262 {offsets = [0, 64], sizes = [16, 32], strides = [1, 1]} : vector<16x96xf32> to vector<16x32xf32>
    %c1_134 = arith.constant 1 : index
    %c0_135 = arith.constant 0 : index
    %c0_136 = arith.constant 0 : index
    %266 = vector.load %arg6[%c1_134, %c0_135, %c0_136] : memref<2x32x32xf32, #tpu.memory_space<vmem>>, vector<1x32x32xf32>
    %267 = vector.shape_cast %266 : vector<1x32x32xf32> to vector<32x32xf32>
    %c1_137 = arith.constant 1 : index
    %c0_138 = arith.constant 0 : index
    %c0_139 = arith.constant 0 : index
    %268 = vector.load %arg7[%c1_137, %c0_138, %c0_139] : memref<2x1x32xf32, #tpu.memory_space<vmem>>, vector<1x1x32xf32>
    %269 = vector.shape_cast %268 : vector<1x1x32xf32> to vector<1x32xf32>
    %c1_140 = arith.constant 1 : index
    %c0_141 = arith.constant 0 : index
    %c0_142 = arith.constant 0 : index
    %270 = vector.load %arg8[%c1_140, %c0_141, %c0_142] : memref<2x1x32xf32, #tpu.memory_space<vmem>>, vector<1x1x32xf32>
    %271 = vector.shape_cast %270 : vector<1x1x32xf32> to vector<1x32xf32>
    %c1_143 = arith.constant 1 : index
    %c0_144 = arith.constant 0 : index
    %c0_145 = arith.constant 0 : index
    %272 = vector.load %arg9[%c1_143, %c0_144, %c0_145] : memref<2x1x32xf32, #tpu.memory_space<vmem>>, vector<1x1x32xf32>
    %273 = vector.shape_cast %272 : vector<1x1x32xf32> to vector<1x32xf32>
    %274 = vector.shape_cast %263 : vector<16x32xf32> to vector<2x8x32xf32>
    %275 = vector.shape_cast %264 : vector<16x32xf32> to vector<2x8x32xf32>
    %276 = vector.shape_cast %265 : vector<16x32xf32> to vector<2x8x32xf32>
    %277 = vector.extract_strided_slice %274 {offsets = [0, 0, 0], sizes = [2, 8, 16], strides = [1, 1, 1]} : vector<2x8x32xf32> to vector<2x8x16xf32>
    %278 = vector.extract_strided_slice %275 {offsets = [0, 0, 0], sizes = [2, 8, 16], strides = [1, 1, 1]} : vector<2x8x32xf32> to vector<2x8x16xf32>
    %279 = vector.extract_strided_slice %276 {offsets = [0, 0, 0], sizes = [2, 8, 16], strides = [1, 1, 1]} : vector<2x8x32xf32> to vector<2x8x16xf32>
    "tpu.trace_start"() <{level = 10 : i32, message = "bqd,bkd->bqk"}> : () -> ()
    %cst_146 = arith.constant dense<0.000000e+00> : vector<2x8x8xf32>
    %280 = tpu.matmul %277, %278, %cst_146 {dimension_numbers = #tpu.dot_dimension_numbers<[2], [2], [1], [1], [0, 0, 0, 1, 1, 1], [0], [0]>} : vector<2x8x16xf32>, vector<2x8x16xf32>, vector<2x8x8xf32> -> vector<2x8x8xf32>
    "tpu.trace_stop"() : () -> ()
    %cst_147 = arith.constant 2.500000e-01 : f32
    %281 = vector.broadcast %cst_147 : f32 to vector<2x8x8xf32>
    %282 = arith.mulf %280, %281 : vector<2x8x8xf32>
    %283 = arith.addf %282, %2 : vector<2x8x8xf32>
    %cst_148 = arith.constant dense<0xFF800000> : vector<2x8xf32>
    %284 = vector.multi_reduction <maximumf>, %283, %cst_148 [2] : vector<2x8x8xf32> to vector<2x8xf32>
    %285 = vector.shape_cast %284 : vector<2x8xf32> to vector<2x8x1xf32>
    %286 = vector.broadcast %285 : vector<2x8x1xf32> to vector<2x8x8xf32>
    %287 = arith.subf %283, %286 : vector<2x8x8xf32>
    %288 = math.exp %287 : vector<2x8x8xf32>
    %cst_149 = arith.constant dense<0.000000e+00> : vector<2x8xf32>
    %289 = vector.multi_reduction <add>, %288, %cst_149 [2] : vector<2x8x8xf32> to vector<2x8xf32>
    %290 = vector.shape_cast %289 : vector<2x8xf32> to vector<2x8x1xf32>
    %291 = tpu.reciprocal %290 {approx = true} : vector<2x8x1xf32> -> vector<2x8x1xf32>
    %292 = vector.broadcast %291 : vector<2x8x1xf32> to vector<2x8x8xf32>
    %293 = arith.mulf %288, %292 : vector<2x8x8xf32>
    "tpu.trace_start"() <{level = 10 : i32, message = "bqk,bkd->bqd"}> : () -> ()
    %cst_150 = arith.constant dense<0.000000e+00> : vector<2x8x16xf32>
    %294 = tpu.matmul %293, %279, %cst_150 {dimension_numbers = #tpu.dot_dimension_numbers<[2], [1], [1], [2], [0, 0, 0, 1, 1, 2], [0], [0]>} : vector<2x8x8xf32>, vector<2x8x16xf32>, vector<2x8x16xf32> -> vector<2x8x16xf32>
    "tpu.trace_stop"() : () -> ()
    %295 = vector.shape_cast %294 : vector<2x8x16xf32> to vector<16x16xf32>
    %296 = vector.extract_strided_slice %267 {offsets = [0, 0], sizes = [16, 32], strides = [1, 1]} : vector<32x32xf32> to vector<16x32xf32>
    %cst_151 = arith.constant dense<0.000000e+00> : vector<16x32xf32>
    %297 = tpu.matmul %295, %296, %cst_151 {dimension_numbers = #tpu.dot_dimension_numbers<[1], [0], [0], [1], [0, 0, 1, 1], [], []>} : vector<16x16xf32>, vector<16x32xf32>, vector<16x32xf32> -> vector<16x32xf32>
    %298 = vector.extract_strided_slice %274 {offsets = [0, 0, 16], sizes = [2, 8, 16], strides = [1, 1, 1]} : vector<2x8x32xf32> to vector<2x8x16xf32>
    %299 = vector.extract_strided_slice %275 {offsets = [0, 0, 16], sizes = [2, 8, 16], strides = [1, 1, 1]} : vector<2x8x32xf32> to vector<2x8x16xf32>
    %300 = vector.extract_strided_slice %276 {offsets = [0, 0, 16], sizes = [2, 8, 16], strides = [1, 1, 1]} : vector<2x8x32xf32> to vector<2x8x16xf32>
    "tpu.trace_start"() <{level = 10 : i32, message = "bqd,bkd->bqk"}> : () -> ()
    %cst_152 = arith.constant dense<0.000000e+00> : vector<2x8x8xf32>
    %301 = tpu.matmul %298, %299, %cst_152 {dimension_numbers = #tpu.dot_dimension_numbers<[2], [2], [1], [1], [0, 0, 0, 1, 1, 1], [0], [0]>} : vector<2x8x16xf32>, vector<2x8x16xf32>, vector<2x8x8xf32> -> vector<2x8x8xf32>
    "tpu.trace_stop"() : () -> ()
    %cst_153 = arith.constant 2.500000e-01 : f32
    %302 = vector.broadcast %cst_153 : f32 to vector<2x8x8xf32>
    %303 = arith.mulf %301, %302 : vector<2x8x8xf32>
    %304 = arith.addf %303, %2 : vector<2x8x8xf32>
    %cst_154 = arith.constant dense<0xFF800000> : vector<2x8xf32>
    %305 = vector.multi_reduction <maximumf>, %304, %cst_154 [2] : vector<2x8x8xf32> to vector<2x8xf32>
    %306 = vector.shape_cast %305 : vector<2x8xf32> to vector<2x8x1xf32>
    %307 = vector.broadcast %306 : vector<2x8x1xf32> to vector<2x8x8xf32>
    %308 = arith.subf %304, %307 : vector<2x8x8xf32>
    %309 = math.exp %308 : vector<2x8x8xf32>
    %cst_155 = arith.constant dense<0.000000e+00> : vector<2x8xf32>
    %310 = vector.multi_reduction <add>, %309, %cst_155 [2] : vector<2x8x8xf32> to vector<2x8xf32>
    %311 = vector.shape_cast %310 : vector<2x8xf32> to vector<2x8x1xf32>
    %312 = tpu.reciprocal %311 {approx = true} : vector<2x8x1xf32> -> vector<2x8x1xf32>
    %313 = vector.broadcast %312 : vector<2x8x1xf32> to vector<2x8x8xf32>
    %314 = arith.mulf %309, %313 : vector<2x8x8xf32>
    "tpu.trace_start"() <{level = 10 : i32, message = "bqk,bkd->bqd"}> : () -> ()
    %cst_156 = arith.constant dense<0.000000e+00> : vector<2x8x16xf32>
    %315 = tpu.matmul %314, %300, %cst_156 {dimension_numbers = #tpu.dot_dimension_numbers<[2], [1], [1], [2], [0, 0, 0, 1, 1, 2], [0], [0]>} : vector<2x8x8xf32>, vector<2x8x16xf32>, vector<2x8x16xf32> -> vector<2x8x16xf32>
    "tpu.trace_stop"() : () -> ()
    %316 = vector.shape_cast %315 : vector<2x8x16xf32> to vector<16x16xf32>
    %317 = vector.extract_strided_slice %267 {offsets = [16, 0], sizes = [16, 32], strides = [1, 1]} : vector<32x32xf32> to vector<16x32xf32>
    %cst_157 = arith.constant dense<0.000000e+00> : vector<16x32xf32>
    %318 = tpu.matmul %316, %317, %cst_157 {dimension_numbers = #tpu.dot_dimension_numbers<[1], [0], [0], [1], [0, 0, 1, 1], [], []>} : vector<16x16xf32>, vector<16x32xf32>, vector<16x32xf32> -> vector<16x32xf32>
    %319 = arith.addf %297, %318 : vector<16x32xf32>
    %320 = vector.broadcast %269 : vector<1x32xf32> to vector<16x32xf32>
    %321 = arith.addf %319, %320 : vector<16x32xf32>
    %322 = arith.addf %321, %249 : vector<16x32xf32>
    %cst_158 = arith.constant dense<0.000000e+00> : vector<16xf32>
    %323 = vector.multi_reduction <add>, %322, %cst_158 [1] : vector<16x32xf32> to vector<16xf32>
    %324 = vector.shape_cast %323 : vector<16xf32> to vector<16x1xf32>
    %cst_159 = arith.constant 3.200000e+01 : f32
    %325 = vector.broadcast %cst_159 : f32 to vector<16x1xf32>
    %326 = arith.divf %324, %325 : vector<16x1xf32>
    %327 = vector.broadcast %326 : vector<16x1xf32> to vector<16x32xf32>
    %328 = arith.subf %322, %327 : vector<16x32xf32>
    %329 = arith.mulf %328, %328 : vector<16x32xf32>
    %cst_160 = arith.constant dense<0.000000e+00> : vector<16xf32>
    %330 = vector.multi_reduction <add>, %329, %cst_160 [1] : vector<16x32xf32> to vector<16xf32>
    %331 = vector.shape_cast %330 : vector<16xf32> to vector<16x1xf32>
    %cst_161 = arith.constant 3.200000e+01 : f32
    %332 = vector.broadcast %cst_161 : f32 to vector<16x1xf32>
    %333 = arith.divf %331, %332 : vector<16x1xf32>
    %334 = vector.broadcast %326 : vector<16x1xf32> to vector<16x32xf32>
    %335 = arith.subf %322, %334 : vector<16x32xf32>
    %cst_162 = arith.constant 9.99999974E-6 : f32
    %336 = vector.broadcast %cst_162 : f32 to vector<16x1xf32>
    %337 = arith.addf %333, %336 : vector<16x1xf32>
    %338 = math.rsqrt %337 : vector<16x1xf32>
    %339 = vector.broadcast %338 : vector<16x1xf32> to vector<16x32xf32>
    %340 = arith.mulf %335, %339 : vector<16x32xf32>
    %341 = vector.broadcast %271 : vector<1x32xf32> to vector<16x32xf32>
    %342 = arith.mulf %340, %341 : vector<16x32xf32>
    %343 = vector.broadcast %273 : vector<1x32xf32> to vector<16x32xf32>
    %344 = arith.addf %342, %343 : vector<16x32xf32>
    %345 = vector.shape_cast %293 : vector<2x8x8xf32> to vector<2x1x8x8xf32>
    %346 = vector.shape_cast %314 : vector<2x8x8xf32> to vector<2x1x8x8xf32>
    %347 = tpu.concatenate %345, %346 in 1 : vector<2x1x8x8xf32>, vector<2x1x8x8xf32> -> vector<2x2x8x8xf32>
    %c1_163 = arith.constant 1 : index
    %c0_164 = arith.constant 0 : index
    %c0_165 = arith.constant 0 : index
    %348 = vector.load %arg10[%c1_163, %c0_164, %c0_165] : memref<2x32x32xf32, #tpu.memory_space<vmem>>, vector<1x32x32xf32>
    %349 = vector.shape_cast %348 : vector<1x32x32xf32> to vector<32x32xf32>
    %cst_166 = arith.constant dense<0.000000e+00> : vector<16x32xf32>
    %350 = tpu.matmul %344, %349, %cst_166 {dimension_numbers = #tpu.dot_dimension_numbers<[1], [0], [0], [1], [0, 0, 1, 1], [], []>} : vector<16x32xf32>, vector<32x32xf32>, vector<16x32xf32> -> vector<16x32xf32>
    %c1_167 = arith.constant 1 : index
    %c0_168 = arith.constant 0 : index
    %c0_169 = arith.constant 0 : index
    %351 = vector.load %arg11[%c1_167, %c0_168, %c0_169] : memref<2x1x32xf32, #tpu.memory_space<vmem>>, vector<1x1x32xf32>
    %352 = vector.shape_cast %351 : vector<1x1x32xf32> to vector<1x32xf32>
    %353 = vector.broadcast %352 : vector<1x32xf32> to vector<16x32xf32>
    %354 = arith.addf %350, %353 : vector<16x32xf32>
    %c1_170 = arith.constant 1 : index
    %c0_171 = arith.constant 0 : index
    %c0_172 = arith.constant 0 : index
    %355 = vector.load %arg12[%c1_170, %c0_171, %c0_172] : memref<2x32x64xf32, #tpu.memory_space<vmem>>, vector<1x32x64xf32>
    %356 = vector.shape_cast %355 : vector<1x32x64xf32> to vector<32x64xf32>
    %cst_173 = arith.constant dense<0.000000e+00> : vector<16x64xf32>
    %357 = tpu.matmul %5, %356, %cst_173 {dimension_numbers = #tpu.dot_dimension_numbers<[1], [0], [0], [1], [0, 0, 1, 1], [], []>} : vector<16x32xf32>, vector<32x64xf32>, vector<16x64xf32> -> vector<16x64xf32>
    %c1_174 = arith.constant 1 : index
    %c0_175 = arith.constant 0 : index
    %c0_176 = arith.constant 0 : index
    %358 = vector.load %arg13[%c1_174, %c0_175, %c0_176] : memref<2x1x64xf32, #tpu.memory_space<vmem>>, vector<1x1x64xf32>
    %359 = vector.shape_cast %358 : vector<1x1x64xf32> to vector<1x64xf32>
    %360 = vector.broadcast %359 : vector<1x64xf32> to vector<16x64xf32>
    %361 = arith.addf %357, %360 : vector<16x64xf32>
    %362 = vector.extract_strided_slice %361 {offsets = [0, 0], sizes = [16, 32], strides = [1, 1]} : vector<16x64xf32> to vector<16x32xf32>
    %363 = vector.extract_strided_slice %361 {offsets = [0, 32], sizes = [16, 32], strides = [1, 1]} : vector<16x64xf32> to vector<16x32xf32>
    %c1_177 = arith.constant 1 : index
    %c0_178 = arith.constant 0 : index
    %c0_179 = arith.constant 0 : index
    %364 = vector.load %arg14[%c1_177, %c0_178, %c0_179] : memref<2x32x32xf32, #tpu.memory_space<vmem>>, vector<1x32x32xf32>
    %365 = vector.shape_cast %364 : vector<1x32x32xf32> to vector<32x32xf32>
    %c1_180 = arith.constant 1 : index
    %c0_181 = arith.constant 0 : index
    %c0_182 = arith.constant 0 : index
    %366 = vector.load %arg15[%c1_180, %c0_181, %c0_182] : memref<2x1x32xf32, #tpu.memory_space<vmem>>, vector<1x1x32xf32>
    %367 = vector.shape_cast %366 : vector<1x1x32xf32> to vector<1x32xf32>
    %c1_183 = arith.constant 1 : index
    %c0_184 = arith.constant 0 : index
    %c0_185 = arith.constant 0 : index
    %368 = vector.load %arg16[%c1_183, %c0_184, %c0_185] : memref<2x1x32xf32, #tpu.memory_space<vmem>>, vector<1x1x32xf32>
    %369 = vector.shape_cast %368 : vector<1x1x32xf32> to vector<1x32xf32>
    %c1_186 = arith.constant 1 : index
    %c0_187 = arith.constant 0 : index
    %c0_188 = arith.constant 0 : index
    %370 = vector.load %arg17[%c1_186, %c0_187, %c0_188] : memref<2x1x32xf32, #tpu.memory_space<vmem>>, vector<1x1x32xf32>
    %371 = vector.shape_cast %370 : vector<1x1x32xf32> to vector<1x32xf32>
    %372 = vector.shape_cast %354 : vector<16x32xf32> to vector<2x8x32xf32>
    %373 = vector.shape_cast %362 : vector<16x32xf32> to vector<2x8x32xf32>
    %374 = vector.shape_cast %363 : vector<16x32xf32> to vector<2x8x32xf32>
    %375 = vector.extract_strided_slice %372 {offsets = [0, 0, 0], sizes = [2, 8, 16], strides = [1, 1, 1]} : vector<2x8x32xf32> to vector<2x8x16xf32>
    %376 = vector.extract_strided_slice %373 {offsets = [0, 0, 0], sizes = [2, 8, 16], strides = [1, 1, 1]} : vector<2x8x32xf32> to vector<2x8x16xf32>
    %377 = vector.extract_strided_slice %374 {offsets = [0, 0, 0], sizes = [2, 8, 16], strides = [1, 1, 1]} : vector<2x8x32xf32> to vector<2x8x16xf32>
    "tpu.trace_start"() <{level = 10 : i32, message = "bqd,bkd->bqk"}> : () -> ()
    %cst_189 = arith.constant dense<0.000000e+00> : vector<2x8x8xf32>
    %378 = tpu.matmul %375, %376, %cst_189 {dimension_numbers = #tpu.dot_dimension_numbers<[2], [2], [1], [1], [0, 0, 0, 1, 1, 1], [0], [0]>} : vector<2x8x16xf32>, vector<2x8x16xf32>, vector<2x8x8xf32> -> vector<2x8x8xf32>
    "tpu.trace_stop"() : () -> ()
    %cst_190 = arith.constant 2.500000e-01 : f32
    %379 = vector.broadcast %cst_190 : f32 to vector<2x8x8xf32>
    %380 = arith.mulf %378, %379 : vector<2x8x8xf32>
    %381 = arith.addf %380, %3 : vector<2x8x8xf32>
    %cst_191 = arith.constant dense<0xFF800000> : vector<2x8xf32>
    %382 = vector.multi_reduction <maximumf>, %381, %cst_191 [2] : vector<2x8x8xf32> to vector<2x8xf32>
    %383 = vector.shape_cast %382 : vector<2x8xf32> to vector<2x8x1xf32>
    %384 = vector.broadcast %383 : vector<2x8x1xf32> to vector<2x8x8xf32>
    %385 = arith.subf %381, %384 : vector<2x8x8xf32>
    %386 = math.exp %385 : vector<2x8x8xf32>
    %cst_192 = arith.constant dense<0.000000e+00> : vector<2x8xf32>
    %387 = vector.multi_reduction <add>, %386, %cst_192 [2] : vector<2x8x8xf32> to vector<2x8xf32>
    %388 = vector.shape_cast %387 : vector<2x8xf32> to vector<2x8x1xf32>
    %389 = tpu.reciprocal %388 {approx = true} : vector<2x8x1xf32> -> vector<2x8x1xf32>
    %390 = vector.broadcast %389 : vector<2x8x1xf32> to vector<2x8x8xf32>
    %391 = arith.mulf %386, %390 : vector<2x8x8xf32>
    "tpu.trace_start"() <{level = 10 : i32, message = "bqk,bkd->bqd"}> : () -> ()
    %cst_193 = arith.constant dense<0.000000e+00> : vector<2x8x16xf32>
    %392 = tpu.matmul %391, %377, %cst_193 {dimension_numbers = #tpu.dot_dimension_numbers<[2], [1], [1], [2], [0, 0, 0, 1, 1, 2], [0], [0]>} : vector<2x8x8xf32>, vector<2x8x16xf32>, vector<2x8x16xf32> -> vector<2x8x16xf32>
    "tpu.trace_stop"() : () -> ()
    %393 = vector.shape_cast %392 : vector<2x8x16xf32> to vector<16x16xf32>
    %394 = vector.extract_strided_slice %365 {offsets = [0, 0], sizes = [16, 32], strides = [1, 1]} : vector<32x32xf32> to vector<16x32xf32>
    %cst_194 = arith.constant dense<0.000000e+00> : vector<16x32xf32>
    %395 = tpu.matmul %393, %394, %cst_194 {dimension_numbers = #tpu.dot_dimension_numbers<[1], [0], [0], [1], [0, 0, 1, 1], [], []>} : vector<16x16xf32>, vector<16x32xf32>, vector<16x32xf32> -> vector<16x32xf32>
    %396 = vector.extract_strided_slice %372 {offsets = [0, 0, 16], sizes = [2, 8, 16], strides = [1, 1, 1]} : vector<2x8x32xf32> to vector<2x8x16xf32>
    %397 = vector.extract_strided_slice %373 {offsets = [0, 0, 16], sizes = [2, 8, 16], strides = [1, 1, 1]} : vector<2x8x32xf32> to vector<2x8x16xf32>
    %398 = vector.extract_strided_slice %374 {offsets = [0, 0, 16], sizes = [2, 8, 16], strides = [1, 1, 1]} : vector<2x8x32xf32> to vector<2x8x16xf32>
    "tpu.trace_start"() <{level = 10 : i32, message = "bqd,bkd->bqk"}> : () -> ()
    %cst_195 = arith.constant dense<0.000000e+00> : vector<2x8x8xf32>
    %399 = tpu.matmul %396, %397, %cst_195 {dimension_numbers = #tpu.dot_dimension_numbers<[2], [2], [1], [1], [0, 0, 0, 1, 1, 1], [0], [0]>} : vector<2x8x16xf32>, vector<2x8x16xf32>, vector<2x8x8xf32> -> vector<2x8x8xf32>
    "tpu.trace_stop"() : () -> ()
    %cst_196 = arith.constant 2.500000e-01 : f32
    %400 = vector.broadcast %cst_196 : f32 to vector<2x8x8xf32>
    %401 = arith.mulf %399, %400 : vector<2x8x8xf32>
    %402 = arith.addf %401, %3 : vector<2x8x8xf32>
    %cst_197 = arith.constant dense<0xFF800000> : vector<2x8xf32>
    %403 = vector.multi_reduction <maximumf>, %402, %cst_197 [2] : vector<2x8x8xf32> to vector<2x8xf32>
    %404 = vector.shape_cast %403 : vector<2x8xf32> to vector<2x8x1xf32>
    %405 = vector.broadcast %404 : vector<2x8x1xf32> to vector<2x8x8xf32>
    %406 = arith.subf %402, %405 : vector<2x8x8xf32>
    %407 = math.exp %406 : vector<2x8x8xf32>
    %cst_198 = arith.constant dense<0.000000e+00> : vector<2x8xf32>
    %408 = vector.multi_reduction <add>, %407, %cst_198 [2] : vector<2x8x8xf32> to vector<2x8xf32>
    %409 = vector.shape_cast %408 : vector<2x8xf32> to vector<2x8x1xf32>
    %410 = tpu.reciprocal %409 {approx = true} : vector<2x8x1xf32> -> vector<2x8x1xf32>
    %411 = vector.broadcast %410 : vector<2x8x1xf32> to vector<2x8x8xf32>
    %412 = arith.mulf %407, %411 : vector<2x8x8xf32>
    "tpu.trace_start"() <{level = 10 : i32, message = "bqk,bkd->bqd"}> : () -> ()
    %cst_199 = arith.constant dense<0.000000e+00> : vector<2x8x16xf32>
    %413 = tpu.matmul %412, %398, %cst_199 {dimension_numbers = #tpu.dot_dimension_numbers<[2], [1], [1], [2], [0, 0, 0, 1, 1, 2], [0], [0]>} : vector<2x8x8xf32>, vector<2x8x16xf32>, vector<2x8x16xf32> -> vector<2x8x16xf32>
    "tpu.trace_stop"() : () -> ()
    %414 = vector.shape_cast %413 : vector<2x8x16xf32> to vector<16x16xf32>
    %415 = vector.extract_strided_slice %365 {offsets = [16, 0], sizes = [16, 32], strides = [1, 1]} : vector<32x32xf32> to vector<16x32xf32>
    %cst_200 = arith.constant dense<0.000000e+00> : vector<16x32xf32>
    %416 = tpu.matmul %414, %415, %cst_200 {dimension_numbers = #tpu.dot_dimension_numbers<[1], [0], [0], [1], [0, 0, 1, 1], [], []>} : vector<16x16xf32>, vector<16x32xf32>, vector<16x32xf32> -> vector<16x32xf32>
    %417 = arith.addf %395, %416 : vector<16x32xf32>
    %418 = vector.broadcast %367 : vector<1x32xf32> to vector<16x32xf32>
    %419 = arith.addf %417, %418 : vector<16x32xf32>
    %420 = arith.addf %419, %344 : vector<16x32xf32>
    %cst_201 = arith.constant dense<0.000000e+00> : vector<16xf32>
    %421 = vector.multi_reduction <add>, %420, %cst_201 [1] : vector<16x32xf32> to vector<16xf32>
    %422 = vector.shape_cast %421 : vector<16xf32> to vector<16x1xf32>
    %cst_202 = arith.constant 3.200000e+01 : f32
    %423 = vector.broadcast %cst_202 : f32 to vector<16x1xf32>
    %424 = arith.divf %422, %423 : vector<16x1xf32>
    %425 = vector.broadcast %424 : vector<16x1xf32> to vector<16x32xf32>
    %426 = arith.subf %420, %425 : vector<16x32xf32>
    %427 = arith.mulf %426, %426 : vector<16x32xf32>
    %cst_203 = arith.constant dense<0.000000e+00> : vector<16xf32>
    %428 = vector.multi_reduction <add>, %427, %cst_203 [1] : vector<16x32xf32> to vector<16xf32>
    %429 = vector.shape_cast %428 : vector<16xf32> to vector<16x1xf32>
    %cst_204 = arith.constant 3.200000e+01 : f32
    %430 = vector.broadcast %cst_204 : f32 to vector<16x1xf32>
    %431 = arith.divf %429, %430 : vector<16x1xf32>
    %432 = vector.broadcast %424 : vector<16x1xf32> to vector<16x32xf32>
    %433 = arith.subf %420, %432 : vector<16x32xf32>
    %cst_205 = arith.constant 9.99999974E-6 : f32
    %434 = vector.broadcast %cst_205 : f32 to vector<16x1xf32>
    %435 = arith.addf %431, %434 : vector<16x1xf32>
    %436 = math.rsqrt %435 : vector<16x1xf32>
    %437 = vector.broadcast %436 : vector<16x1xf32> to vector<16x32xf32>
    %438 = arith.mulf %433, %437 : vector<16x32xf32>
    %439 = vector.broadcast %369 : vector<1x32xf32> to vector<16x32xf32>
    %440 = arith.mulf %438, %439 : vector<16x32xf32>
    %441 = vector.broadcast %371 : vector<1x32xf32> to vector<16x32xf32>
    %442 = arith.addf %440, %441 : vector<16x32xf32>
    %443 = vector.shape_cast %391 : vector<2x8x8xf32> to vector<2x1x8x8xf32>
    %444 = vector.shape_cast %412 : vector<2x8x8xf32> to vector<2x1x8x8xf32>
    %445 = tpu.concatenate %443, %444 in 1 : vector<2x1x8x8xf32>, vector<2x1x8x8xf32> -> vector<2x2x8x8xf32>
    %c1_206 = arith.constant 1 : index
    %c0_207 = arith.constant 0 : index
    %c0_208 = arith.constant 0 : index
    %446 = vector.load %arg18[%c1_206, %c0_207, %c0_208] : memref<2x32x64xf32, #tpu.memory_space<vmem>>, vector<1x32x64xf32>
    %447 = vector.shape_cast %446 : vector<1x32x64xf32> to vector<32x64xf32>
    %c1_209 = arith.constant 1 : index
    %c0_210 = arith.constant 0 : index
    %c0_211 = arith.constant 0 : index
    %448 = vector.load %arg19[%c1_209, %c0_210, %c0_211] : memref<2x1x64xf32, #tpu.memory_space<vmem>>, vector<1x1x64xf32>
    %449 = vector.shape_cast %448 : vector<1x1x64xf32> to vector<1x64xf32>
    %c1_212 = arith.constant 1 : index
    %c0_213 = arith.constant 0 : index
    %c0_214 = arith.constant 0 : index
    %450 = vector.load %arg20[%c1_212, %c0_213, %c0_214] : memref<2x64x32xf32, #tpu.memory_space<vmem>>, vector<1x64x32xf32>
    %451 = vector.shape_cast %450 : vector<1x64x32xf32> to vector<64x32xf32>
    %c1_215 = arith.constant 1 : index
    %c0_216 = arith.constant 0 : index
    %c0_217 = arith.constant 0 : index
    %452 = vector.load %arg21[%c1_215, %c0_216, %c0_217] : memref<2x1x32xf32, #tpu.memory_space<vmem>>, vector<1x1x32xf32>
    %453 = vector.shape_cast %452 : vector<1x1x32xf32> to vector<1x32xf32>
    %c1_218 = arith.constant 1 : index
    %c0_219 = arith.constant 0 : index
    %c0_220 = arith.constant 0 : index
    %454 = vector.load %arg22[%c1_218, %c0_219, %c0_220] : memref<2x1x32xf32, #tpu.memory_space<vmem>>, vector<1x1x32xf32>
    %455 = vector.shape_cast %454 : vector<1x1x32xf32> to vector<1x32xf32>
    %c1_221 = arith.constant 1 : index
    %c0_222 = arith.constant 0 : index
    %c0_223 = arith.constant 0 : index
    %456 = vector.load %arg23[%c1_221, %c0_222, %c0_223] : memref<2x1x32xf32, #tpu.memory_space<vmem>>, vector<1x1x32xf32>
    %457 = vector.shape_cast %456 : vector<1x1x32xf32> to vector<1x32xf32>
    %cst_224 = arith.constant dense<0.000000e+00> : vector<16x64xf32>
    %458 = tpu.matmul %442, %447, %cst_224 {dimension_numbers = #tpu.dot_dimension_numbers<[1], [0], [0], [1], [0, 0, 1, 1], [], []>} : vector<16x32xf32>, vector<32x64xf32>, vector<16x64xf32> -> vector<16x64xf32>
    %459 = vector.broadcast %449 : vector<1x64xf32> to vector<16x64xf32>
    %460 = arith.addf %458, %459 : vector<16x64xf32>
    %cst_225 = arith.constant 5.000000e-01 : f32
    %461 = vector.broadcast %cst_225 : f32 to vector<16x64xf32>
    %462 = arith.mulf %461, %460 : vector<16x64xf32>
    %cst_226 = arith.constant 4.471500e-02 : f32
    %463 = vector.broadcast %cst_226 : f32 to vector<16x64xf32>
    %464 = arith.mulf %463, %460 : vector<16x64xf32>
    %465 = arith.mulf %464, %460 : vector<16x64xf32>
    %466 = arith.mulf %465, %460 : vector<16x64xf32>
    %467 = arith.addf %460, %466 : vector<16x64xf32>
    %cst_227 = arith.constant 0.797884583 : f32
    %468 = vector.broadcast %cst_227 : f32 to vector<16x64xf32>
    %469 = arith.mulf %468, %467 : vector<16x64xf32>
    %470 = math.tanh %469 : vector<16x64xf32>
    %cst_228 = arith.constant 1.000000e+00 : f32
    %471 = vector.broadcast %cst_228 : f32 to vector<16x64xf32>
    %472 = arith.addf %471, %470 : vector<16x64xf32>
    %473 = arith.mulf %462, %472 : vector<16x64xf32>
    %cst_229 = arith.constant dense<0.000000e+00> : vector<16x32xf32>
    %474 = tpu.matmul %473, %451, %cst_229 {dimension_numbers = #tpu.dot_dimension_numbers<[1], [0], [0], [1], [0, 0, 1, 1], [], []>} : vector<16x64xf32>, vector<64x32xf32>, vector<16x32xf32> -> vector<16x32xf32>
    %475 = vector.broadcast %453 : vector<1x32xf32> to vector<16x32xf32>
    %476 = arith.addf %474, %475 : vector<16x32xf32>
    %477 = arith.addf %476, %442 : vector<16x32xf32>
    %cst_230 = arith.constant dense<0.000000e+00> : vector<16xf32>
    %478 = vector.multi_reduction <add>, %477, %cst_230 [1] : vector<16x32xf32> to vector<16xf32>
    %479 = vector.shape_cast %478 : vector<16xf32> to vector<16x1xf32>
    %cst_231 = arith.constant 3.200000e+01 : f32
    %480 = vector.broadcast %cst_231 : f32 to vector<16x1xf32>
    %481 = arith.divf %479, %480 : vector<16x1xf32>
    %482 = vector.broadcast %481 : vector<16x1xf32> to vector<16x32xf32>
    %483 = arith.subf %477, %482 : vector<16x32xf32>
    %484 = arith.mulf %483, %483 : vector<16x32xf32>
    %cst_232 = arith.constant dense<0.000000e+00> : vector<16xf32>
    %485 = vector.multi_reduction <add>, %484, %cst_232 [1] : vector<16x32xf32> to vector<16xf32>
    %486 = vector.shape_cast %485 : vector<16xf32> to vector<16x1xf32>
    %cst_233 = arith.constant 3.200000e+01 : f32
    %487 = vector.broadcast %cst_233 : f32 to vector<16x1xf32>
    %488 = arith.divf %486, %487 : vector<16x1xf32>
    %489 = vector.broadcast %481 : vector<16x1xf32> to vector<16x32xf32>
    %490 = arith.subf %477, %489 : vector<16x32xf32>
    %cst_234 = arith.constant 9.99999974E-6 : f32
    %491 = vector.broadcast %cst_234 : f32 to vector<16x1xf32>
    %492 = arith.addf %488, %491 : vector<16x1xf32>
    %493 = math.rsqrt %492 : vector<16x1xf32>
    %494 = vector.broadcast %493 : vector<16x1xf32> to vector<16x32xf32>
    %495 = arith.mulf %490, %494 : vector<16x32xf32>
    %496 = vector.broadcast %455 : vector<1x32xf32> to vector<16x32xf32>
    %497 = arith.mulf %495, %496 : vector<16x32xf32>
    %498 = vector.broadcast %457 : vector<1x32xf32> to vector<16x32xf32>
    %499 = arith.addf %497, %498 : vector<16x32xf32>
    %c1_235 = arith.constant 1 : index
    %c0_236 = arith.constant 0 : index
    %c0_237 = arith.constant 0 : index
    %c0_238 = arith.constant 0 : index
    %c0_239 = arith.constant 0 : index
    %500 = vector.load %arg25[%c1_235, %c0_236, %c0_237, %c0_238, %c0_239] : memref<2x2x2x8x8xf32, #tpu.memory_space<vmem>>, vector<1x2x2x8x8xf32>
    %501 = vector.shape_cast %500 : vector<1x2x2x8x8xf32> to vector<2x2x8x8xf32>
    %502 = vector.shape_cast %347 : vector<2x2x8x8xf32> to vector<1x2x2x8x8xf32>
    tpu.vector_store %arg25[%c1_235, %c0_236, %c0_237, %c0_238, %c0_239], %502 {strides = array<i32>} : memref<2x2x2x8x8xf32, #tpu.memory_space<vmem>>, vector<1x2x2x8x8xf32>,
    %c1_240 = arith.constant 1 : index
    %c0_241 = arith.constant 0 : index
    %c0_242 = arith.constant 0 : index
    %c0_243 = arith.constant 0 : index
    %c0_244 = arith.constant 0 : index
    %503 = vector.load %arg26[%c1_240, %c0_241, %c0_242, %c0_243, %c0_244] : memref<2x2x2x8x8xf32, #tpu.memory_space<vmem>>, vector<1x2x2x8x8xf32>
    %504 = vector.shape_cast %503 : vector<1x2x2x8x8xf32> to vector<2x2x8x8xf32>
    %505 = vector.shape_cast %445 : vector<2x2x8x8xf32> to vector<1x2x2x8x8xf32>
    tpu.vector_store %arg26[%c1_240, %c0_241, %c0_242, %c0_243, %c0_244], %505 {strides = array<i32>} : memref<2x2x2x8x8xf32, #tpu.memory_space<vmem>>, vector<1x2x2x8x8xf32>,
    %506 = vector.shape_cast %499 : vector<16x32xf32> to vector<2x8x32xf32>
    %c0_245 = arith.constant 0 : index
    %c0_246 = arith.constant 0 : index
    %c0_247 = arith.constant 0 : index
    %507 = vector.load %arg24[%c0_245, %c0_246, %c0_247] : memref<2x8x32xf32, #tpu.memory_space<vmem>>, vector<2x8x32xf32>
    tpu.vector_store %arg24[%c0_245, %c0_246, %c0_247], %506 {strides = array<i32>} : memref<2x8x32xf32, #tpu.memory_space<vmem>>, vector<2x8x32xf32>,
    return
  }
}

</mosaic_0001>

<llo_original>
// kernel: opinion_transformer_forward.2
$region0: #{opinion_transformer_forward.2}
  #allocation0 [shape = 'u32[]', space=smem, size = 0x4, offset = 0x4, fixed_abs, tag = 'smem constant byte address 0x4 - core index']
  #allocation1 [shape = 'u32[72,128]{1,0:T(1,128)}', space=vmem, size = 0x9000, scoped, tag = 'internal scratch']
  %s0 = inlined_call_operand.vmem [shape: f32[2,8,32], index: 0, kind: input, shape index: {}]
  %s1 = inlined_call_operand.vmem [shape: f32[2,8], index: 1, kind: input, shape index: {}]
  %s2 = inlined_call_operand.vmem [shape: f32[2,24], index: 2, kind: input, shape index: {}]
  %s3 = inlined_call_operand.vmem [shape: f32[2,8,8], index: 3, kind: input, shape index: {}]
  %s4 = inlined_call_operand.vmem [shape: f32[24,100], index: 4, kind: input, shape index: {}]
  %s5 = inlined_call_operand.vmem [shape: f32[1,100], index: 5, kind: input, shape index: {}]
  %s6 = inlined_call_operand.vmem [shape: f32[32,32], index: 6, kind: input, shape index: {}]
  %s7 = inlined_call_operand.vmem [shape: f32[8,32], index: 7, kind: input, shape index: {}]
  %s8 = inlined_call_operand.vmem [shape: f32[100,32], index: 8, kind: input, shape index: {}]
  %s9 = inlined_call_operand.vmem [shape: f32[1,32], index: 9, kind: input, shape index: {}]
  %s10 = inlined_call_operand.vmem [shape: f32[2,32,96], index: 10, kind: input, shape index: {}]
  %s11 = inlined_call_operand.vmem [shape: f32[2,1,96], index: 11, kind: input, shape index: {}]
  %s12 = inlined_call_operand.vmem [shape: f32[2,32,32], index: 12, kind: input, shape index: {}]
  %s13 = inlined_call_operand.vmem [shape: f32[2,1,32], index: 13, kind: input, shape index: {}]
  %s14 = inlined_call_operand.vmem [shape: f32[2,1,32], index: 14, kind: input, shape index: {}]
  %s15 = inlined_call_operand.vmem [shape: f32[2,1,32], index: 15, kind: input, shape index: {}]
  %s16 = inlined_call_operand.vmem [shape: f32[2,32,64], index: 16, kind: input, shape index: {}]
  %s17 = inlined_call_operand.vmem [shape: f32[2,1,64], index: 17, kind: input, shape index: {}]
  %s18 = inlined_call_operand.vmem [shape: f32[2,64,32], index: 18, kind: input, shape index: {}]
  %s19 = inlined_call_operand.vmem [shape: f32[2,1,32], index: 19, kind: input, shape index: {}]
  %s20 = inlined_call_operand.vmem [shape: f32[2,1,32], index: 20, kind: input, shape index: {}]
  %s21 = inlined_call_operand.vmem [shape: f32[2,1,32], index: 21, kind: input, shape index: {}]
  %s22 = inlined_call_operand.vmem [shape: f32[2,8,32], index: 22, kind: output, shape index: {}]
  %s23 = sld [smem:[#allocation0]]
  $region98: #{opinion_transformer_forward.2} parent=0
    _
  %s25 = ssub.s32 1, %s23
  %s26 = scalar_select 0, %s25, %s23
  // Predicated region
  $region2: #{opinion_transformer_forward.2} parent=0 // pred_check
    _
  $region3: #{opinion_transformer_forward.2} parent=0 // pred_check_branch
    %28 = sbr.rel (0) target = $region5
  $region4: #{opinion_transformer_forward.2} parent=0 // pred_region
    _
  $region5: #{opinion_transformer_forward.2} parent=0 // pred_fallthru
    _
  // Predicated region
  $region6: #{opinion_transformer_forward.2} parent=0 // pred_check
    _
  $region7: #{opinion_transformer_forward.2} parent=0 // pred_check_branch
    %30 = sbr.rel (0) target = $region9
  $region8: #{opinion_transformer_forward.2} parent=0 // pred_region
    _
  $region9: #{opinion_transformer_forward.2} parent=0 // pred_fallthru
    _
  // Predicated region
  $region10: #{opinion_transformer_forward.2} parent=0 // pred_check
    _
  $region11: #{opinion_transformer_forward.2} parent=0 // pred_check_branch
    %32 = sbr.rel (0) target = $region13
  $region12: #{opinion_transformer_forward.2} parent=0 // pred_region
    _
  $region13: #{opinion_transformer_forward.2} parent=0 // pred_fallthru
    _
  // Predicated region
  $region14: #{opinion_transformer_forward.2} parent=0 // pred_check
    _
  $region15: #{opinion_transformer_forward.2} parent=0 // pred_check_branch
    %34 = sbr.rel (0) target = $region17
  $region16: #{opinion_transformer_forward.2} parent=0 // pred_region
    _
  $region17: #{opinion_transformer_forward.2} parent=0 // pred_fallthru
    _
  // Predicated region
  $region18: #{opinion_transformer_forward.2} parent=0 // pred_check
    _
  $region19: #{opinion_transformer_forward.2} parent=0 // pred_check_branch
    %36 = sbr.rel (0) target = $region21
  $region20: #{opinion_transformer_forward.2} parent=0 // pred_region
    _
  $region21: #{opinion_transformer_forward.2} parent=0 // pred_fallthru
    _
  // Predicated region
  $region22: #{opinion_transformer_forward.2} parent=0 // pred_check
    _
  $region23: #{opinion_transformer_forward.2} parent=0 // pred_check_branch
    %38 = sbr.rel (0) target = $region25
  $region24: #{opinion_transformer_forward.2} parent=0 // pred_region
    _
  $region25: #{opinion_transformer_forward.2} parent=0 // pred_fallthru
    _
  // Predicated region
  $region26: #{opinion_transformer_forward.2} parent=0 // pred_check
    _
  $region27: #{opinion_transformer_forward.2} parent=0 // pred_check_branch
    %40 = sbr.rel (0) target = $region29
  $region28: #{opinion_transformer_forward.2} parent=0 // pred_region
    _
  $region29: #{opinion_transformer_forward.2} parent=0 // pred_fallthru
    _
  // Predicated region
  $region30: #{opinion_transformer_forward.2} parent=0 // pred_check
    _
  $region31: #{opinion_transformer_forward.2} parent=0 // pred_check_branch
    %42 = sbr.rel (0) target = $region33
  $region32: #{opinion_transformer_forward.2} parent=0 // pred_region
    _
  $region33: #{opinion_transformer_forward.2} parent=0 // pred_fallthru
    _
  // Predicated region
  $region34: #{opinion_transformer_forward.2} parent=0 // pred_check
    _
  $region35: #{opinion_transformer_forward.2} parent=0 // pred_check_branch
    %44 = sbr.rel (0) target = $region37
  $region36: #{opinion_transformer_forward.2} parent=0 // pred_region
    _
  $region37: #{opinion_transformer_forward.2} parent=0 // pred_fallthru
    _
  // Predicated region
  $region38: #{opinion_transformer_forward.2} parent=0 // pred_check
    _
  $region39: #{opinion_transformer_forward.2} parent=0 // pred_check_branch
    %46 = sbr.rel (0) target = $region41
  $region40: #{opinion_transformer_forward.2} parent=0 // pred_region
    _
  $region41: #{opinion_transformer_forward.2} parent=0 // pred_fallthru
    _
  // Predicated region
  $region42: #{opinion_transformer_forward.2} parent=0 // pred_check
    _
  $region43: #{opinion_transformer_forward.2} parent=0 // pred_check_branch
    %48 = sbr.rel (0) target = $region45
  $region44: #{opinion_transformer_forward.2} parent=0 // pred_region
    _
  $region45: #{opinion_transformer_forward.2} parent=0 // pred_fallthru
    _
  // Predicated region
  $region46: #{opinion_transformer_forward.2} parent=0 // pred_check
    _
  $region47: #{opinion_transformer_forward.2} parent=0 // pred_check_branch
    %50 = sbr.rel (0) target = $region49
  $region48: #{opinion_transformer_forward.2} parent=0 // pred_region
    _
  $region49: #{opinion_transformer_forward.2} parent=0 // pred_fallthru
    _
  // Predicated region
  $region50: #{opinion_transformer_forward.2} parent=0 // pred_check
    _
  $region51: #{opinion_transformer_forward.2} parent=0 // pred_check_branch
    %52 = sbr.rel (0) target = $region53
  $region52: #{opinion_transformer_forward.2} parent=0 // pred_region
    _
  $region53: #{opinion_transformer_forward.2} parent=0 // pred_fallthru
    _
  // Predicated region
  $region54: #{opinion_transformer_forward.2} parent=0 // pred_check
    _
  $region55: #{opinion_transformer_forward.2} parent=0 // pred_check_branch
    %54 = sbr.rel (0) target = $region57
  $region56: #{opinion_transformer_forward.2} parent=0 // pred_region
    _
  $region57: #{opinion_transformer_forward.2} parent=0 // pred_fallthru
    _
  // Predicated region
  $region58: #{opinion_transformer_forward.2} parent=0 // pred_check
    _
  $region59: #{opinion_transformer_forward.2} parent=0 // pred_check_branch
    %56 = sbr.rel (0) target = $region61
  $region60: #{opinion_transformer_forward.2} parent=0 // pred_region
    _
  $region61: #{opinion_transformer_forward.2} parent=0 // pred_fallthru
    _
  // Predicated region
  $region62: #{opinion_transformer_forward.2} parent=0 // pred_check
    _
  $region63: #{opinion_transformer_forward.2} parent=0 // pred_check_branch
    %58 = sbr.rel (0) target = $region65
  $region64: #{opinion_transformer_forward.2} parent=0 // pred_region
    _
  $region65: #{opinion_transformer_forward.2} parent=0 // pred_fallthru
    _
  // Predicated region
  $region66: #{opinion_transformer_forward.2} parent=0 // pred_check
    _
  $region67: #{opinion_transformer_forward.2} parent=0 // pred_check_branch
    %60 = sbr.rel (0) target = $region69
  $region68: #{opinion_transformer_forward.2} parent=0 // pred_region
    _
  $region69: #{opinion_transformer_forward.2} parent=0 // pred_fallthru
    _
  // Predicated region
  $region70: #{opinion_transformer_forward.2} parent=0 // pred_check
    _
  $region71: #{opinion_transformer_forward.2} parent=0 // pred_check_branch
    %62 = sbr.rel (0) target = $region73
  $region72: #{opinion_transformer_forward.2} parent=0 // pred_region
    _
  $region73: #{opinion_transformer_forward.2} parent=0 // pred_fallthru
    _
  // Predicated region
  $region74: #{opinion_transformer_forward.2} parent=0 // pred_check
    _
  $region75: #{opinion_transformer_forward.2} parent=0 // pred_check_branch
    %64 = sbr.rel (0) target = $region77
  $region76: #{opinion_transformer_forward.2} parent=0 // pred_region
    _
  $region77: #{opinion_transformer_forward.2} parent=0 // pred_fallthru
    _
  // Predicated region
  $region78: #{opinion_transformer_forward.2} parent=0 // pred_check
    _
  $region79: #{opinion_transformer_forward.2} parent=0 // pred_check_branch
    %66 = sbr.rel (0) target = $region81
  $region80: #{opinion_transformer_forward.2} parent=0 // pred_region
    _
  $region81: #{opinion_transformer_forward.2} parent=0 // pred_fallthru
    _
  // Predicated region
  $region82: #{opinion_transformer_forward.2} parent=0 // pred_check
    _
  $region83: #{opinion_transformer_forward.2} parent=0 // pred_check_branch
    %68 = sbr.rel (0) target = $region85
  $region84: #{opinion_transformer_forward.2} parent=0 // pred_region
    _
  $region85: #{opinion_transformer_forward.2} parent=0 // pred_fallthru
    _
  // Predicated region
  $region86: #{opinion_transformer_forward.2} parent=0 // pred_check
    _
  $region87: #{opinion_transformer_forward.2} parent=0 // pred_check_branch
    %70 = sbr.rel (0) target = $region89
  $region88: #{opinion_transformer_forward.2} parent=0 // pred_region
    _
  $region89: #{opinion_transformer_forward.2} parent=0 // pred_fallthru
    _
  %v71 = vld [vmem:[%s0] sm:$0xff]
  %v72 = vld [vmem:[%s0 + $0x8] sm:$0xff]
  %v73 = vld [vmem:[%s3] sm:$0xff]
  %v74 = vld [vmem:[%s3 + $0x8] sm:$0xff]
  %v75 = vld [vmem:[%s2] sm:$0x3]
  %v76 = vld [vmem:[%s4] sm:$0xff]
  %v77 = vld [vmem:[%s4 + $0x8] sm:$0xff]
  %v78 = vld [vmem:[%s4 + $0x10] sm:$0xff]
  %v79 = vld [vmem:[%s5] sm:$0x1]
  %v81 = vperm.slane %v79, 0
  %vm83 = vcmask 195584
  %v85 = vsel %vm83, %v75, 0
  %87 = vmatpush.msra.mxu0 0.0
  %88 = vmatpush.msra.mxu0 0.0
  %89 = vmatpush.msra.mxu0 0.0
  %90 = vmatpush.msra.mxu0 0.0
  %91 = vmatpush.msra.mxu0 0.0
  %92 = vmatpush.msra.mxu0 0.0
  %93 = vmatpush.msra.mxu0 0.0
  %94 = vmatpush.msra.mxu0 0.0
  %95 = vmatpush.msra.mxu0 0.0
  %96 = vmatpush.msra.mxu0 0.0
  %97 = vmatpush.msra.mxu0 0.0
  %98 = vmatpush.msra.mxu0 0.0
  %99 = vmatpush.msra.mxu0 0.0
  %100 = vmatpush.msra.mxu0 %v78
  %101 = vmatpush.msra.mxu0 %v77
  %102 = vmatpush.msra.mxu0 %v76
  %103 = vmatmul.f32.gmra.mxu0 %v85
  %v104 = vpop.f32.mrf.mxu0
  %v105 = vadd.f32 %v81, %v104
  %106 = vdwg.mxu0
  %v107 = vtanh.pop %v105
  %v108 = vld [vmem:[%s1] sm:$0x3]
  %v109 = vld [vmem:[%s7] sm:$0xff]
  %v110 = vld [vmem:[%s8] sm:$0xff]
  %v111 = vld [vmem:[%s8 + $0x8] sm:$0xff]
  %v112 = vld [vmem:[%s8 + $0x10] sm:$0xff]
  %v113 = vld [vmem:[%s8 + $0x18] sm:$0xff]
  %v114 = vld [vmem:[%s8 + $0x20] sm:$0xff]
  %v115 = vld [vmem:[%s8 + $0x28] sm:$0xff]
  %v116 = vld [vmem:[%s8 + $0x30] sm:$0xff]
  %v117 = vld [vmem:[%s8 + $0x38] sm:$0xff]
  %v118 = vld [vmem:[%s8 + $0x40] sm:$0xff]
  %v119 = vld [vmem:[%s8 + $0x48] sm:$0xff]
  %v120 = vld [vmem:[%s8 + $0x50] sm:$0xff]
  %v121 = vld [vmem:[%s8 + $0x58] sm:$0xff]
  %v122 = vld [vmem:[%s8 + $0x60] sm:$0xf]
  %vm123 = vcmask 818176
  %v125 = vsel %vm123, %v107, 0
  %vm127 = vcmask 1043456
  %v129 = vsel %vm127, %v122, 0
  %131 = vmatpush.msra.mxu0 0.0
  %132 = vmatpush.msra.mxu0 0.0
  %133 = vmatpush.msra.mxu0 0.0
  %134 = vmatpush.msra.mxu0 %v129
  %135 = vmatpush.msra.mxu0 %v121
  %136 = vmatpush.msra.mxu0 %v120
  %137 = vmatpush.msra.mxu0 %v119
  %138 = vmatpush.msra.mxu0 %v118
  %139 = vmatpush.msra.mxu0 %v117
  %140 = vmatpush.msra.mxu0 %v116
  %141 = vmatpush.msra.mxu0 %v115
  %142 = vmatpush.msra.mxu0 %v114
  %143 = vmatpush.msra.mxu0 %v113
  %144 = vmatpush.msra.mxu0 %v112
  %145 = vmatpush.msra.mxu0 %v111
  %146 = vmatpush.msra.mxu0 %v110
  %147 = vmatmul.f32.gmra.mxu0 %v125
  %v148 = vpop.f32.mrf.mxu0
  %v149 = vadd.f32 0.0, %v148
  %150 = vdwg.mxu0
  %vm151 = vcmask 64512
  %v153 = vsel %vm151, %v108, 0
  %155 = vmatpush.msra.mxu0 0.0
  %156 = vmatpush.msra.mxu0 0.0
  %157 = vmatpush.msra.mxu0 0.0
  %158 = vmatpush.msra.mxu0 0.0
  %159 = vmatpush.msra.mxu0 0.0
  %160 = vmatpush.msra.mxu0 0.0
  %161 = vmatpush.msra.mxu0 0.0
  %162 = vmatpush.msra.mxu0 0.0
  %163 = vmatpush.msra.mxu0 0.0
  %164 = vmatpush.msra.mxu0 0.0
  %165 = vmatpush.msra.mxu0 0.0
  %166 = vmatpush.msra.mxu0 0.0
  %167 = vmatpush.msra.mxu0 0.0
  %168 = vmatpush.msra.mxu0 0.0
  %169 = vmatpush.msra.mxu0 0.0
  %170 = vmatpush.msra.mxu0 %v109
  %171 = vmatmul.f32.gmra.mxu0 %v153
  %v172 = vpop.f32.mrf.mxu0
  %v173 = vadd.f32 %v149, %v172
  %174 = vdwg.mxu0
  %v175 = vld [vmem:[%s9] sm:$0x1]
  %v177 = vperm.slane %v175, 0
  %v179 = vadd.f32 %v173, %v177
  %v180 = vld [vmem:[%s6] sm:$0xff]
  %v181 = vld [vmem:[%s6 + $0x8] sm:$0xff]
  %v182 = vld [vmem:[%s6 + $0x10] sm:$0xff]
  %v183 = vld [vmem:[%s6 + $0x18] sm:$0xff]
  %vm184 = vcmask 261120
  %v186 = vsel %vm184, %v71, 0
  %v189 = vsel %vm184, %v72, 0
  %191 = vmatpush.msra.mxu0 0.0
  %192 = vmatpush.msra.mxu0 0.0
  %193 = vmatpush.msra.mxu0 0.0
  %194 = vmatpush.msra.mxu0 0.0
  %195 = vmatpush.msra.mxu0 0.0
  %196 = vmatpush.msra.mxu0 0.0
  %197 = vmatpush.msra.mxu0 0.0
  %198 = vmatpush.msra.mxu0 0.0
  %199 = vmatpush.msra.mxu0 0.0
  %200 = vmatpush.msra.mxu0 0.0
  %201 = vmatpush.msra.mxu0 0.0
  %202 = vmatpush.msra.mxu0 0.0
  %203 = vmatpush.msra.mxu0 %v183
  %204 = vmatpush.msra.mxu0 %v182
  %205 = vmatpush.msra.mxu0 %v181
  %206 = vmatpush.msra.mxu0 %v180
  %207 = vmatmul.f32.gmra.mxu0 %v186
  %v208 = vpop.f32.mrf.mxu0
  %v209 = vadd.f32 0.0, %v208
  %210 = vmatmul.f32.gmra.mxu0 %v189
  %v211 = vpop.f32.mrf.mxu0
  %v212 = vadd.f32 0.0, %v211
  %213 = vdwg.mxu0
  %v215 = vrot.slane %v179, 1
  %v216 = vperm.slane %v179, 0
  %v217 = vperm.slane %v215, 0
  %v220 = vadd.f32 %v209, %v216
  %v221 = vadd.f32 %v212, %v217
  %v222 = vld [vmem:[%s10] sm:$0xff]
  %v223 = vld [vmem:[%s10 + $0x8] sm:$0xff]
  %v224 = vld [vmem:[%s10 + $0x10] sm:$0xff]
  %v225 = vld [vmem:[%s10 + $0x18] sm:$0xff]
  %v226 = vld [vmem:[%s11] sm:$0x1]
  %v228 = vperm.slane %v226, 0
  %v231 = vsel %vm184, %v220, 0
  %v234 = vsel %vm184, %v221, 0
  %236 = vmatpush.msra.mxu0 0.0
  %237 = vmatpush.msra.mxu0 0.0
  %238 = vmatpush.msra.mxu0 0.0
  %239 = vmatpush.msra.mxu0 0.0
  %240 = vmatpush.msra.mxu0 0.0
  %241 = vmatpush.msra.mxu0 0.0
  %242 = vmatpush.msra.mxu0 0.0
  %243 = vmatpush.msra.mxu0 0.0
  %244 = vmatpush.msra.mxu0 0.0
  %245 = vmatpush.msra.mxu0 0.0
  %246 = vmatpush.msra.mxu0 0.0
  %247 = vmatpush.msra.mxu0 0.0
  %248 = vmatpush.msra.mxu0 %v225
  %249 = vmatpush.msra.mxu0 %v224
  %250 = vmatpush.msra.mxu0 %v223
  %251 = vmatpush.msra.mxu0 %v222
  %252 = vmatmul.f32.gmra.mxu0 %v231
  %v253 = vpop.f32.mrf.mxu0
  %v254 = vadd.f32 %v228, %v253
  %255 = vmatmul.f32.gmra.mxu0 %v234
  %v256 = vpop.f32.mrf.mxu0
  %v257 = vadd.f32 %v228, %v256
  %258 = vdwg.mxu0
  %v259 = vld [vmem:[%s12] sm:$0xff]
  %v260 = vld [vmem:[%s12 + $0x8] sm:$0xff]
  %v261 = vld [vmem:[%s12 + $0x10] sm:$0xff]
  %v262 = vld [vmem:[%s12 + $0x18] sm:$0xff]
  %v263 = vld [vmem:[%s13] sm:$0x1]
  %v264 = vld [vmem:[%s14] sm:$0x1]
  %v265 = vld [vmem:[%s15] sm:$0x1]
  %267 = vrot.lane.b32.xlu0 %v254, 96
  %v268 = vpop.permute.xlu0 %267
  %vm269 = vcmask 130048
  %v270 = vsel %vm269, %v254, 0
  %v272 = vsel %vm269, %v268, 0
  %274 = vmatpush.xpose.msra.mxu0 0.0
  %275 = vmatpush.xpose.msra.mxu0 0.0
  %276 = vmatpush.xpose.msra.mxu0 0.0
  %277 = vmatpush.xpose.msra.mxu0 0.0
  %278 = vmatpush.xpose.msra.mxu0 0.0
  %279 = vmatpush.xpose.msra.mxu0 0.0
  %280 = vmatpush.xpose.msra.mxu0 0.0
  %281 = vmatpush.xpose.msra.mxu0 0.0
  %282 = vmatpush.xpose.msra.mxu0 0.0
  %283 = vmatpush.xpose.msra.mxu0 0.0
  %284 = vmatpush.xpose.msra.mxu0 0.0
  %285 = vmatpush.xpose.msra.mxu0 0.0
  %286 = vmatpush.xpose.msra.mxu0 0.0
  %287 = vmatpush.xpose.msra.mxu0 0.0
  %288 = vmatpush.xpose.msra.mxu0 0.0
  %289 = vmatpush.xpose.msra.mxu0 %v272
  %290 = vmatmul.f32.gmra.mxu0 %v270
  %v291 = vpop.f32.mrf.mxu0
  %v292 = vadd.f32 0.0, %v291
  %293 = vdwg.mxu0
  %295 = vrot.lane.b32.xlu0 %v257, 96
  %v296 = vpop.permute.xlu0 %295
  %v297 = vsel %vm269, %v257, 0
  %v299 = vsel %vm269, %v296, 0
  %301 = vmatpush.xpose.msra.mxu0 0.0
  %302 = vmatpush.xpose.msra.mxu0 0.0
  %303 = vmatpush.xpose.msra.mxu0 0.0
  %304 = vmatpush.xpose.msra.mxu0 0.0
  %305 = vmatpush.xpose.msra.mxu0 0.0
  %306 = vmatpush.xpose.msra.mxu0 0.0
  %307 = vmatpush.xpose.msra.mxu0 0.0
  %308 = vmatpush.xpose.msra.mxu0 0.0
  %309 = vmatpush.xpose.msra.mxu0 0.0
  %310 = vmatpush.xpose.msra.mxu0 0.0
  %311 = vmatpush.xpose.msra.mxu0 0.0
  %312 = vmatpush.xpose.msra.mxu0 0.0
  %313 = vmatpush.xpose.msra.mxu0 0.0
  %314 = vmatpush.xpose.msra.mxu0 0.0
  %315 = vmatpush.xpose.msra.mxu0 0.0
  %316 = vmatpush.xpose.msra.mxu0 %v299
  %317 = vmatmul.f32.gmra.mxu0 %v297
  %v318 = vpop.f32.mrf.mxu0
  %v319 = vadd.f32 0.0, %v318
  %320 = vdwg.mxu0
  %v321 = vmul.f32 %v292, 0.25
  %v322 = vmul.f32 %v319, 0.25
  %v323 = vadd.f32 %v321, %v73
  %v324 = vadd.f32 %v322, %v74
  %v325 = vsel %vm151, %v323, -inf
  %326 = vmax.xlane.f32.xlu0 %v325
  %v327 = vpop.xlane.xlu0 %326
  %v328 = vsel %vm151, %v324, -inf
  %329 = vmax.xlane.f32.xlu0 %v328
  %v330 = vpop.xlane.xlu0 %329
  %v331 = vsub.f32 %v323, %v327
  %v332 = vsub.f32 %v324, %v330
  %v333 = vmul.f32 %v331, 1.442695
  %v334 = vpow.pop %v333
  %v335 = vmul.f32 %v332, 1.442695
  %v336 = vpow.pop %v335
  %v337 = vsel %vm151, %v334, 0.0
  %338 = vadd.xlane.f32.xlu0 %v337
  %v339 = vpop.xlane.xlu0 %338
  %v340 = vsel %vm151, %v336, 0.0
  %341 = vadd.xlane.f32.xlu0 %v340
  %v342 = vpop.xlane.xlu0 %341
  %v343 = vrcp.pop %v339
  %v344 = vrcp.pop %v342
  %v345 = vmul.f32 %v334, %v343
  %v346 = vmul.f32 %v336, %v344
  %347 = vrot.lane.b32.xlu0 %v254, 64
  %v348 = vpop.permute.xlu0 %347
  %v351 = vsel %vm151, %v345, 0
  %353 = vmatpush.msra.mxu0 0.0
  %354 = vmatpush.msra.mxu0 0.0
  %355 = vmatpush.msra.mxu0 0.0
  %356 = vmatpush.msra.mxu0 0.0
  %357 = vmatpush.msra.mxu0 0.0
  %358 = vmatpush.msra.mxu0 0.0
  %359 = vmatpush.msra.mxu0 0.0
  %360 = vmatpush.msra.mxu0 0.0
  %361 = vmatpush.msra.mxu0 0.0
  %362 = vmatpush.msra.mxu0 0.0
  %363 = vmatpush.msra.mxu0 0.0
  %364 = vmatpush.msra.mxu0 0.0
  %365 = vmatpush.msra.mxu0 0.0
  %366 = vmatpush.msra.mxu0 0.0
  %367 = vmatpush.msra.mxu0 0.0
  %368 = vmatpush.msra.mxu0 %v348
  %369 = vmatmul.f32.gmra.mxu0 %v351
  %v370 = vpop.f32.mrf.mxu0
  %v371 = vadd.f32 0.0, %v370
  %372 = vdwg.mxu0
  %373 = vrot.lane.b32.xlu0 %v257, 64
  %v374 = vpop.permute.xlu0 %373
  %v377 = vsel %vm151, %v346, 0
  %379 = vmatpush.msra.mxu0 0.0
  %380 = vmatpush.msra.mxu0 0.0
  %381 = vmatpush.msra.mxu0 0.0
  %382 = vmatpush.msra.mxu0 0.0
  %383 = vmatpush.msra.mxu0 0.0
  %384 = vmatpush.msra.mxu0 0.0
  %385 = vmatpush.msra.mxu0 0.0
  %386 = vmatpush.msra.mxu0 0.0
  %387 = vmatpush.msra.mxu0 0.0
  %388 = vmatpush.msra.mxu0 0.0
  %389 = vmatpush.msra.mxu0 0.0
  %390 = vmatpush.msra.mxu0 0.0
  %391 = vmatpush.msra.mxu0 0.0
  %392 = vmatpush.msra.mxu0 0.0
  %393 = vmatpush.msra.mxu0 0.0
  %394 = vmatpush.msra.mxu0 %v374
  %395 = vmatmul.f32.gmra.mxu0 %v377
  %v396 = vpop.f32.mrf.mxu0
  %v397 = vadd.f32 0.0, %v396
  %398 = vdwg.mxu0
  %399 = vrot.lane.b32.xlu0 %v254, 112
  %v400 = vpop.permute.xlu0 %399
  %401 = vrot.lane.b32.xlu0 %v254, 80
  %v402 = vpop.permute.xlu0 %401
  %v403 = vsel %vm269, %v400, 0
  %v405 = vsel %vm269, %v402, 0
  %407 = vmatpush.xpose.msra.mxu0 0.0
  %408 = vmatpush.xpose.msra.mxu0 0.0
  %409 = vmatpush.xpose.msra.mxu0 0.0
  %410 = vmatpush.xpose.msra.mxu0 0.0
  %411 = vmatpush.xpose.msra.mxu0 0.0
  %412 = vmatpush.xpose.msra.mxu0 0.0
  %413 = vmatpush.xpose.msra.mxu0 0.0
  %414 = vmatpush.xpose.msra.mxu0 0.0
  %415 = vmatpush.xpose.msra.mxu0 0.0
  %416 = vmatpush.xpose.msra.mxu0 0.0
  %417 = vmatpush.xpose.msra.mxu0 0.0
  %418 = vmatpush.xpose.msra.mxu0 0.0
  %419 = vmatpush.xpose.msra.mxu0 0.0
  %420 = vmatpush.xpose.msra.mxu0 0.0
  %421 = vmatpush.xpose.msra.mxu0 0.0
  %422 = vmatpush.xpose.msra.mxu0 %v405
  %423 = vmatmul.f32.gmra.mxu0 %v403
  %v424 = vpop.f32.mrf.mxu0
  %v425 = vadd.f32 0.0, %v424
  %426 = vdwg.mxu0
  %427 = vrot.lane.b32.xlu0 %v257, 112
  %v428 = vpop.permute.xlu0 %427
  %429 = vrot.lane.b32.xlu0 %v257, 80
  %v430 = vpop.permute.xlu0 %429
  %v431 = vsel %vm269, %v428, 0
  %v433 = vsel %vm269, %v430, 0
  %435 = vmatpush.xpose.msra.mxu0 0.0
  %436 = vmatpush.xpose.msra.mxu0 0.0
  %437 = vmatpush.xpose.msra.mxu0 0.0
  %438 = vmatpush.xpose.msra.mxu0 0.0
  %439 = vmatpush.xpose.msra.mxu0 0.0
  %440 = vmatpush.xpose.msra.mxu0 0.0
  %441 = vmatpush.xpose.msra.mxu0 0.0
  %442 = vmatpush.xpose.msra.mxu0 0.0
  %443 = vmatpush.xpose.msra.mxu0 0.0
  %444 = vmatpush.xpose.msra.mxu0 0.0
  %445 = vmatpush.xpose.msra.mxu0 0.0
  %446 = vmatpush.xpose.msra.mxu0 0.0
  %447 = vmatpush.xpose.msra.mxu0 0.0
  %448 = vmatpush.xpose.msra.mxu0 0.0
  %449 = vmatpush.xpose.msra.mxu0 0.0
  %450 = vmatpush.xpose.msra.mxu0 %v433
  %451 = vmatmul.f32.gmra.mxu0 %v431
  %v452 = vpop.f32.mrf.mxu0
  %v453 = vadd.f32 0.0, %v452
  %454 = vdwg.mxu0
  %v455 = vmul.f32 %v425, 0.25
  %v456 = vmul.f32 %v453, 0.25
  %v457 = vadd.f32 %v455, %v73
  %v458 = vadd.f32 %v456, %v74
  %v459 = vsel %vm151, %v457, -inf
  %460 = vmax.xlane.f32.xlu0 %v459
  %v461 = vpop.xlane.xlu0 %460
  %v462 = vsel %vm151, %v458, -inf
  %463 = vmax.xlane.f32.xlu0 %v462
  %v464 = vpop.xlane.xlu0 %463
  %v465 = vsub.f32 %v457, %v461
  %v466 = vsub.f32 %v458, %v464
  %v467 = vmul.f32 %v465, 1.442695
  %v468 = vpow.pop %v467
  %v469 = vmul.f32 %v466, 1.442695
  %v470 = vpow.pop %v469
  %v471 = vsel %vm151, %v468, 0.0
  %472 = vadd.xlane.f32.xlu0 %v471
  %v473 = vpop.xlane.xlu0 %472
  %v474 = vsel %vm151, %v470, 0.0
  %475 = vadd.xlane.f32.xlu0 %v474
  %v476 = vpop.xlane.xlu0 %475
  %v477 = vrcp.pop %v473
  %v478 = vrcp.pop %v476
  %v479 = vmul.f32 %v468, %v477
  %v480 = vmul.f32 %v470, %v478
  %481 = vrot.lane.b32.xlu0 %v254, 48
  %v482 = vpop.permute.xlu0 %481
  %v485 = vsel %vm151, %v479, 0
  %487 = vmatpush.msra.mxu0 0.0
  %488 = vmatpush.msra.mxu0 0.0
  %489 = vmatpush.msra.mxu0 0.0
  %490 = vmatpush.msra.mxu0 0.0
  %491 = vmatpush.msra.mxu0 0.0
  %492 = vmatpush.msra.mxu0 0.0
  %493 = vmatpush.msra.mxu0 0.0
  %494 = vmatpush.msra.mxu0 0.0
  %495 = vmatpush.msra.mxu0 0.0
  %496 = vmatpush.msra.mxu0 0.0
  %497 = vmatpush.msra.mxu0 0.0
  %498 = vmatpush.msra.mxu0 0.0
  %499 = vmatpush.msra.mxu0 0.0
  %500 = vmatpush.msra.mxu0 0.0
  %501 = vmatpush.msra.mxu0 0.0
  %502 = vmatpush.msra.mxu0 %v482
  %503 = vmatmul.f32.gmra.mxu0 %v485
  %v504 = vpop.f32.mrf.mxu0
  %v505 = vadd.f32 0.0, %v504
  %506 = vdwg.mxu0
  %507 = vrot.lane.b32.xlu0 %v257, 48
  %v508 = vpop.permute.xlu0 %507
  %v511 = vsel %vm151, %v480, 0
  %513 = vmatpush.msra.mxu0 0.0
  %514 = vmatpush.msra.mxu0 0.0
  %515 = vmatpush.msra.mxu0 0.0
  %516 = vmatpush.msra.mxu0 0.0
  %517 = vmatpush.msra.mxu0 0.0
  %518 = vmatpush.msra.mxu0 0.0
  %519 = vmatpush.msra.mxu0 0.0
  %520 = vmatpush.msra.mxu0 0.0
  %521 = vmatpush.msra.mxu0 0.0
  %522 = vmatpush.msra.mxu0 0.0
  %523 = vmatpush.msra.mxu0 0.0
  %524 = vmatpush.msra.mxu0 0.0
  %525 = vmatpush.msra.mxu0 0.0
  %526 = vmatpush.msra.mxu0 0.0
  %527 = vmatpush.msra.mxu0 0.0
  %528 = vmatpush.msra.mxu0 %v508
  %529 = vmatmul.f32.gmra.mxu0 %v511
  %v530 = vpop.f32.mrf.mxu0
  %v531 = vadd.f32 0.0, %v530
  %532 = vdwg.mxu0
  %v534 = vsel %vm269, %v505, 0
  %v537 = vsel %vm269, %v531, 0
  %539 = vmatpush.msra.mxu0 0.0
  %540 = vmatpush.msra.mxu0 0.0
  %541 = vmatpush.msra.mxu0 0.0
  %542 = vmatpush.msra.mxu0 0.0
  %543 = vmatpush.msra.mxu0 0.0
  %544 = vmatpush.msra.mxu0 0.0
  %545 = vmatpush.msra.mxu0 0.0
  %546 = vmatpush.msra.mxu0 0.0
  %547 = vmatpush.msra.mxu0 0.0
  %548 = vmatpush.msra.mxu0 0.0
  %549 = vmatpush.msra.mxu0 0.0
  %550 = vmatpush.msra.mxu0 0.0
  %551 = vmatpush.msra.mxu0 0.0
  %552 = vmatpush.msra.mxu0 0.0
  %553 = vmatpush.msra.mxu0 %v262
  %554 = vmatpush.msra.mxu0 %v261
  %555 = vmatmul.f32.gmra.mxu0 %v534
  %v556 = vpop.f32.mrf.mxu0
  %v557 = vadd.f32 0.0, %v556
  %558 = vmatmul.f32.gmra.mxu0 %v537
  %v559 = vpop.f32.mrf.mxu0
  %v560 = vadd.f32 0.0, %v559
  %561 = vdwg.mxu0
  %v563 = vsel %vm269, %v371, 0
  %v566 = vsel %vm269, %v397, 0
  %568 = vmatpush.msra.mxu0 0.0
  %569 = vmatpush.msra.mxu0 0.0
  %570 = vmatpush.msra.mxu0 0.0
  %571 = vmatpush.msra.mxu0 0.0
  %572 = vmatpush.msra.mxu0 0.0
  %573 = vmatpush.msra.mxu0 0.0
  %574 = vmatpush.msra.mxu0 0.0
  %575 = vmatpush.msra.mxu0 0.0
  %576 = vmatpush.msra.mxu0 0.0
  %577 = vmatpush.msra.mxu0 0.0
  %578 = vmatpush.msra.mxu0 0.0
  %579 = vmatpush.msra.mxu0 0.0
  %580 = vmatpush.msra.mxu0 0.0
  %581 = vmatpush.msra.mxu0 0.0
  %582 = vmatpush.msra.mxu0 %v260
  %583 = vmatpush.msra.mxu0 %v259
  %584 = vmatmul.f32.gmra.mxu0 %v563
  %v585 = vpop.f32.mrf.mxu0
  %v586 = vadd.f32 %v557, %v585
  %587 = vmatmul.f32.gmra.mxu0 %v566
  %v588 = vpop.f32.mrf.mxu0
  %v589 = vadd.f32 %v560, %v588
  %590 = vdwg.mxu0
  %v592 = vperm.slane %v263, 0
  %v594 = vadd.f32 %v586, %v592
  %v595 = vadd.f32 %v589, %v592
  %v596 = vadd.f32 %v594, %v220
  %v597 = vadd.f32 %v595, %v221
  %v598 = vsel %vm184, %v596, 0.0
  %599 = vadd.xlane.f32.xlu0 %v598
  %v600 = vpop.xlane.xlu0 %599
  %v601 = vsel %vm184, %v597, 0.0
  %602 = vadd.xlane.f32.xlu0 %v601
  %v603 = vpop.xlane.xlu0 %602
  %v604 = vrcp.pop 32.0
  %v605 = vmul.f32 32.0, %v604
  %v606 = vsub.f32 1.0, %v605
  %v607 = vmul.f32 %v604, %v606
  %v608 = vadd.f32 %v604, %v607
  %vm609 = vweird.f32 %v604
  %v610 = vsel %vm609, %v604, %v608
  %v611 = vmul.f32 %v600, %v610
  %v612 = vmul.f32 %v603, %v610
  %v613 = vsub.f32 %v596, %v611
  %v614 = vsub.f32 %v597, %v612
  %v615 = vmul.f32 %v613, %v613
  %v616 = vmul.f32 %v614, %v614
  %v617 = vsel %vm184, %v615, 0.0
  %618 = vadd.xlane.f32.xlu0 %v617
  %v619 = vpop.xlane.xlu0 %618
  %v620 = vsel %vm184, %v616, 0.0
  %621 = vadd.xlane.f32.xlu0 %v620
  %v622 = vpop.xlane.xlu0 %621
  %v623 = vmul.f32 %v619, %v610
  %v624 = vmul.f32 %v622, %v610
  %v625 = vadd.f32 %v623, 1e-05
  %v626 = vadd.f32 %v624, 1e-05
  %v627 = vrsqrt.pop %v625
  %v628 = vmul.f32 %v627, %v625
  %v629 = vmul.f32 %v628, %v627
  %v630 = vmul.f32 0.5, %v629
  %v631 = vsub.f32 1.5, %v630
  %v632 = vmul.f32 %v627, %v631
  %vm633 = vweird.f32 %v625
  %vm634 = vweird.f32 %v627
  %vm635 = vmor %vm633, %vm634
  %v636 = vsel %vm635, %v627, %v632
  %v637 = vrsqrt.pop %v626
  %v638 = vmul.f32 %v637, %v626
  %v639 = vmul.f32 %v638, %v637
  %v640 = vmul.f32 0.5, %v639
  %v641 = vsub.f32 1.5, %v640
  %v642 = vmul.f32 %v637, %v641
  %vm643 = vweird.f32 %v626
  %vm644 = vweird.f32 %v637
  %vm645 = vmor %vm643, %vm644
  %v646 = vsel %vm645, %v637, %v642
  %v647 = vmul.f32 %v613, %v636
  %v648 = vmul.f32 %v614, %v646
  %v650 = vperm.slane %v264, 0
  %v652 = vmul.f32 %v647, %v650
  %v653 = vmul.f32 %v648, %v650
  %v655 = vperm.slane %v265, 0
  %v657 = vadd.f32 %v652, %v655
  %v658 = vadd.f32 %v653, %v655
  %v659 = vld [vmem:[%s16] sm:$0xff]
  %v660 = vld [vmem:[%s16 + $0x8] sm:$0xff]
  %v661 = vld [vmem:[%s16 + $0x10] sm:$0xff]
  %v662 = vld [vmem:[%s16 + $0x18] sm:$0xff]
  %v663 = vld [vmem:[%s17] sm:$0x1]
  %v664 = vld [vmem:[%s18] sm:$0xff]
  %v665 = vld [vmem:[%s18 + $0x8] sm:$0xff]
  %v666 = vld [vmem:[%s18 + $0x10] sm:$0xff]
  %v667 = vld [vmem:[%s18 + $0x18] sm:$0xff]
  %v668 = vld [vmem:[%s18 + $0x20] sm:$0xff]
  %v669 = vld [vmem:[%s18 + $0x28] sm:$0xff]
  %v670 = vld [vmem:[%s18 + $0x30] sm:$0xff]
  %v671 = vld [vmem:[%s18 + $0x38] sm:$0xff]
  %v672 = vld [vmem:[%s19] sm:$0x1]
  %v673 = vld [vmem:[%s20] sm:$0x1]
  %v674 = vld [vmem:[%s21] sm:$0x1]
  %v676 = vperm.slane %v663, 0
  %v679 = vsel %vm184, %v657, 0
  %v682 = vsel %vm184, %v658, 0
  %684 = vmatpush.msra.mxu0 0.0
  %685 = vmatpush.msra.mxu0 0.0
  %686 = vmatpush.msra.mxu0 0.0
  %687 = vmatpush.msra.mxu0 0.0
  %688 = vmatpush.msra.mxu0 0.0
  %689 = vmatpush.msra.mxu0 0.0
  %690 = vmatpush.msra.mxu0 0.0
  %691 = vmatpush.msra.mxu0 0.0
  %692 = vmatpush.msra.mxu0 0.0
  %693 = vmatpush.msra.mxu0 0.0
  %694 = vmatpush.msra.mxu0 0.0
  %695 = vmatpush.msra.mxu0 0.0
  %696 = vmatpush.msra.mxu0 %v662
  %697 = vmatpush.msra.mxu0 %v661
  %698 = vmatpush.msra.mxu0 %v660
  %699 = vmatpush.msra.mxu0 %v659
  %700 = vmatmul.f32.gmra.mxu0 %v679
  %v701 = vpop.f32.mrf.mxu0
  %v702 = vadd.f32 %v676, %v701
  %703 = vmatmul.f32.gmra.mxu0 %v682
  %v704 = vpop.f32.mrf.mxu0
  %v705 = vadd.f32 %v676, %v704
  %706 = vdwg.mxu0
  %v707 = vmul.f32 %v702, 0.5
  %v708 = vmul.f32 %v705, 0.5
  %v709 = vmul.f32 %v702, 0.044715
  %v710 = vmul.f32 %v705, 0.044715
  %v711 = vmul.f32 %v709, %v702
  %v712 = vmul.f32 %v710, %v705
  %v713 = vmul.f32 %v711, %v702
  %v714 = vmul.f32 %v712, %v705
  %v715 = vadd.f32 %v702, %v713
  %v716 = vadd.f32 %v705, %v714
  %v717 = vmul.f32 %v715, 0.7978846
  %v718 = vmul.f32 %v716, 0.7978846
  %v719 = vtanh.pop %v717
  %v720 = vtanh.pop %v718
  %v721 = vadd.f32 %v719, 1.0
  %v722 = vadd.f32 %v720, 1.0
  %v723 = vmul.f32 %v707, %v721
  %v724 = vmul.f32 %v708, %v722
  %v726 = vperm.slane %v672, 0
  %vm728 = vcmask 523264
  %v730 = vsel %vm728, %v723, 0
  %v733 = vsel %vm728, %v724, 0
  %735 = vmatpush.msra.mxu0 0.0
  %736 = vmatpush.msra.mxu0 0.0
  %737 = vmatpush.msra.mxu0 0.0
  %738 = vmatpush.msra.mxu0 0.0
  %739 = vmatpush.msra.mxu0 0.0
  %740 = vmatpush.msra.mxu0 0.0
  %741 = vmatpush.msra.mxu0 0.0
  %742 = vmatpush.msra.mxu0 0.0
  %743 = vmatpush.msra.mxu0 %v671
  %744 = vmatpush.msra.mxu0 %v670
  %745 = vmatpush.msra.mxu0 %v669
  %746 = vmatpush.msra.mxu0 %v668
  %747 = vmatpush.msra.mxu0 %v667
  %748 = vmatpush.msra.mxu0 %v666
  %749 = vmatpush.msra.mxu0 %v665
  %750 = vmatpush.msra.mxu0 %v664
  %751 = vmatmul.f32.gmra.mxu0 %v730
  %v752 = vpop.f32.mrf.mxu0
  %v753 = vadd.f32 %v726, %v752
  %754 = vmatmul.f32.gmra.mxu0 %v733
  %v755 = vpop.f32.mrf.mxu0
  %v756 = vadd.f32 %v726, %v755
  %757 = vdwg.mxu0
  %v758 = vadd.f32 %v753, %v657
  %v759 = vadd.f32 %v756, %v658
  %v760 = vsel %vm184, %v758, 0.0
  %761 = vadd.xlane.f32.xlu0 %v760
  %v762 = vpop.xlane.xlu0 %761
  %v763 = vsel %vm184, %v759, 0.0
  %764 = vadd.xlane.f32.xlu0 %v763
  %v765 = vpop.xlane.xlu0 %764
  %v766 = vmul.f32 %v762, %v610
  %v767 = vmul.f32 %v765, %v610
  %v768 = vsub.f32 %v758, %v766
  %v769 = vsub.f32 %v759, %v767
  %v770 = vmul.f32 %v768, %v768
  %v771 = vmul.f32 %v769, %v769
  %v772 = vsel %vm184, %v770, 0.0
  %773 = vadd.xlane.f32.xlu0 %v772
  %v774 = vpop.xlane.xlu0 %773
  %v775 = vsel %vm184, %v771, 0.0
  %776 = vadd.xlane.f32.xlu0 %v775
  %v777 = vpop.xlane.xlu0 %776
  %v778 = vmul.f32 %v774, %v610
  %v779 = vmul.f32 %v777, %v610
  %v780 = vadd.f32 %v778, 1e-05
  %v781 = vadd.f32 %v779, 1e-05
  %v782 = vrsqrt.pop %v780
  %v783 = vmul.f32 %v782, %v780
  %v784 = vmul.f32 %v783, %v782
  %v785 = vmul.f32 0.5, %v784
  %v786 = vsub.f32 1.5, %v785
  %v787 = vmul.f32 %v782, %v786
  %vm788 = vweird.f32 %v780
  %vm789 = vweird.f32 %v782
  %vm790 = vmor %vm788, %vm789
  %v791 = vsel %vm790, %v782, %v787
  %v792 = vrsqrt.pop %v781
  %v793 = vmul.f32 %v792, %v781
  %v794 = vmul.f32 %v793, %v792
  %v795 = vmul.f32 0.5, %v794
  %v796 = vsub.f32 1.5, %v795
  %v797 = vmul.f32 %v792, %v796
  %vm798 = vweird.f32 %v781
  %vm799 = vweird.f32 %v792
  %vm800 = vmor %vm798, %vm799
  %v801 = vsel %vm800, %v792, %v797
  %v802 = vmul.f32 %v768, %v791
  %v803 = vmul.f32 %v769, %v801
  %v805 = vperm.slane %v673, 0
  %v807 = vmul.f32 %v802, %v805
  %v808 = vmul.f32 %v803, %v805
  %v810 = vperm.slane %v674, 0
  %v812 = vadd.f32 %v807, %v810
  %v813 = vadd.f32 %v808, %v810
  %s814 = scalar_lea.vmem %s10, 32
  %v815 = vld [vmem:[%s814] sm:$0xff]
  %v816 = vld [vmem:[%s814 + $0x8] sm:$0xff]
  %v817 = vld [vmem:[%s814 + $0x10] sm:$0xff]
  %v818 = vld [vmem:[%s814 + $0x18] sm:$0xff]
  %s819 = scalar_lea.vmem %s11, 1
  %v820 = vld [vmem:[%s819] sm:$0x1]
  %v822 = vperm.slane %v820, 0
  %v825 = vsel %vm184, %v812, 0
  %v828 = vsel %vm184, %v813, 0
  %830 = vmatpush.msra.mxu0 0.0
  %831 = vmatpush.msra.mxu0 0.0
  %832 = vmatpush.msra.mxu0 0.0
  %833 = vmatpush.msra.mxu0 0.0
  %834 = vmatpush.msra.mxu0 0.0
  %835 = vmatpush.msra.mxu0 0.0
  %836 = vmatpush.msra.mxu0 0.0
  %837 = vmatpush.msra.mxu0 0.0
  %838 = vmatpush.msra.mxu0 0.0
  %839 = vmatpush.msra.mxu0 0.0
  %840 = vmatpush.msra.mxu0 0.0
  %841 = vmatpush.msra.mxu0 0.0
  %842 = vmatpush.msra.mxu0 %v818
  %843 = vmatpush.msra.mxu0 %v817
  %844 = vmatpush.msra.mxu0 %v816
  %845 = vmatpush.msra.mxu0 %v815
  %846 = vmatmul.f32.gmra.mxu0 %v825
  %v847 = vpop.f32.mrf.mxu0
  %v848 = vadd.f32 %v822, %v847
  %849 = vmatmul.f32.gmra.mxu0 %v828
  %v850 = vpop.f32.mrf.mxu0
  %v851 = vadd.f32 %v822, %v850
  %852 = vdwg.mxu0
  %s853 = scalar_lea.vmem %s12, 32
  %v854 = vld [vmem:[%s853] sm:$0xff]
  %v855 = vld [vmem:[%s853 + $0x8] sm:$0xff]
  %v856 = vld [vmem:[%s853 + $0x10] sm:$0xff]
  %v857 = vld [vmem:[%s853 + $0x18] sm:$0xff]
  %s858 = scalar_lea.vmem %s13, 1
  %v859 = vld [vmem:[%s858] sm:$0x1]
  %s860 = scalar_lea.vmem %s14, 1
  %v861 = vld [vmem:[%s860] sm:$0x1]
  %s862 = scalar_lea.vmem %s15, 1
  %v863 = vld [vmem:[%s862] sm:$0x1]
  %865 = vrot.lane.b32.xlu0 %v848, 96
  %v866 = vpop.permute.xlu0 %865
  %v867 = vsel %vm269, %v848, 0
  %v869 = vsel %vm269, %v866, 0
  %871 = vmatpush.xpose.msra.mxu0 0.0
  %872 = vmatpush.xpose.msra.mxu0 0.0
  %873 = vmatpush.xpose.msra.mxu0 0.0
  %874 = vmatpush.xpose.msra.mxu0 0.0
  %875 = vmatpush.xpose.msra.mxu0 0.0
  %876 = vmatpush.xpose.msra.mxu0 0.0
  %877 = vmatpush.xpose.msra.mxu0 0.0
  %878 = vmatpush.xpose.msra.mxu0 0.0
  %879 = vmatpush.xpose.msra.mxu0 0.0
  %880 = vmatpush.xpose.msra.mxu0 0.0
  %881 = vmatpush.xpose.msra.mxu0 0.0
  %882 = vmatpush.xpose.msra.mxu0 0.0
  %883 = vmatpush.xpose.msra.mxu0 0.0
  %884 = vmatpush.xpose.msra.mxu0 0.0
  %885 = vmatpush.xpose.msra.mxu0 0.0
  %886 = vmatpush.xpose.msra.mxu0 %v869
  %887 = vmatmul.f32.gmra.mxu0 %v867
  %v888 = vpop.f32.mrf.mxu0
  %v889 = vadd.f32 0.0, %v888
  %890 = vdwg.mxu0
  %892 = vrot.lane.b32.xlu0 %v851, 96
  %v893 = vpop.permute.xlu0 %892
  %v894 = vsel %vm269, %v851, 0
  %v896 = vsel %vm269, %v893, 0
  %898 = vmatpush.xpose.msra.mxu0 0.0
  %899 = vmatpush.xpose.msra.mxu0 0.0
  %900 = vmatpush.xpose.msra.mxu0 0.0
  %901 = vmatpush.xpose.msra.mxu0 0.0
  %902 = vmatpush.xpose.msra.mxu0 0.0
  %903 = vmatpush.xpose.msra.mxu0 0.0
  %904 = vmatpush.xpose.msra.mxu0 0.0
  %905 = vmatpush.xpose.msra.mxu0 0.0
  %906 = vmatpush.xpose.msra.mxu0 0.0
  %907 = vmatpush.xpose.msra.mxu0 0.0
  %908 = vmatpush.xpose.msra.mxu0 0.0
  %909 = vmatpush.xpose.msra.mxu0 0.0
  %910 = vmatpush.xpose.msra.mxu0 0.0
  %911 = vmatpush.xpose.msra.mxu0 0.0
  %912 = vmatpush.xpose.msra.mxu0 0.0
  %913 = vmatpush.xpose.msra.mxu0 %v896
  %914 = vmatmul.f32.gmra.mxu0 %v894
  %v915 = vpop.f32.mrf.mxu0
  %v916 = vadd.f32 0.0, %v915
  %917 = vdwg.mxu0
  %v918 = vmul.f32 %v889, 0.25
  %v919 = vmul.f32 %v916, 0.25
  %v920 = vadd.f32 %v918, %v73
  %v921 = vadd.f32 %v919, %v74
  %v922 = vsel %vm151, %v920, -inf
  %923 = vmax.xlane.f32.xlu0 %v922
  %v924 = vpop.xlane.xlu0 %923
  %v925 = vsel %vm151, %v921, -inf
  %926 = vmax.xlane.f32.xlu0 %v925
  %v927 = vpop.xlane.xlu0 %926
  %v928 = vsub.f32 %v920, %v924
  %v929 = vsub.f32 %v921, %v927
  %v930 = vmul.f32 %v928, 1.442695
  %v931 = vpow.pop %v930
  %v932 = vmul.f32 %v929, 1.442695
  %v933 = vpow.pop %v932
  %v934 = vsel %vm151, %v931, 0.0
  %935 = vadd.xlane.f32.xlu0 %v934
  %v936 = vpop.xlane.xlu0 %935
  %v937 = vsel %vm151, %v933, 0.0
  %938 = vadd.xlane.f32.xlu0 %v937
  %v939 = vpop.xlane.xlu0 %938
  %v940 = vrcp.pop %v936
  %v941 = vrcp.pop %v939
  %v942 = vmul.f32 %v931, %v940
  %v943 = vmul.f32 %v933, %v941
  %944 = vrot.lane.b32.xlu0 %v848, 64
  %v945 = vpop.permute.xlu0 %944
  %v948 = vsel %vm151, %v942, 0
  %950 = vmatpush.msra.mxu0 0.0
  %951 = vmatpush.msra.mxu0 0.0
  %952 = vmatpush.msra.mxu0 0.0
  %953 = vmatpush.msra.mxu0 0.0
  %954 = vmatpush.msra.mxu0 0.0
  %955 = vmatpush.msra.mxu0 0.0
  %956 = vmatpush.msra.mxu0 0.0
  %957 = vmatpush.msra.mxu0 0.0
  %958 = vmatpush.msra.mxu0 0.0
  %959 = vmatpush.msra.mxu0 0.0
  %960 = vmatpush.msra.mxu0 0.0
  %961 = vmatpush.msra.mxu0 0.0
  %962 = vmatpush.msra.mxu0 0.0
  %963 = vmatpush.msra.mxu0 0.0
  %964 = vmatpush.msra.mxu0 0.0
  %965 = vmatpush.msra.mxu0 %v945
  %966 = vmatmul.f32.gmra.mxu0 %v948
  %v967 = vpop.f32.mrf.mxu0
  %v968 = vadd.f32 0.0, %v967
  %969 = vdwg.mxu0
  %970 = vrot.lane.b32.xlu0 %v851, 64
  %v971 = vpop.permute.xlu0 %970
  %v974 = vsel %vm151, %v943, 0
  %976 = vmatpush.msra.mxu0 0.0
  %977 = vmatpush.msra.mxu0 0.0
  %978 = vmatpush.msra.mxu0 0.0
  %979 = vmatpush.msra.mxu0 0.0
  %980 = vmatpush.msra.mxu0 0.0
  %981 = vmatpush.msra.mxu0 0.0
  %982 = vmatpush.msra.mxu0 0.0
  %983 = vmatpush.msra.mxu0 0.0
  %984 = vmatpush.msra.mxu0 0.0
  %985 = vmatpush.msra.mxu0 0.0
  %986 = vmatpush.msra.mxu0 0.0
  %987 = vmatpush.msra.mxu0 0.0
  %988 = vmatpush.msra.mxu0 0.0
  %989 = vmatpush.msra.mxu0 0.0
  %990 = vmatpush.msra.mxu0 0.0
  %991 = vmatpush.msra.mxu0 %v971
  %992 = vmatmul.f32.gmra.mxu0 %v974
  %v993 = vpop.f32.mrf.mxu0
  %v994 = vadd.f32 0.0, %v993
  %995 = vdwg.mxu0
  %996 = vrot.lane.b32.xlu0 %v848, 112
  %v997 = vpop.permute.xlu0 %996
  %998 = vrot.lane.b32.xlu0 %v848, 80
  %v999 = vpop.permute.xlu0 %998
  %v1000 = vsel %vm269, %v997, 0
  %v1002 = vsel %vm269, %v999, 0
  %1004 = vmatpush.xpose.msra.mxu0 0.0
  %1005 = vmatpush.xpose.msra.mxu0 0.0
  %1006 = vmatpush.xpose.msra.mxu0 0.0
  %1007 = vmatpush.xpose.msra.mxu0 0.0
  %1008 = vmatpush.xpose.msra.mxu0 0.0
  %1009 = vmatpush.xpose.msra.mxu0 0.0
  %1010 = vmatpush.xpose.msra.mxu0 0.0
  %1011 = vmatpush.xpose.msra.mxu0 0.0
  %1012 = vmatpush.xpose.msra.mxu0 0.0
  %1013 = vmatpush.xpose.msra.mxu0 0.0
  %1014 = vmatpush.xpose.msra.mxu0 0.0
  %1015 = vmatpush.xpose.msra.mxu0 0.0
  %1016 = vmatpush.xpose.msra.mxu0 0.0
  %1017 = vmatpush.xpose.msra.mxu0 0.0
  %1018 = vmatpush.xpose.msra.mxu0 0.0
  %1019 = vmatpush.xpose.msra.mxu0 %v1002
  %1020 = vmatmul.f32.gmra.mxu0 %v1000
  %v1021 = vpop.f32.mrf.mxu0
  %v1022 = vadd.f32 0.0, %v1021
  %1023 = vdwg.mxu0
  %1024 = vrot.lane.b32.xlu0 %v851, 112
  %v1025 = vpop.permute.xlu0 %1024
  %1026 = vrot.lane.b32.xlu0 %v851, 80
  %v1027 = vpop.permute.xlu0 %1026
  %v1028 = vsel %vm269, %v1025, 0
  %v1030 = vsel %vm269, %v1027, 0
  %1032 = vmatpush.xpose.msra.mxu0 0.0
  %1033 = vmatpush.xpose.msra.mxu0 0.0
  %1034 = vmatpush.xpose.msra.mxu0 0.0
  %1035 = vmatpush.xpose.msra.mxu0 0.0
  %1036 = vmatpush.xpose.msra.mxu0 0.0
  %1037 = vmatpush.xpose.msra.mxu0 0.0
  %1038 = vmatpush.xpose.msra.mxu0 0.0
  %1039 = vmatpush.xpose.msra.mxu0 0.0
  %1040 = vmatpush.xpose.msra.mxu0 0.0
  %1041 = vmatpush.xpose.msra.mxu0 0.0
  %1042 = vmatpush.xpose.msra.mxu0 0.0
  %1043 = vmatpush.xpose.msra.mxu0 0.0
  %1044 = vmatpush.xpose.msra.mxu0 0.0
  %1045 = vmatpush.xpose.msra.mxu0 0.0
  %1046 = vmatpush.xpose.msra.mxu0 0.0
  %1047 = vmatpush.xpose.msra.mxu0 %v1030
  %1048 = vmatmul.f32.gmra.mxu0 %v1028
  %v1049 = vpop.f32.mrf.mxu0
  %v1050 = vadd.f32 0.0, %v1049
  %1051 = vdwg.mxu0
  %v1052 = vmul.f32 %v1022, 0.25
  %v1053 = vmul.f32 %v1050, 0.25
  %v1054 = vadd.f32 %v1052, %v73
  %v1055 = vadd.f32 %v1053, %v74
  %v1056 = vsel %vm151, %v1054, -inf
  %1057 = vmax.xlane.f32.xlu0 %v1056
  %v1058 = vpop.xlane.xlu0 %1057
  %v1059 = vsel %vm151, %v1055, -inf
  %1060 = vmax.xlane.f32.xlu0 %v1059
  %v1061 = vpop.xlane.xlu0 %1060
  %v1062 = vsub.f32 %v1054, %v1058
  %v1063 = vsub.f32 %v1055, %v1061
  %v1064 = vmul.f32 %v1062, 1.442695
  %v1065 = vpow.pop %v1064
  %v1066 = vmul.f32 %v1063, 1.442695
  %v1067 = vpow.pop %v1066
  %v1068 = vsel %vm151, %v1065, 0.0
  %1069 = vadd.xlane.f32.xlu0 %v1068
  %v1070 = vpop.xlane.xlu0 %1069
  %v1071 = vsel %vm151, %v1067, 0.0
  %1072 = vadd.xlane.f32.xlu0 %v1071
  %v1073 = vpop.xlane.xlu0 %1072
  %v1074 = vrcp.pop %v1070
  %v1075 = vrcp.pop %v1073
  %v1076 = vmul.f32 %v1065, %v1074
  %v1077 = vmul.f32 %v1067, %v1075
  %1078 = vrot.lane.b32.xlu0 %v848, 48
  %v1079 = vpop.permute.xlu0 %1078
  %v1082 = vsel %vm151, %v1076, 0
  %1084 = vmatpush.msra.mxu0 0.0
  %1085 = vmatpush.msra.mxu0 0.0
  %1086 = vmatpush.msra.mxu0 0.0
  %1087 = vmatpush.msra.mxu0 0.0
  %1088 = vmatpush.msra.mxu0 0.0
  %1089 = vmatpush.msra.mxu0 0.0
  %1090 = vmatpush.msra.mxu0 0.0
  %1091 = vmatpush.msra.mxu0 0.0
  %1092 = vmatpush.msra.mxu0 0.0
  %1093 = vmatpush.msra.mxu0 0.0
  %1094 = vmatpush.msra.mxu0 0.0
  %1095 = vmatpush.msra.mxu0 0.0
  %1096 = vmatpush.msra.mxu0 0.0
  %1097 = vmatpush.msra.mxu0 0.0
  %1098 = vmatpush.msra.mxu0 0.0
  %1099 = vmatpush.msra.mxu0 %v1079
  %1100 = vmatmul.f32.gmra.mxu0 %v1082
  %v1101 = vpop.f32.mrf.mxu0
  %v1102 = vadd.f32 0.0, %v1101
  %1103 = vdwg.mxu0
  %1104 = vrot.lane.b32.xlu0 %v851, 48
  %v1105 = vpop.permute.xlu0 %1104
  %v1108 = vsel %vm151, %v1077, 0
  %1110 = vmatpush.msra.mxu0 0.0
  %1111 = vmatpush.msra.mxu0 0.0
  %1112 = vmatpush.msra.mxu0 0.0
  %1113 = vmatpush.msra.mxu0 0.0
  %1114 = vmatpush.msra.mxu0 0.0
  %1115 = vmatpush.msra.mxu0 0.0
  %1116 = vmatpush.msra.mxu0 0.0
  %1117 = vmatpush.msra.mxu0 0.0
  %1118 = vmatpush.msra.mxu0 0.0
  %1119 = vmatpush.msra.mxu0 0.0
  %1120 = vmatpush.msra.mxu0 0.0
  %1121 = vmatpush.msra.mxu0 0.0
  %1122 = vmatpush.msra.mxu0 0.0
  %1123 = vmatpush.msra.mxu0 0.0
  %1124 = vmatpush.msra.mxu0 0.0
  %1125 = vmatpush.msra.mxu0 %v1105
  %1126 = vmatmul.f32.gmra.mxu0 %v1108
  %v1127 = vpop.f32.mrf.mxu0
  %v1128 = vadd.f32 0.0, %v1127
  %1129 = vdwg.mxu0
  %v1131 = vsel %vm269, %v1102, 0
  %v1134 = vsel %vm269, %v1128, 0
  %1136 = vmatpush.msra.mxu0 0.0
  %1137 = vmatpush.msra.mxu0 0.0
  %1138 = vmatpush.msra.mxu0 0.0
  %1139 = vmatpush.msra.mxu0 0.0
  %1140 = vmatpush.msra.mxu0 0.0
  %1141 = vmatpush.msra.mxu0 0.0
  %1142 = vmatpush.msra.mxu0 0.0
  %1143 = vmatpush.msra.mxu0 0.0
  %1144 = vmatpush.msra.mxu0 0.0
  %1145 = vmatpush.msra.mxu0 0.0
  %1146 = vmatpush.msra.mxu0 0.0
  %1147 = vmatpush.msra.mxu0 0.0
  %1148 = vmatpush.msra.mxu0 0.0
  %1149 = vmatpush.msra.mxu0 0.0
  %1150 = vmatpush.msra.mxu0 %v857
  %1151 = vmatpush.msra.mxu0 %v856
  %1152 = vmatmul.f32.gmra.mxu0 %v1131
  %v1153 = vpop.f32.mrf.mxu0
  %v1154 = vadd.f32 0.0, %v1153
  %1155 = vmatmul.f32.gmra.mxu0 %v1134
  %v1156 = vpop.f32.mrf.mxu0
  %v1157 = vadd.f32 0.0, %v1156
  %1158 = vdwg.mxu0
  %v1160 = vsel %vm269, %v968, 0
  %v1163 = vsel %vm269, %v994, 0
  %1165 = vmatpush.msra.mxu0 0.0
  %1166 = vmatpush.msra.mxu0 0.0
  %1167 = vmatpush.msra.mxu0 0.0
  %1168 = vmatpush.msra.mxu0 0.0
  %1169 = vmatpush.msra.mxu0 0.0
  %1170 = vmatpush.msra.mxu0 0.0
  %1171 = vmatpush.msra.mxu0 0.0
  %1172 = vmatpush.msra.mxu0 0.0
  %1173 = vmatpush.msra.mxu0 0.0
  %1174 = vmatpush.msra.mxu0 0.0
  %1175 = vmatpush.msra.mxu0 0.0
  %1176 = vmatpush.msra.mxu0 0.0
  %1177 = vmatpush.msra.mxu0 0.0
  %1178 = vmatpush.msra.mxu0 0.0
  %1179 = vmatpush.msra.mxu0 %v855
  %1180 = vmatpush.msra.mxu0 %v854
  %1181 = vmatmul.f32.gmra.mxu0 %v1160
  %v1182 = vpop.f32.mrf.mxu0
  %v1183 = vadd.f32 %v1154, %v1182
  %1184 = vmatmul.f32.gmra.mxu0 %v1163
  %v1185 = vpop.f32.mrf.mxu0
  %v1186 = vadd.f32 %v1157, %v1185
  %1187 = vdwg.mxu0
  %v1189 = vperm.slane %v859, 0
  %v1191 = vadd.f32 %v1183, %v1189
  %v1192 = vadd.f32 %v1186, %v1189
  %v1193 = vadd.f32 %v1191, %v812
  %v1194 = vadd.f32 %v1192, %v813
  %v1195 = vsel %vm184, %v1193, 0.0
  %1196 = vadd.xlane.f32.xlu0 %v1195
  %v1197 = vpop.xlane.xlu0 %1196
  %v1198 = vsel %vm184, %v1194, 0.0
  %1199 = vadd.xlane.f32.xlu0 %v1198
  %v1200 = vpop.xlane.xlu0 %1199
  %v1201 = vmul.f32 %v1197, %v610
  %v1202 = vmul.f32 %v1200, %v610
  %v1203 = vsub.f32 %v1193, %v1201
  %v1204 = vsub.f32 %v1194, %v1202
  %v1205 = vmul.f32 %v1203, %v1203
  %v1206 = vmul.f32 %v1204, %v1204
  %v1207 = vsel %vm184, %v1205, 0.0
  %1208 = vadd.xlane.f32.xlu0 %v1207
  %v1209 = vpop.xlane.xlu0 %1208
  %v1210 = vsel %vm184, %v1206, 0.0
  %1211 = vadd.xlane.f32.xlu0 %v1210
  %v1212 = vpop.xlane.xlu0 %1211
  %v1213 = vmul.f32 %v1209, %v610
  %v1214 = vmul.f32 %v1212, %v610
  %v1215 = vadd.f32 %v1213, 1e-05
  %v1216 = vadd.f32 %v1214, 1e-05
  %v1217 = vrsqrt.pop %v1215
  %v1218 = vmul.f32 %v1217, %v1215
  %v1219 = vmul.f32 %v1218, %v1217
  %v1220 = vmul.f32 0.5, %v1219
  %v1221 = vsub.f32 1.5, %v1220
  %v1222 = vmul.f32 %v1217, %v1221
  %vm1223 = vweird.f32 %v1215
  %vm1224 = vweird.f32 %v1217
  %vm1225 = vmor %vm1223, %vm1224
  %v1226 = vsel %vm1225, %v1217, %v1222
  %v1227 = vrsqrt.pop %v1216
  %v1228 = vmul.f32 %v1227, %v1216
  %v1229 = vmul.f32 %v1228, %v1227
  %v1230 = vmul.f32 0.5, %v1229
  %v1231 = vsub.f32 1.5, %v1230
  %v1232 = vmul.f32 %v1227, %v1231
  %vm1233 = vweird.f32 %v1216
  %vm1234 = vweird.f32 %v1227
  %vm1235 = vmor %vm1233, %vm1234
  %v1236 = vsel %vm1235, %v1227, %v1232
  %v1237 = vmul.f32 %v1203, %v1226
  %v1238 = vmul.f32 %v1204, %v1236
  %v1240 = vperm.slane %v861, 0
  %v1242 = vmul.f32 %v1237, %v1240
  %v1243 = vmul.f32 %v1238, %v1240
  %v1245 = vperm.slane %v863, 0
  %v1247 = vadd.f32 %v1242, %v1245
  %v1248 = vadd.f32 %v1243, %v1245
  %s1249 = scalar_lea.vmem %s16, 32
  %v1250 = vld [vmem:[%s1249] sm:$0xff]
  %v1251 = vld [vmem:[%s1249 + $0x8] sm:$0xff]
  %v1252 = vld [vmem:[%s1249 + $0x10] sm:$0xff]
  %v1253 = vld [vmem:[%s1249 + $0x18] sm:$0xff]
  %s1254 = scalar_lea.vmem %s17, 1
  %v1255 = vld [vmem:[%s1254] sm:$0x1]
  %s1256 = scalar_lea.vmem %s18, 64
  %v1257 = vld [vmem:[%s1256] sm:$0xff]
  %v1258 = vld [vmem:[%s1256 + $0x8] sm:$0xff]
  %v1259 = vld [vmem:[%s1256 + $0x10] sm:$0xff]
  %v1260 = vld [vmem:[%s1256 + $0x18] sm:$0xff]
  %v1261 = vld [vmem:[%s1256 + $0x20] sm:$0xff]
  %v1262 = vld [vmem:[%s1256 + $0x28] sm:$0xff]
  %v1263 = vld [vmem:[%s1256 + $0x30] sm:$0xff]
  %v1264 = vld [vmem:[%s1256 + $0x38] sm:$0xff]
  %s1265 = scalar_lea.vmem %s19, 1
  %v1266 = vld [vmem:[%s1265] sm:$0x1]
  %s1267 = scalar_lea.vmem %s20, 1
  %v1268 = vld [vmem:[%s1267] sm:$0x1]
  %s1269 = scalar_lea.vmem %s21, 1
  %v1270 = vld [vmem:[%s1269] sm:$0x1]
  %v1272 = vperm.slane %v1255, 0
  %v1275 = vsel %vm184, %v1247, 0
  %v1278 = vsel %vm184, %v1248, 0
  %1280 = vmatpush.msra.mxu0 0.0
  %1281 = vmatpush.msra.mxu0 0.0
  %1282 = vmatpush.msra.mxu0 0.0
  %1283 = vmatpush.msra.mxu0 0.0
  %1284 = vmatpush.msra.mxu0 0.0
  %1285 = vmatpush.msra.mxu0 0.0
  %1286 = vmatpush.msra.mxu0 0.0
  %1287 = vmatpush.msra.mxu0 0.0
  %1288 = vmatpush.msra.mxu0 0.0
  %1289 = vmatpush.msra.mxu0 0.0
  %1290 = vmatpush.msra.mxu0 0.0
  %1291 = vmatpush.msra.mxu0 0.0
  %1292 = vmatpush.msra.mxu0 %v1253
  %1293 = vmatpush.msra.mxu0 %v1252
  %1294 = vmatpush.msra.mxu0 %v1251
  %1295 = vmatpush.msra.mxu0 %v1250
  %1296 = vmatmul.f32.gmra.mxu0 %v1275
  %v1297 = vpop.f32.mrf.mxu0
  %v1298 = vadd.f32 %v1272, %v1297
  %1299 = vmatmul.f32.gmra.mxu0 %v1278
  %v1300 = vpop.f32.mrf.mxu0
  %v1301 = vadd.f32 %v1272, %v1300
  %1302 = vdwg.mxu0
  %v1303 = vmul.f32 %v1298, 0.5
  %v1304 = vmul.f32 %v1301, 0.5
  %v1305 = vmul.f32 %v1298, 0.044715
  %v1306 = vmul.f32 %v1301, 0.044715
  %v1307 = vmul.f32 %v1305, %v1298
  %v1308 = vmul.f32 %v1306, %v1301
  %v1309 = vmul.f32 %v1307, %v1298
  %v1310 = vmul.f32 %v1308, %v1301
  %v1311 = vadd.f32 %v1298, %v1309
  %v1312 = vadd.f32 %v1301, %v1310
  %v1313 = vmul.f32 %v1311, 0.7978846
  %v1314 = vmul.f32 %v1312, 0.7978846
  %v1315 = vtanh.pop %v1313
  %v1316 = vtanh.pop %v1314
  %v1317 = vadd.f32 %v1315, 1.0
  %v1318 = vadd.f32 %v1316, 1.0
  %v1319 = vmul.f32 %v1303, %v1317
  %v1320 = vmul.f32 %v1304, %v1318
  %v1322 = vperm.slane %v1266, 0
  %v1325 = vsel %vm728, %v1319, 0
  %v1328 = vsel %vm728, %v1320, 0
  %1330 = vmatpush.msra.mxu0 0.0
  %1331 = vmatpush.msra.mxu0 0.0
  %1332 = vmatpush.msra.mxu0 0.0
  %1333 = vmatpush.msra.mxu0 0.0
  %1334 = vmatpush.msra.mxu0 0.0
  %1335 = vmatpush.msra.mxu0 0.0
  %1336 = vmatpush.msra.mxu0 0.0
  %1337 = vmatpush.msra.mxu0 0.0
  %1338 = vmatpush.msra.mxu0 %v1264
  %1339 = vmatpush.msra.mxu0 %v1263
  %1340 = vmatpush.msra.mxu0 %v1262
  %1341 = vmatpush.msra.mxu0 %v1261
  %1342 = vmatpush.msra.mxu0 %v1260
  %1343 = vmatpush.msra.mxu0 %v1259
  %1344 = vmatpush.msra.mxu0 %v1258
  %1345 = vmatpush.msra.mxu0 %v1257
  %1346 = vmatmul.f32.gmra.mxu0 %v1325
  %v1347 = vpop.f32.mrf.mxu0
  %v1348 = vadd.f32 %v1322, %v1347
  %1349 = vmatmul.f32.gmra.mxu0 %v1328
  %v1350 = vpop.f32.mrf.mxu0
  %v1351 = vadd.f32 %v1322, %v1350
  %1352 = vdwg.mxu0
  %v1353 = vadd.f32 %v1348, %v1247
  %v1354 = vadd.f32 %v1351, %v1248
  %v1355 = vsel %vm184, %v1353, 0.0
  %1356 = vadd.xlane.f32.xlu0 %v1355
  %v1357 = vpop.xlane.xlu0 %1356
  %v1358 = vsel %vm184, %v1354, 0.0
  %1359 = vadd.xlane.f32.xlu0 %v1358
  %v1360 = vpop.xlane.xlu0 %1359
  %v1361 = vmul.f32 %v1357, %v610
  %v1362 = vmul.f32 %v1360, %v610
  %v1363 = vsub.f32 %v1353, %v1361
  %v1364 = vsub.f32 %v1354, %v1362
  %v1365 = vmul.f32 %v1363, %v1363
  %v1366 = vmul.f32 %v1364, %v1364
  %v1367 = vsel %vm184, %v1365, 0.0
  %1368 = vadd.xlane.f32.xlu0 %v1367
  %v1369 = vpop.xlane.xlu0 %1368
  %v1370 = vsel %vm184, %v1366, 0.0
  %1371 = vadd.xlane.f32.xlu0 %v1370
  %v1372 = vpop.xlane.xlu0 %1371
  %v1373 = vmul.f32 %v1369, %v610
  %v1374 = vmul.f32 %v1372, %v610
  %v1375 = vadd.f32 %v1373, 1e-05
  %v1376 = vadd.f32 %v1374, 1e-05
  %v1377 = vrsqrt.pop %v1375
  %v1378 = vmul.f32 %v1377, %v1375
  %v1379 = vmul.f32 %v1378, %v1377
  %v1380 = vmul.f32 0.5, %v1379
  %v1381 = vsub.f32 1.5, %v1380
  %v1382 = vmul.f32 %v1377, %v1381
  %vm1383 = vweird.f32 %v1375
  %vm1384 = vweird.f32 %v1377
  %vm1385 = vmor %vm1383, %vm1384
  %v1386 = vsel %vm1385, %v1377, %v1382
  %v1387 = vrsqrt.pop %v1376
  %v1388 = vmul.f32 %v1387, %v1376
  %v1389 = vmul.f32 %v1388, %v1387
  %v1390 = vmul.f32 0.5, %v1389
  %v1391 = vsub.f32 1.5, %v1390
  %v1392 = vmul.f32 %v1387, %v1391
  %vm1393 = vweird.f32 %v1376
  %vm1394 = vweird.f32 %v1387
  %vm1395 = vmor %vm1393, %vm1394
  %v1396 = vsel %vm1395, %v1387, %v1392
  %v1397 = vmul.f32 %v1363, %v1386
  %v1398 = vmul.f32 %v1364, %v1396
  %v1400 = vperm.slane %v1268, 0
  %v1402 = vmul.f32 %v1397, %v1400
  %v1403 = vmul.f32 %v1398, %v1400
  %v1405 = vperm.slane %v1270, 0
  %v1407 = vadd.f32 %v1402, %v1405
  %v1408 = vadd.f32 %v1403, %v1405
  %1409 = vst.msk [vmem:[%s22] sm:$0xff] %vm184, %v1407
  %1410 = vst.msk [vmem:[%s22 + $0x8] sm:$0xff] %vm184, %v1408
  // Predicated region
  $region90: #{opinion_transformer_forward.2} parent=0 // pred_check
    _
  $region91: #{opinion_transformer_forward.2} parent=0 // pred_check_branch
    %1412 = sbr.rel (0) target = $region93
  $region92: #{opinion_transformer_forward.2} parent=0 // pred_region
    _
  $region93: #{opinion_transformer_forward.2} parent=0 // pred_fallthru
    _
  // Predicated region
  $region94: #{opinion_transformer_forward.2} parent=0 // pred_check
    _
  $region95: #{opinion_transformer_forward.2} parent=0 // pred_check_branch
    %1414 = sbr.rel (0) target = $region97
  $region96: #{opinion_transformer_forward.2} parent=0 // pred_region
    _
  $region97: #{opinion_transformer_forward.2} parent=0 // pred_fallthru
    _

// kernel: opinion_transformer_forward.3
$region0: #{opinion_transformer_forward.3}
  #allocation0 [shape = 'u32[]', space=smem, size = 0x4, offset = 0x4, fixed_abs, tag = 'smem constant byte address 0x4 - core index']
  #allocation1 [shape = 'u32[72,128]{1,0:T(1,128)}', space=vmem, size = 0x9000, scoped, tag = 'internal scratch']
  %s0 = inlined_call_operand.vmem [shape: f32[2,8,32], index: 0, kind: input, shape index: {}]
  %s1 = inlined_call_operand.vmem [shape: f32[2,8,32], index: 1, kind: input, shape index: {}]
  %s2 = inlined_call_operand.vmem [shape: f32[2,8,8], index: 2, kind: input, shape index: {}]
  %s3 = inlined_call_operand.vmem [shape: f32[2,8,8], index: 3, kind: input, shape index: {}]
  %s4 = inlined_call_operand.vmem [shape: f32[2,32,96], index: 4, kind: input, shape index: {}]
  %s5 = inlined_call_operand.vmem [shape: f32[2,1,96], index: 5, kind: input, shape index: {}]
  %s6 = inlined_call_operand.vmem [shape: f32[2,32,32], index: 6, kind: input, shape index: {}]
  %s7 = inlined_call_operand.vmem [shape: f32[2,1,32], index: 7, kind: input, shape index: {}]
  %s8 = inlined_call_operand.vmem [shape: f32[2,1,32], index: 8, kind: input, shape index: {}]
  %s9 = inlined_call_operand.vmem [shape: f32[2,1,32], index: 9, kind: input, shape index: {}]
  %s10 = inlined_call_operand.vmem [shape: f32[2,32,32], index: 10, kind: input, shape index: {}]
  %s11 = inlined_call_operand.vmem [shape: f32[2,1,32], index: 11, kind: input, shape index: {}]
  %s12 = inlined_call_operand.vmem [shape: f32[2,32,64], index: 12, kind: input, shape index: {}]
  %s13 = inlined_call_operand.vmem [shape: f32[2,1,64], index: 13, kind: input, shape index: {}]
  %s14 = inlined_call_operand.vmem [shape: f32[2,32,32], index: 14, kind: input, shape index: {}]
  %s15 = inlined_call_operand.vmem [shape: f32[2,1,32], index: 15, kind: input, shape index: {}]
  %s16 = inlined_call_operand.vmem [shape: f32[2,1,32], index: 16, kind: input, shape index: {}]
  %s17 = inlined_call_operand.vmem [shape: f32[2,1,32], index: 17, kind: input, shape index: {}]
  %s18 = inlined_call_operand.vmem [shape: f32[2,32,64], index: 18, kind: input, shape index: {}]
  %s19 = inlined_call_operand.hbm [shape: f32[2,1,64], index: 19, kind: input, shape index: {}]
  %s20 = inlined_call_operand.vmem [shape: f32[2,64,32], index: 20, kind: input, shape index: {}]
  %s21 = inlined_call_operand.hbm [shape: f32[2,1,32], index: 21, kind: input, shape index: {}]
  %s22 = inlined_call_operand.hbm [shape: f32[2,1,32], index: 22, kind: input, shape index: {}]
  %s23 = inlined_call_operand.hbm [shape: f32[2,1,32], index: 23, kind: input, shape index: {}]
  %s24 = inlined_call_operand.hbm [shape: f32[2,8,32], index: 24, kind: output, shape index: {0}]
  %s25 = inlined_call_operand.vmem [shape: f32[2,2,2,8,8], index: 25, kind: output, shape index: {1}]
  %s26 = inlined_call_operand.vmem [shape: f32[2,2,2,8,8], index: 26, kind: output, shape index: {2}]
  %27 = xla_tuple %s24, %s25, %s26
  %s28 = sld [smem:[#allocation0]]
  $region138: #{opinion_transformer_forward.3} parent=0
    _
  %s30 = ssub.s32 1, %s28
  %s31 = scalar_select 0, %s30, %s28
  $region1: #{opinion_transformer_forward.3} parent=0
    #allocation2 [shape = 'u8[1024]{0}', space=vmem, size = 0x400, scoped, tag = 'input window, operand 19, single buffered']
    #allocation3 [shape = 's32[1]{0}', space=sflag, size = 0x4, scoped, tag = 'scoped memory for opinion_transformer_forward.3']
    #allocation4 [shape = 's32[1]{0}', space=sflag, size = 0x4, scoped, tag = 'scoped memory for opinion_transformer_forward.3']
    #allocation5 [shape = 'u8[1024]{0}', space=vmem, size = 0x400, scoped, tag = 'input window, operand 21, single buffered']
    #allocation6 [shape = 's32[1]{0}', space=sflag, size = 0x4, scoped, tag = 'scoped memory for opinion_transformer_forward.3']
    #allocation7 [shape = 'u8[1024]{0}', space=vmem, size = 0x400, scoped, tag = 'input window, operand 22, single buffered']
    #allocation8 [shape = 'u8[1024]{0}', space=vmem, size = 0x400, scoped, tag = 'input window, operand 23, single buffered']
    #allocation9 [shape = 's32[1]{0}', space=sflag, size = 0x4, scoped, tag = 'scoped memory for opinion_transformer_forward.3']
    #allocation10 [shape = 'u8[8192]{0}', space=vmem, size = 0x2000, scoped, tag = 'output window, operand 0, single buffered']
    %32 = vsyncpa [#allocation3], 0
    %33 = vsyncpa [#allocation6], 0
    %34 = vsyncpa [#allocation9], 0
    %35 = vsyncpa [#allocation4], 0
    // Predicated region
    $region2: #{opinion_transformer_forward.3} parent=1 // pred_check
      _
    $region3: #{opinion_transformer_forward.3} parent=1 // pred_check_branch
      %37 = sbr.rel (0) target = $region5
    $region4: #{opinion_transformer_forward.3} parent=1 // pred_region
      _
    $region5: #{opinion_transformer_forward.3} parent=1 // pred_fallthru
      _
    // Predicated region
    $region6: #{opinion_transformer_forward.3} parent=1 // pred_check
      _
    $region7: #{opinion_transformer_forward.3} parent=1 // pred_check_branch
      %39 = sbr.rel (0) target = $region9
    $region8: #{opinion_transformer_forward.3} parent=1 // pred_region
      _
    $region9: #{opinion_transformer_forward.3} parent=1 // pred_fallthru
      _
    // Predicated region
    $region10: #{opinion_transformer_forward.3} parent=1 // pred_check
      _
    $region11: #{opinion_transformer_forward.3} parent=1 // pred_check_branch
      %41 = sbr.rel (0) target = $region13
    $region12: #{opinion_transformer_forward.3} parent=1 // pred_region
      _
    $region13: #{opinion_transformer_forward.3} parent=1 // pred_fallthru
      _
    // Predicated region
    $region14: #{opinion_transformer_forward.3} parent=1 // pred_check
      _
    $region15: #{opinion_transformer_forward.3} parent=1 // pred_check_branch
      %43 = sbr.rel (0) target = $region17
    $region16: #{opinion_transformer_forward.3} parent=1 // pred_region
      _
    $region17: #{opinion_transformer_forward.3} parent=1 // pred_fallthru
      _
    // Predicated region
    $region18: #{opinion_transformer_forward.3} parent=1 // pred_check
      _
    $region19: #{opinion_transformer_forward.3} parent=1 // pred_check_branch
      %45 = sbr.rel (0) target = $region21
    $region20: #{opinion_transformer_forward.3} parent=1 // pred_region
      _
    $region21: #{opinion_transformer_forward.3} parent=1 // pred_fallthru
      _
    // Predicated region
    $region22: #{opinion_transformer_forward.3} parent=1 // pred_check
      _
    $region23: #{opinion_transformer_forward.3} parent=1 // pred_check_branch
      %47 = sbr.rel (0) target = $region25
    $region24: #{opinion_transformer_forward.3} parent=1 // pred_region
      _
    $region25: #{opinion_transformer_forward.3} parent=1 // pred_fallthru
      _
    // Predicated region
    $region26: #{opinion_transformer_forward.3} parent=1 // pred_check
      _
    $region27: #{opinion_transformer_forward.3} parent=1 // pred_check_branch
      %49 = sbr.rel (0) target = $region29
    $region28: #{opinion_transformer_forward.3} parent=1 // pred_region
      _
    $region29: #{opinion_transformer_forward.3} parent=1 // pred_fallthru
      _
    // Predicated region
    $region30: #{opinion_transformer_forward.3} parent=1 // pred_check
      _
    $region31: #{opinion_transformer_forward.3} parent=1 // pred_check_branch
      %51 = sbr.rel (0) target = $region33
    $region32: #{opinion_transformer_forward.3} parent=1 // pred_region
      _
    $region33: #{opinion_transformer_forward.3} parent=1 // pred_fallthru
      _
    // Predicated region
    $region34: #{opinion_transformer_forward.3} parent=1 // pred_check
      _
    $region35: #{opinion_transformer_forward.3} parent=1 // pred_check_branch
      %53 = sbr.rel (0) target = $region37
    $region36: #{opinion_transformer_forward.3} parent=1 // pred_region
      _
    $region37: #{opinion_transformer_forward.3} parent=1 // pred_fallthru
      _
    // Predicated region
    $region38: #{opinion_transformer_forward.3} parent=1 // pred_check
      _
    $region39: #{opinion_transformer_forward.3} parent=1 // pred_check_branch
      %55 = sbr.rel (0) target = $region41
    $region40: #{opinion_transformer_forward.3} parent=1 // pred_region
      _
    $region41: #{opinion_transformer_forward.3} parent=1 // pred_fallthru
      _
    // Predicated region
    $region42: #{opinion_transformer_forward.3} parent=1 // pred_check
      _
    $region43: #{opinion_transformer_forward.3} parent=1 // pred_check_branch
      %57 = sbr.rel (0) target = $region45
    $region44: #{opinion_transformer_forward.3} parent=1 // pred_region
      _
    $region45: #{opinion_transformer_forward.3} parent=1 // pred_fallthru
      _
    // Predicated region
    $region46: #{opinion_transformer_forward.3} parent=1 // pred_check
      _
    $region47: #{opinion_transformer_forward.3} parent=1 // pred_check_branch
      %59 = sbr.rel (0) target = $region49
    $region48: #{opinion_transformer_forward.3} parent=1 // pred_region
      _
    $region49: #{opinion_transformer_forward.3} parent=1 // pred_fallthru
      _
    // Predicated region
    $region50: #{opinion_transformer_forward.3} parent=1 // pred_check
      _
    $region51: #{opinion_transformer_forward.3} parent=1 // pred_check_branch
      %61 = sbr.rel (0) target = $region53
    $region52: #{opinion_transformer_forward.3} parent=1 // pred_region
      _
    $region53: #{opinion_transformer_forward.3} parent=1 // pred_fallthru
      _
    // Predicated region
    $region54: #{opinion_transformer_forward.3} parent=1 // pred_check
      _
    $region55: #{opinion_transformer_forward.3} parent=1 // pred_check_branch
      %63 = sbr.rel (0) target = $region57
    $region56: #{opinion_transformer_forward.3} parent=1 // pred_region
      _
    $region57: #{opinion_transformer_forward.3} parent=1 // pred_fallthru
      _
    // Predicated region
    $region58: #{opinion_transformer_forward.3} parent=1 // pred_check
      _
    $region59: #{opinion_transformer_forward.3} parent=1 // pred_check_branch
      %65 = sbr.rel (0) target = $region61
    $region60: #{opinion_transformer_forward.3} parent=1 // pred_region
      _
    $region61: #{opinion_transformer_forward.3} parent=1 // pred_fallthru
      _
    // Predicated region
    $region62: #{opinion_transformer_forward.3} parent=1 // pred_check
      _
    $region63: #{opinion_transformer_forward.3} parent=1 // pred_check_branch
      %67 = sbr.rel (0) target = $region65
    $region64: #{opinion_transformer_forward.3} parent=1 // pred_region
      _
    $region65: #{opinion_transformer_forward.3} parent=1 // pred_fallthru
      _
    // Predicated region
    $region66: #{opinion_transformer_forward.3} parent=1 // pred_check
      _
    $region67: #{opinion_transformer_forward.3} parent=1 // pred_check_branch
      %69 = sbr.rel (0) target = $region69
    $region68: #{opinion_transformer_forward.3} parent=1 // pred_region
      _
    $region69: #{opinion_transformer_forward.3} parent=1 // pred_fallthru
      _
    // Predicated region
    $region70: #{opinion_transformer_forward.3} parent=1 // pred_check
      _
    $region71: #{opinion_transformer_forward.3} parent=1 // pred_check_branch
      %71 = sbr.rel (0) target = $region73
    $region72: #{opinion_transformer_forward.3} parent=1 // pred_region
      _
    $region73: #{opinion_transformer_forward.3} parent=1 // pred_fallthru
      _
    // Predicated region
    $region74: #{opinion_transformer_forward.3} parent=1 // pred_check
      _
    $region75: #{opinion_transformer_forward.3} parent=1 // pred_check_branch
      %73 = sbr.rel (0) target = $region77
    $region76: #{opinion_transformer_forward.3} parent=1 // pred_region
      _
    $region77: #{opinion_transformer_forward.3} parent=1 // pred_fallthru
      _
    // Predicated region
    $region78: #{opinion_transformer_forward.3} parent=1 // pred_check
      _
    $region79: #{opinion_transformer_forward.3} parent=1 // pred_check_branch
      %75 = sbr.rel (0) target = $region81
    $region80: #{opinion_transformer_forward.3} parent=1 // pred_region
      %77 = vsyncadd [#allocation3], 0
      %s78 = sshll.u32 %s19, 4
      %s79 = int_to_ptr.hbm [resolvable:$true] %s78
      %s80 = sshll.u32 [#allocation2], 4
      %s81 = int_to_ptr.vmem [resolvable:$true] %s80
      %86 = dma.hbm_to_vmem [thread:$0]  %s79, 32, %s81, [#allocation3], 16, 16, 1
    $region81: #{opinion_transformer_forward.3} parent=1 // pred_fallthru
      _
    // Predicated region
    $region82: #{opinion_transformer_forward.3} parent=1 // pred_check
      _
    $region83: #{opinion_transformer_forward.3} parent=1 // pred_check_branch
      %88 = sbr.rel (0) target = $region85
    $region84: #{opinion_transformer_forward.3} parent=1 // pred_region
      _
    $region85: #{opinion_transformer_forward.3} parent=1 // pred_fallthru
      _
    // Predicated region
    $region86: #{opinion_transformer_forward.3} parent=1 // pred_check
      _
    $region87: #{opinion_transformer_forward.3} parent=1 // pred_check_branch
      %90 = sbr.rel (0) target = $region89
    $region88: #{opinion_transformer_forward.3} parent=1 // pred_region
      %92 = vsyncadd [#allocation6], 0
      %s93 = sshll.u32 %s21, 4
      %s94 = int_to_ptr.hbm [resolvable:$true] %s93
      %s95 = sshll.u32 [#allocation5], 4
      %s96 = int_to_ptr.vmem [resolvable:$true] %s95
      %101 = dma.hbm_to_vmem [thread:$0]  %s94, 32, %s96, [#allocation6], 16, 16, 1
    $region89: #{opinion_transformer_forward.3} parent=1 // pred_fallthru
      _
    // Predicated region
    $region90: #{opinion_transformer_forward.3} parent=1 // pred_check
      _
    $region91: #{opinion_transformer_forward.3} parent=1 // pred_check_branch
      %103 = sbr.rel (0) target = $region93
    $region92: #{opinion_transformer_forward.3} parent=1 // pred_region
      %105 = vsyncadd [#allocation6], 0
      %s106 = sshll.u32 %s22, 4
      %s107 = int_to_ptr.hbm [resolvable:$true] %s106
      %s108 = sshll.u32 [#allocation7], 4
      %s109 = int_to_ptr.vmem [resolvable:$true] %s108
      %114 = dma.hbm_to_vmem [thread:$0]  %s107, 32, %s109, [#allocation6], 16, 16, 1
    $region93: #{opinion_transformer_forward.3} parent=1 // pred_fallthru
      _
    // Predicated region
    $region94: #{opinion_transformer_forward.3} parent=1 // pred_check
      _
    $region95: #{opinion_transformer_forward.3} parent=1 // pred_check_branch
      %116 = sbr.rel (0) target = $region97
    $region96: #{opinion_transformer_forward.3} parent=1 // pred_region
      %118 = vsyncadd [#allocation9], 0
      %s119 = sshll.u32 %s23, 4
      %s120 = int_to_ptr.hbm [resolvable:$true] %s119
      %s121 = sshll.u32 [#allocation8], 4
      %s122 = int_to_ptr.vmem [resolvable:$true] %s121
      %127 = dma.hbm_to_vmem [thread:$0]  %s120, 32, %s122, [#allocation9], 16, 16, 1
    $region97: #{opinion_transformer_forward.3} parent=1 // pred_fallthru
      _
    // Predicated region
    $region98: #{opinion_transformer_forward.3} parent=1 // pred_check
      _
    $region99: #{opinion_transformer_forward.3} parent=1 // pred_check_branch
      %129 = sbr.rel (0) target = $region101
    $region100: #{opinion_transformer_forward.3} parent=1 // pred_region
      %131 = dma.done [#allocation3], 32
    $region101: #{opinion_transformer_forward.3} parent=1 // pred_fallthru
      _
    // Predicated region
    $region102: #{opinion_transformer_forward.3} parent=1 // pred_check
      _
    $region103: #{opinion_transformer_forward.3} parent=1 // pred_check_branch
      %133 = sbr.rel (0) target = $region105
    $region104: #{opinion_transformer_forward.3} parent=1 // pred_region
      %135 = dma.done [#allocation6], 32
    $region105: #{opinion_transformer_forward.3} parent=1 // pred_fallthru
      _
    // Predicated region
    $region106: #{opinion_transformer_forward.3} parent=1 // pred_check
      _
    $region107: #{opinion_transformer_forward.3} parent=1 // pred_check_branch
      %137 = sbr.rel (0) target = $region109
    $region108: #{opinion_transformer_forward.3} parent=1 // pred_region
      %139 = dma.done [#allocation6], 32
    $region109: #{opinion_transformer_forward.3} parent=1 // pred_fallthru
      _
    // Predicated region
    $region110: #{opinion_transformer_forward.3} parent=1 // pred_check
      _
    $region111: #{opinion_transformer_forward.3} parent=1 // pred_check_branch
      %141 = sbr.rel (0) target = $region113
    $region112: #{opinion_transformer_forward.3} parent=1 // pred_region
      %143 = dma.done [#allocation9], 32
    $region113: #{opinion_transformer_forward.3} parent=1 // pred_fallthru
      _
    %v144 = vld [vmem:[%s0] sm:$0xff]
    %v145 = vld [vmem:[%s0 + $0x8] sm:$0xff]
    %v146 = vld [vmem:[%s1] sm:$0xff]
    %v147 = vld [vmem:[%s1 + $0x8] sm:$0xff]
    %v148 = vld [vmem:[%s2] sm:$0xff]
    %v149 = vld [vmem:[%s2 + $0x8] sm:$0xff]
    %v150 = vld [vmem:[%s3] sm:$0xff]
    %v151 = vld [vmem:[%s3 + $0x8] sm:$0xff]
    %v152 = vld [vmem:[%s4] sm:$0xff]
    %v153 = vld [vmem:[%s4 + $0x8] sm:$0xff]
    %v154 = vld [vmem:[%s4 + $0x10] sm:$0xff]
    %v155 = vld [vmem:[%s4 + $0x18] sm:$0xff]
    %v156 = vld [vmem:[%s5] sm:$0x1]
    %v158 = vperm.slane %v156, 0
    %vm160 = vcmask 261120
    %v162 = vsel %vm160, %v144, 0
    %v165 = vsel %vm160, %v145, 0
    %167 = vmatpush.msra.mxu0 0.0
    %168 = vmatpush.msra.mxu0 0.0
    %169 = vmatpush.msra.mxu0 0.0
    %170 = vmatpush.msra.mxu0 0.0
    %171 = vmatpush.msra.mxu0 0.0
    %172 = vmatpush.msra.mxu0 0.0
    %173 = vmatpush.msra.mxu0 0.0
    %174 = vmatpush.msra.mxu0 0.0
    %175 = vmatpush.msra.mxu0 0.0
    %176 = vmatpush.msra.mxu0 0.0
    %177 = vmatpush.msra.mxu0 0.0
    %178 = vmatpush.msra.mxu0 0.0
    %179 = vmatpush.msra.mxu0 %v155
    %180 = vmatpush.msra.mxu0 %v154
    %181 = vmatpush.msra.mxu0 %v153
    %182 = vmatpush.msra.mxu0 %v152
    %183 = vmatmul.f32.gmra.mxu0 %v162
    %v184 = vpop.f32.mrf.mxu0
    %v185 = vadd.f32 %v158, %v184
    %186 = vmatmul.f32.gmra.mxu0 %v165
    %v187 = vpop.f32.mrf.mxu0
    %v188 = vadd.f32 %v158, %v187
    %189 = vdwg.mxu0
    %v190 = vld [vmem:[%s6] sm:$0xff]
    %v191 = vld [vmem:[%s6 + $0x8] sm:$0xff]
    %v192 = vld [vmem:[%s6 + $0x10] sm:$0xff]
    %v193 = vld [vmem:[%s6 + $0x18] sm:$0xff]
    %v194 = vld [vmem:[%s7] sm:$0x1]
    %v195 = vld [vmem:[%s8] sm:$0x1]
    %v196 = vld [vmem:[%s9] sm:$0x1]
    %198 = vrot.lane.b32.xlu0 %v185, 96
    %v199 = vpop.permute.xlu0 %198
    %vm200 = vcmask 130048
    %v201 = vsel %vm200, %v185, 0
    %v203 = vsel %vm200, %v199, 0
    %205 = vmatpush.xpose.msra.mxu0 0.0
    %206 = vmatpush.xpose.msra.mxu0 0.0
    %207 = vmatpush.xpose.msra.mxu0 0.0
    %208 = vmatpush.xpose.msra.mxu0 0.0
    %209 = vmatpush.xpose.msra.mxu0 0.0
    %210 = vmatpush.xpose.msra.mxu0 0.0
    %211 = vmatpush.xpose.msra.mxu0 0.0
    %212 = vmatpush.xpose.msra.mxu0 0.0
    %213 = vmatpush.xpose.msra.mxu0 0.0
    %214 = vmatpush.xpose.msra.mxu0 0.0
    %215 = vmatpush.xpose.msra.mxu0 0.0
    %216 = vmatpush.xpose.msra.mxu0 0.0
    %217 = vmatpush.xpose.msra.mxu0 0.0
    %218 = vmatpush.xpose.msra.mxu0 0.0
    %219 = vmatpush.xpose.msra.mxu0 0.0
    %220 = vmatpush.xpose.msra.mxu0 %v203
    %221 = vmatmul.f32.gmra.mxu0 %v201
    %v222 = vpop.f32.mrf.mxu0
    %v223 = vadd.f32 0.0, %v222
    %224 = vdwg.mxu0
    %226 = vrot.lane.b32.xlu0 %v188, 96
    %v227 = vpop.permute.xlu0 %226
    %v228 = vsel %vm200, %v188, 0
    %v230 = vsel %vm200, %v227, 0
    %232 = vmatpush.xpose.msra.mxu0 0.0
    %233 = vmatpush.xpose.msra.mxu0 0.0
    %234 = vmatpush.xpose.msra.mxu0 0.0
    %235 = vmatpush.xpose.msra.mxu0 0.0
    %236 = vmatpush.xpose.msra.mxu0 0.0
    %237 = vmatpush.xpose.msra.mxu0 0.0
    %238 = vmatpush.xpose.msra.mxu0 0.0
    %239 = vmatpush.xpose.msra.mxu0 0.0
    %240 = vmatpush.xpose.msra.mxu0 0.0
    %241 = vmatpush.xpose.msra.mxu0 0.0
    %242 = vmatpush.xpose.msra.mxu0 0.0
    %243 = vmatpush.xpose.msra.mxu0 0.0
    %244 = vmatpush.xpose.msra.mxu0 0.0
    %245 = vmatpush.xpose.msra.mxu0 0.0
    %246 = vmatpush.xpose.msra.mxu0 0.0
    %247 = vmatpush.xpose.msra.mxu0 %v230
    %248 = vmatmul.f32.gmra.mxu0 %v228
    %v249 = vpop.f32.mrf.mxu0
    %v250 = vadd.f32 0.0, %v249
    %251 = vdwg.mxu0
    %v252 = vmul.f32 %v223, 0.25
    %v253 = vmul.f32 %v250, 0.25
    %v254 = vadd.f32 %v252, %v148
    %v255 = vadd.f32 %v253, %v149
    %vm256 = vcmask 64512
    %v257 = vsel %vm256, %v254, -inf
    %258 = vmax.xlane.f32.xlu0 %v257
    %v259 = vpop.xlane.xlu0 %258
    %v260 = vsel %vm256, %v255, -inf
    %261 = vmax.xlane.f32.xlu0 %v260
    %v262 = vpop.xlane.xlu0 %261
    %v263 = vsub.f32 %v254, %v259
    %v264 = vsub.f32 %v255, %v262
    %v265 = vmul.f32 %v263, 1.442695
    %v266 = vpow.pop %v265
    %v267 = vmul.f32 %v264, 1.442695
    %v268 = vpow.pop %v267
    %v269 = vsel %vm256, %v266, 0.0
    %270 = vadd.xlane.f32.xlu0 %v269
    %v271 = vpop.xlane.xlu0 %270
    %v272 = vsel %vm256, %v268, 0.0
    %273 = vadd.xlane.f32.xlu0 %v272
    %v274 = vpop.xlane.xlu0 %273
    %v275 = vrcp.pop %v271
    %v276 = vrcp.pop %v274
    %v277 = vmul.f32 %v266, %v275
    %v278 = vmul.f32 %v268, %v276
    %279 = vrot.lane.b32.xlu0 %v185, 64
    %v280 = vpop.permute.xlu0 %279
    %v283 = vsel %vm256, %v277, 0
    %285 = vmatpush.msra.mxu0 0.0
    %286 = vmatpush.msra.mxu0 0.0
    %287 = vmatpush.msra.mxu0 0.0
    %288 = vmatpush.msra.mxu0 0.0
    %289 = vmatpush.msra.mxu0 0.0
    %290 = vmatpush.msra.mxu0 0.0
    %291 = vmatpush.msra.mxu0 0.0
    %292 = vmatpush.msra.mxu0 0.0
    %293 = vmatpush.msra.mxu0 0.0
    %294 = vmatpush.msra.mxu0 0.0
    %295 = vmatpush.msra.mxu0 0.0
    %296 = vmatpush.msra.mxu0 0.0
    %297 = vmatpush.msra.mxu0 0.0
    %298 = vmatpush.msra.mxu0 0.0
    %299 = vmatpush.msra.mxu0 0.0
    %300 = vmatpush.msra.mxu0 %v280
    %301 = vmatmul.f32.gmra.mxu0 %v283
    %v302 = vpop.f32.mrf.mxu0
    %v303 = vadd.f32 0.0, %v302
    %304 = vdwg.mxu0
    %305 = vrot.lane.b32.xlu0 %v188, 64
    %v306 = vpop.permute.xlu0 %305
    %v309 = vsel %vm256, %v278, 0
    %311 = vmatpush.msra.mxu0 0.0
    %312 = vmatpush.msra.mxu0 0.0
    %313 = vmatpush.msra.mxu0 0.0
    %314 = vmatpush.msra.mxu0 0.0
    %315 = vmatpush.msra.mxu0 0.0
    %316 = vmatpush.msra.mxu0 0.0
    %317 = vmatpush.msra.mxu0 0.0
    %318 = vmatpush.msra.mxu0 0.0
    %319 = vmatpush.msra.mxu0 0.0
    %320 = vmatpush.msra.mxu0 0.0
    %321 = vmatpush.msra.mxu0 0.0
    %322 = vmatpush.msra.mxu0 0.0
    %323 = vmatpush.msra.mxu0 0.0
    %324 = vmatpush.msra.mxu0 0.0
    %325 = vmatpush.msra.mxu0 0.0
    %326 = vmatpush.msra.mxu0 %v306
    %327 = vmatmul.f32.gmra.mxu0 %v309
    %v328 = vpop.f32.mrf.mxu0
    %v329 = vadd.f32 0.0, %v328
    %330 = vdwg.mxu0
    %331 = vrot.lane.b32.xlu0 %v185, 112
    %v332 = vpop.permute.xlu0 %331
    %333 = vrot.lane.b32.xlu0 %v185, 80
    %v334 = vpop.permute.xlu0 %333
    %v335 = vsel %vm200, %v332, 0
    %v337 = vsel %vm200, %v334, 0
    %339 = vmatpush.xpose.msra.mxu0 0.0
    %340 = vmatpush.xpose.msra.mxu0 0.0
    %341 = vmatpush.xpose.msra.mxu0 0.0
    %342 = vmatpush.xpose.msra.mxu0 0.0
    %343 = vmatpush.xpose.msra.mxu0 0.0
    %344 = vmatpush.xpose.msra.mxu0 0.0
    %345 = vmatpush.xpose.msra.mxu0 0.0
    %346 = vmatpush.xpose.msra.mxu0 0.0
    %347 = vmatpush.xpose.msra.mxu0 0.0
    %348 = vmatpush.xpose.msra.mxu0 0.0
    %349 = vmatpush.xpose.msra.mxu0 0.0
    %350 = vmatpush.xpose.msra.mxu0 0.0
    %351 = vmatpush.xpose.msra.mxu0 0.0
    %352 = vmatpush.xpose.msra.mxu0 0.0
    %353 = vmatpush.xpose.msra.mxu0 0.0
    %354 = vmatpush.xpose.msra.mxu0 %v337
    %355 = vmatmul.f32.gmra.mxu0 %v335
    %v356 = vpop.f32.mrf.mxu0
    %v357 = vadd.f32 0.0, %v356
    %358 = vdwg.mxu0
    %359 = vrot.lane.b32.xlu0 %v188, 112
    %v360 = vpop.permute.xlu0 %359
    %361 = vrot.lane.b32.xlu0 %v188, 80
    %v362 = vpop.permute.xlu0 %361
    %v363 = vsel %vm200, %v360, 0
    %v365 = vsel %vm200, %v362, 0
    %367 = vmatpush.xpose.msra.mxu0 0.0
    %368 = vmatpush.xpose.msra.mxu0 0.0
    %369 = vmatpush.xpose.msra.mxu0 0.0
    %370 = vmatpush.xpose.msra.mxu0 0.0
    %371 = vmatpush.xpose.msra.mxu0 0.0
    %372 = vmatpush.xpose.msra.mxu0 0.0
    %373 = vmatpush.xpose.msra.mxu0 0.0
    %374 = vmatpush.xpose.msra.mxu0 0.0
    %375 = vmatpush.xpose.msra.mxu0 0.0
    %376 = vmatpush.xpose.msra.mxu0 0.0
    %377 = vmatpush.xpose.msra.mxu0 0.0
    %378 = vmatpush.xpose.msra.mxu0 0.0
    %379 = vmatpush.xpose.msra.mxu0 0.0
    %380 = vmatpush.xpose.msra.mxu0 0.0
    %381 = vmatpush.xpose.msra.mxu0 0.0
    %382 = vmatpush.xpose.msra.mxu0 %v365
    %383 = vmatmul.f32.gmra.mxu0 %v363
    %v384 = vpop.f32.mrf.mxu0
    %v385 = vadd.f32 0.0, %v384
    %386 = vdwg.mxu0
    %v387 = vmul.f32 %v357, 0.25
    %v388 = vmul.f32 %v385, 0.25
    %v389 = vadd.f32 %v387, %v148
    %v390 = vadd.f32 %v388, %v149
    %v391 = vsel %vm256, %v389, -inf
    %392 = vmax.xlane.f32.xlu0 %v391
    %v393 = vpop.xlane.xlu0 %392
    %v394 = vsel %vm256, %v390, -inf
    %395 = vmax.xlane.f32.xlu0 %v394
    %v396 = vpop.xlane.xlu0 %395
    %v397 = vsub.f32 %v389, %v393
    %v398 = vsub.f32 %v390, %v396
    %v399 = vmul.f32 %v397, 1.442695
    %v400 = vpow.pop %v399
    %v401 = vmul.f32 %v398, 1.442695
    %v402 = vpow.pop %v401
    %v403 = vsel %vm256, %v400, 0.0
    %404 = vadd.xlane.f32.xlu0 %v403
    %v405 = vpop.xlane.xlu0 %404
    %v406 = vsel %vm256, %v402, 0.0
    %407 = vadd.xlane.f32.xlu0 %v406
    %v408 = vpop.xlane.xlu0 %407
    %v409 = vrcp.pop %v405
    %v410 = vrcp.pop %v408
    %v411 = vmul.f32 %v400, %v409
    %v412 = vmul.f32 %v402, %v410
    %413 = vrot.lane.b32.xlu0 %v185, 48
    %v414 = vpop.permute.xlu0 %413
    %v417 = vsel %vm256, %v411, 0
    %419 = vmatpush.msra.mxu0 0.0
    %420 = vmatpush.msra.mxu0 0.0
    %421 = vmatpush.msra.mxu0 0.0
    %422 = vmatpush.msra.mxu0 0.0
    %423 = vmatpush.msra.mxu0 0.0
    %424 = vmatpush.msra.mxu0 0.0
    %425 = vmatpush.msra.mxu0 0.0
    %426 = vmatpush.msra.mxu0 0.0
    %427 = vmatpush.msra.mxu0 0.0
    %428 = vmatpush.msra.mxu0 0.0
    %429 = vmatpush.msra.mxu0 0.0
    %430 = vmatpush.msra.mxu0 0.0
    %431 = vmatpush.msra.mxu0 0.0
    %432 = vmatpush.msra.mxu0 0.0
    %433 = vmatpush.msra.mxu0 0.0
    %434 = vmatpush.msra.mxu0 %v414
    %435 = vmatmul.f32.gmra.mxu0 %v417
    %v436 = vpop.f32.mrf.mxu0
    %v437 = vadd.f32 0.0, %v436
    %438 = vdwg.mxu0
    %439 = vrot.lane.b32.xlu0 %v188, 48
    %v440 = vpop.permute.xlu0 %439
    %v443 = vsel %vm256, %v412, 0
    %445 = vmatpush.msra.mxu0 0.0
    %446 = vmatpush.msra.mxu0 0.0
    %447 = vmatpush.msra.mxu0 0.0
    %448 = vmatpush.msra.mxu0 0.0
    %449 = vmatpush.msra.mxu0 0.0
    %450 = vmatpush.msra.mxu0 0.0
    %451 = vmatpush.msra.mxu0 0.0
    %452 = vmatpush.msra.mxu0 0.0
    %453 = vmatpush.msra.mxu0 0.0
    %454 = vmatpush.msra.mxu0 0.0
    %455 = vmatpush.msra.mxu0 0.0
    %456 = vmatpush.msra.mxu0 0.0
    %457 = vmatpush.msra.mxu0 0.0
    %458 = vmatpush.msra.mxu0 0.0
    %459 = vmatpush.msra.mxu0 0.0
    %460 = vmatpush.msra.mxu0 %v440
    %461 = vmatmul.f32.gmra.mxu0 %v443
    %v462 = vpop.f32.mrf.mxu0
    %v463 = vadd.f32 0.0, %v462
    %464 = vdwg.mxu0
    %v466 = vsel %vm200, %v437, 0
    %v469 = vsel %vm200, %v463, 0
    %471 = vmatpush.msra.mxu0 0.0
    %472 = vmatpush.msra.mxu0 0.0
    %473 = vmatpush.msra.mxu0 0.0
    %474 = vmatpush.msra.mxu0 0.0
    %475 = vmatpush.msra.mxu0 0.0
    %476 = vmatpush.msra.mxu0 0.0
    %477 = vmatpush.msra.mxu0 0.0
    %478 = vmatpush.msra.mxu0 0.0
    %479 = vmatpush.msra.mxu0 0.0
    %480 = vmatpush.msra.mxu0 0.0
    %481 = vmatpush.msra.mxu0 0.0
    %482 = vmatpush.msra.mxu0 0.0
    %483 = vmatpush.msra.mxu0 0.0
    %484 = vmatpush.msra.mxu0 0.0
    %485 = vmatpush.msra.mxu0 %v193
    %486 = vmatpush.msra.mxu0 %v192
    %487 = vmatmul.f32.gmra.mxu0 %v466
    %v488 = vpop.f32.mrf.mxu0
    %v489 = vadd.f32 0.0, %v488
    %490 = vmatmul.f32.gmra.mxu0 %v469
    %v491 = vpop.f32.mrf.mxu0
    %v492 = vadd.f32 0.0, %v491
    %493 = vdwg.mxu0
    %v495 = vsel %vm200, %v303, 0
    %v498 = vsel %vm200, %v329, 0
    %500 = vmatpush.msra.mxu0 0.0
    %501 = vmatpush.msra.mxu0 0.0
    %502 = vmatpush.msra.mxu0 0.0
    %503 = vmatpush.msra.mxu0 0.0
    %504 = vmatpush.msra.mxu0 0.0
    %505 = vmatpush.msra.mxu0 0.0
    %506 = vmatpush.msra.mxu0 0.0
    %507 = vmatpush.msra.mxu0 0.0
    %508 = vmatpush.msra.mxu0 0.0
    %509 = vmatpush.msra.mxu0 0.0
    %510 = vmatpush.msra.mxu0 0.0
    %511 = vmatpush.msra.mxu0 0.0
    %512 = vmatpush.msra.mxu0 0.0
    %513 = vmatpush.msra.mxu0 0.0
    %514 = vmatpush.msra.mxu0 %v191
    %515 = vmatpush.msra.mxu0 %v190
    %516 = vmatmul.f32.gmra.mxu0 %v495
    %v517 = vpop.f32.mrf.mxu0
    %v518 = vadd.f32 %v489, %v517
    %519 = vmatmul.f32.gmra.mxu0 %v498
    %v520 = vpop.f32.mrf.mxu0
    %v521 = vadd.f32 %v492, %v520
    %522 = vdwg.mxu0
    %v524 = vperm.slane %v194, 0
    %v526 = vadd.f32 %v518, %v524
    %v527 = vadd.f32 %v521, %v524
    %v528 = vadd.f32 %v526, %v144
    %v529 = vadd.f32 %v527, %v145
    %v530 = vsel %vm160, %v528, 0.0
    %531 = vadd.xlane.f32.xlu0 %v530
    %v532 = vpop.xlane.xlu0 %531
    %v533 = vsel %vm160, %v529, 0.0
    %534 = vadd.xlane.f32.xlu0 %v533
    %v535 = vpop.xlane.xlu0 %534
    %v536 = vrcp.pop 32.0
    %v537 = vmul.f32 32.0, %v536
    %v538 = vsub.f32 1.0, %v537
    %v539 = vmul.f32 %v536, %v538
    %v540 = vadd.f32 %v536, %v539
    %vm541 = vweird.f32 %v536
    %v542 = vsel %vm541, %v536, %v540
    %v543 = vmul.f32 %v532, %v542
    %v544 = vmul.f32 %v535, %v542
    %v545 = vsub.f32 %v528, %v543
    %v546 = vsub.f32 %v529, %v544
    %v547 = vmul.f32 %v545, %v545
    %v548 = vmul.f32 %v546, %v546
    %v549 = vsel %vm160, %v547, 0.0
    %550 = vadd.xlane.f32.xlu0 %v549
    %v551 = vpop.xlane.xlu0 %550
    %v552 = vsel %vm160, %v548, 0.0
    %553 = vadd.xlane.f32.xlu0 %v552
    %v554 = vpop.xlane.xlu0 %553
    %v555 = vmul.f32 %v551, %v542
    %v556 = vmul.f32 %v554, %v542
    %v557 = vadd.f32 %v555, 1e-05
    %v558 = vadd.f32 %v556, 1e-05
    %v559 = vrsqrt.pop %v557
    %v560 = vmul.f32 %v559, %v557
    %v561 = vmul.f32 %v560, %v559
    %v562 = vmul.f32 0.5, %v561
    %v563 = vsub.f32 1.5, %v562
    %v564 = vmul.f32 %v559, %v563
    %vm565 = vweird.f32 %v557
    %vm566 = vweird.f32 %v559
    %vm567 = vmor %vm565, %vm566
    %v568 = vsel %vm567, %v559, %v564
    %v569 = vrsqrt.pop %v558
    %v570 = vmul.f32 %v569, %v558
    %v571 = vmul.f32 %v570, %v569
    %v572 = vmul.f32 0.5, %v571
    %v573 = vsub.f32 1.5, %v572
    %v574 = vmul.f32 %v569, %v573
    %vm575 = vweird.f32 %v558
    %vm576 = vweird.f32 %v569
    %vm577 = vmor %vm575, %vm576
    %v578 = vsel %vm577, %v569, %v574
    %v579 = vmul.f32 %v545, %v568
    %v580 = vmul.f32 %v546, %v578
    %v582 = vperm.slane %v195, 0
    %v584 = vmul.f32 %v579, %v582
    %v585 = vmul.f32 %v580, %v582
    %v587 = vperm.slane %v196, 0
    %v589 = vadd.f32 %v584, %v587
    %v590 = vadd.f32 %v585, %v587
    %v591 = vld [vmem:[%s10] sm:$0xff]
    %v592 = vld [vmem:[%s10 + $0x8] sm:$0xff]
    %v593 = vld [vmem:[%s10 + $0x10] sm:$0xff]
    %v594 = vld [vmem:[%s10 + $0x18] sm:$0xff]
    %v595 = vld [vmem:[%s11] sm:$0x1]
    %v597 = vperm.slane %v595, 0
    %v600 = vsel %vm160, %v589, 0
    %v603 = vsel %vm160, %v590, 0
    %605 = vmatpush.msra.mxu0 0.0
    %606 = vmatpush.msra.mxu0 0.0
    %607 = vmatpush.msra.mxu0 0.0
    %608 = vmatpush.msra.mxu0 0.0
    %609 = vmatpush.msra.mxu0 0.0
    %610 = vmatpush.msra.mxu0 0.0
    %611 = vmatpush.msra.mxu0 0.0
    %612 = vmatpush.msra.mxu0 0.0
    %613 = vmatpush.msra.mxu0 0.0
    %614 = vmatpush.msra.mxu0 0.0
    %615 = vmatpush.msra.mxu0 0.0
    %616 = vmatpush.msra.mxu0 0.0
    %617 = vmatpush.msra.mxu0 %v594
    %618 = vmatpush.msra.mxu0 %v593
    %619 = vmatpush.msra.mxu0 %v592
    %620 = vmatpush.msra.mxu0 %v591
    %621 = vmatmul.f32.gmra.mxu0 %v600
    %v622 = vpop.f32.mrf.mxu0
    %v623 = vadd.f32 %v597, %v622
    %624 = vmatmul.f32.gmra.mxu0 %v603
    %v625 = vpop.f32.mrf.mxu0
    %v626 = vadd.f32 %v597, %v625
    %627 = vdwg.mxu0
    %v628 = vld [vmem:[%s12] sm:$0xff]
    %v629 = vld [vmem:[%s12 + $0x8] sm:$0xff]
    %v630 = vld [vmem:[%s12 + $0x10] sm:$0xff]
    %v631 = vld [vmem:[%s12 + $0x18] sm:$0xff]
    %v632 = vld [vmem:[%s13] sm:$0x1]
    %v634 = vperm.slane %v632, 0
    %v637 = vsel %vm160, %v146, 0
    %v640 = vsel %vm160, %v147, 0
    %642 = vmatpush.msra.mxu0 0.0
    %643 = vmatpush.msra.mxu0 0.0
    %644 = vmatpush.msra.mxu0 0.0
    %645 = vmatpush.msra.mxu0 0.0
    %646 = vmatpush.msra.mxu0 0.0
    %647 = vmatpush.msra.mxu0 0.0
    %648 = vmatpush.msra.mxu0 0.0
    %649 = vmatpush.msra.mxu0 0.0
    %650 = vmatpush.msra.mxu0 0.0
    %651 = vmatpush.msra.mxu0 0.0
    %652 = vmatpush.msra.mxu0 0.0
    %653 = vmatpush.msra.mxu0 0.0
    %654 = vmatpush.msra.mxu0 %v631
    %655 = vmatpush.msra.mxu0 %v630
    %656 = vmatpush.msra.mxu0 %v629
    %657 = vmatpush.msra.mxu0 %v628
    %658 = vmatmul.f32.gmra.mxu0 %v637
    %v659 = vpop.f32.mrf.mxu0
    %v660 = vadd.f32 %v634, %v659
    %661 = vmatmul.f32.gmra.mxu0 %v640
    %v662 = vpop.f32.mrf.mxu0
    %v663 = vadd.f32 %v634, %v662
    %664 = vdwg.mxu0
    %v665 = vld [vmem:[%s14] sm:$0xff]
    %v666 = vld [vmem:[%s14 + $0x8] sm:$0xff]
    %v667 = vld [vmem:[%s14 + $0x10] sm:$0xff]
    %v668 = vld [vmem:[%s14 + $0x18] sm:$0xff]
    %v669 = vld [vmem:[%s15] sm:$0x1]
    %v670 = vld [vmem:[%s16] sm:$0x1]
    %v671 = vld [vmem:[%s17] sm:$0x1]
    %v673 = vsel %vm200, %v623, 0
    %v676 = vsel %vm200, %v660, 0
    %678 = vmatpush.xpose.msra.mxu0 0.0
    %679 = vmatpush.xpose.msra.mxu0 0.0
    %680 = vmatpush.xpose.msra.mxu0 0.0
    %681 = vmatpush.xpose.msra.mxu0 0.0
    %682 = vmatpush.xpose.msra.mxu0 0.0
    %683 = vmatpush.xpose.msra.mxu0 0.0
    %684 = vmatpush.xpose.msra.mxu0 0.0
    %685 = vmatpush.xpose.msra.mxu0 0.0
    %686 = vmatpush.xpose.msra.mxu0 0.0
    %687 = vmatpush.xpose.msra.mxu0 0.0
    %688 = vmatpush.xpose.msra.mxu0 0.0
    %689 = vmatpush.xpose.msra.mxu0 0.0
    %690 = vmatpush.xpose.msra.mxu0 0.0
    %691 = vmatpush.xpose.msra.mxu0 0.0
    %692 = vmatpush.xpose.msra.mxu0 0.0
    %693 = vmatpush.xpose.msra.mxu0 %v676
    %694 = vmatmul.f32.gmra.mxu0 %v673
    %v695 = vpop.f32.mrf.mxu0
    %v696 = vadd.f32 0.0, %v695
    %697 = vdwg.mxu0
    %v699 = vsel %vm200, %v626, 0
    %v702 = vsel %vm200, %v663, 0
    %704 = vmatpush.xpose.msra.mxu0 0.0
    %705 = vmatpush.xpose.msra.mxu0 0.0
    %706 = vmatpush.xpose.msra.mxu0 0.0
    %707 = vmatpush.xpose.msra.mxu0 0.0
    %708 = vmatpush.xpose.msra.mxu0 0.0
    %709 = vmatpush.xpose.msra.mxu0 0.0
    %710 = vmatpush.xpose.msra.mxu0 0.0
    %711 = vmatpush.xpose.msra.mxu0 0.0
    %712 = vmatpush.xpose.msra.mxu0 0.0
    %713 = vmatpush.xpose.msra.mxu0 0.0
    %714 = vmatpush.xpose.msra.mxu0 0.0
    %715 = vmatpush.xpose.msra.mxu0 0.0
    %716 = vmatpush.xpose.msra.mxu0 0.0
    %717 = vmatpush.xpose.msra.mxu0 0.0
    %718 = vmatpush.xpose.msra.mxu0 0.0
    %719 = vmatpush.xpose.msra.mxu0 %v702
    %720 = vmatmul.f32.gmra.mxu0 %v699
    %v721 = vpop.f32.mrf.mxu0
    %v722 = vadd.f32 0.0, %v721
    %723 = vdwg.mxu0
    %v724 = vmul.f32 %v696, 0.25
    %v725 = vmul.f32 %v722, 0.25
    %v726 = vadd.f32 %v724, %v150
    %v727 = vadd.f32 %v725, %v151
    %v728 = vsel %vm256, %v726, -inf
    %729 = vmax.xlane.f32.xlu0 %v728
    %v730 = vpop.xlane.xlu0 %729
    %v731 = vsel %vm256, %v727, -inf
    %732 = vmax.xlane.f32.xlu0 %v731
    %v733 = vpop.xlane.xlu0 %732
    %v734 = vsub.f32 %v726, %v730
    %v735 = vsub.f32 %v727, %v733
    %v736 = vmul.f32 %v734, 1.442695
    %v737 = vpow.pop %v736
    %v738 = vmul.f32 %v735, 1.442695
    %v739 = vpow.pop %v738
    %v740 = vsel %vm256, %v737, 0.0
    %741 = vadd.xlane.f32.xlu0 %v740
    %v742 = vpop.xlane.xlu0 %741
    %v743 = vsel %vm256, %v739, 0.0
    %744 = vadd.xlane.f32.xlu0 %v743
    %v745 = vpop.xlane.xlu0 %744
    %v746 = vrcp.pop %v742
    %v747 = vrcp.pop %v745
    %v748 = vmul.f32 %v737, %v746
    %v749 = vmul.f32 %v739, %v747
    %750 = vrot.lane.b32.xlu0 %v660, 96
    %v751 = vpop.permute.xlu0 %750
    %v754 = vsel %vm256, %v748, 0
    %756 = vmatpush.msra.mxu0 0.0
    %757 = vmatpush.msra.mxu0 0.0
    %758 = vmatpush.msra.mxu0 0.0
    %759 = vmatpush.msra.mxu0 0.0
    %760 = vmatpush.msra.mxu0 0.0
    %761 = vmatpush.msra.mxu0 0.0
    %762 = vmatpush.msra.mxu0 0.0
    %763 = vmatpush.msra.mxu0 0.0
    %764 = vmatpush.msra.mxu0 0.0
    %765 = vmatpush.msra.mxu0 0.0
    %766 = vmatpush.msra.mxu0 0.0
    %767 = vmatpush.msra.mxu0 0.0
    %768 = vmatpush.msra.mxu0 0.0
    %769 = vmatpush.msra.mxu0 0.0
    %770 = vmatpush.msra.mxu0 0.0
    %771 = vmatpush.msra.mxu0 %v751
    %772 = vmatmul.f32.gmra.mxu0 %v754
    %v773 = vpop.f32.mrf.mxu0
    %v774 = vadd.f32 0.0, %v773
    %775 = vdwg.mxu0
    %776 = vrot.lane.b32.xlu0 %v663, 96
    %v777 = vpop.permute.xlu0 %776
    %v780 = vsel %vm256, %v749, 0
    %782 = vmatpush.msra.mxu0 0.0
    %783 = vmatpush.msra.mxu0 0.0
    %784 = vmatpush.msra.mxu0 0.0
    %785 = vmatpush.msra.mxu0 0.0
    %786 = vmatpush.msra.mxu0 0.0
    %787 = vmatpush.msra.mxu0 0.0
    %788 = vmatpush.msra.mxu0 0.0
    %789 = vmatpush.msra.mxu0 0.0
    %790 = vmatpush.msra.mxu0 0.0
    %791 = vmatpush.msra.mxu0 0.0
    %792 = vmatpush.msra.mxu0 0.0
    %793 = vmatpush.msra.mxu0 0.0
    %794 = vmatpush.msra.mxu0 0.0
    %795 = vmatpush.msra.mxu0 0.0
    %796 = vmatpush.msra.mxu0 0.0
    %797 = vmatpush.msra.mxu0 %v777
    %798 = vmatmul.f32.gmra.mxu0 %v780
    %v799 = vpop.f32.mrf.mxu0
    %v800 = vadd.f32 0.0, %v799
    %801 = vdwg.mxu0
    %802 = vrot.lane.b32.xlu0 %v623, 112
    %v803 = vpop.permute.xlu0 %802
    %804 = vrot.lane.b32.xlu0 %v660, 112
    %v805 = vpop.permute.xlu0 %804
    %v806 = vsel %vm200, %v803, 0
    %v808 = vsel %vm200, %v805, 0
    %810 = vmatpush.xpose.msra.mxu0 0.0
    %811 = vmatpush.xpose.msra.mxu0 0.0
    %812 = vmatpush.xpose.msra.mxu0 0.0
    %813 = vmatpush.xpose.msra.mxu0 0.0
    %814 = vmatpush.xpose.msra.mxu0 0.0
    %815 = vmatpush.xpose.msra.mxu0 0.0
    %816 = vmatpush.xpose.msra.mxu0 0.0
    %817 = vmatpush.xpose.msra.mxu0 0.0
    %818 = vmatpush.xpose.msra.mxu0 0.0
    %819 = vmatpush.xpose.msra.mxu0 0.0
    %820 = vmatpush.xpose.msra.mxu0 0.0
    %821 = vmatpush.xpose.msra.mxu0 0.0
    %822 = vmatpush.xpose.msra.mxu0 0.0
    %823 = vmatpush.xpose.msra.mxu0 0.0
    %824 = vmatpush.xpose.msra.mxu0 0.0
    %825 = vmatpush.xpose.msra.mxu0 %v808
    %826 = vmatmul.f32.gmra.mxu0 %v806
    %v827 = vpop.f32.mrf.mxu0
    %v828 = vadd.f32 0.0, %v827
    %829 = vdwg.mxu0
    %830 = vrot.lane.b32.xlu0 %v626, 112
    %v831 = vpop.permute.xlu0 %830
    %832 = vrot.lane.b32.xlu0 %v663, 112
    %v833 = vpop.permute.xlu0 %832
    %v834 = vsel %vm200, %v831, 0
    %v836 = vsel %vm200, %v833, 0
    %838 = vmatpush.xpose.msra.mxu0 0.0
    %839 = vmatpush.xpose.msra.mxu0 0.0
    %840 = vmatpush.xpose.msra.mxu0 0.0
    %841 = vmatpush.xpose.msra.mxu0 0.0
    %842 = vmatpush.xpose.msra.mxu0 0.0
    %843 = vmatpush.xpose.msra.mxu0 0.0
    %844 = vmatpush.xpose.msra.mxu0 0.0
    %845 = vmatpush.xpose.msra.mxu0 0.0
    %846 = vmatpush.xpose.msra.mxu0 0.0
    %847 = vmatpush.xpose.msra.mxu0 0.0
    %848 = vmatpush.xpose.msra.mxu0 0.0
    %849 = vmatpush.xpose.msra.mxu0 0.0
    %850 = vmatpush.xpose.msra.mxu0 0.0
    %851 = vmatpush.xpose.msra.mxu0 0.0
    %852 = vmatpush.xpose.msra.mxu0 0.0
    %853 = vmatpush.xpose.msra.mxu0 %v836
    %854 = vmatmul.f32.gmra.mxu0 %v834
    %v855 = vpop.f32.mrf.mxu0
    %v856 = vadd.f32 0.0, %v855
    %857 = vdwg.mxu0
    %v858 = vmul.f32 %v828, 0.25
    %v859 = vmul.f32 %v856, 0.25
    %v860 = vadd.f32 %v858, %v150
    %v861 = vadd.f32 %v859, %v151
    %v862 = vsel %vm256, %v860, -inf
    %863 = vmax.xlane.f32.xlu0 %v862
    %v864 = vpop.xlane.xlu0 %863
    %v865 = vsel %vm256, %v861, -inf
    %866 = vmax.xlane.f32.xlu0 %v865
    %v867 = vpop.xlane.xlu0 %866
    %v868 = vsub.f32 %v860, %v864
    %v869 = vsub.f32 %v861, %v867
    %v870 = vmul.f32 %v868, 1.442695
    %v871 = vpow.pop %v870
    %v872 = vmul.f32 %v869, 1.442695
    %v873 = vpow.pop %v872
    %v874 = vsel %vm256, %v871, 0.0
    %875 = vadd.xlane.f32.xlu0 %v874
    %v876 = vpop.xlane.xlu0 %875
    %v877 = vsel %vm256, %v873, 0.0
    %878 = vadd.xlane.f32.xlu0 %v877
    %v879 = vpop.xlane.xlu0 %878
    %v880 = vrcp.pop %v876
    %v881 = vrcp.pop %v879
    %v882 = vmul.f32 %v871, %v880
    %v883 = vmul.f32 %v873, %v881
    %884 = vrot.lane.b32.xlu0 %v660, 80
    %v885 = vpop.permute.xlu0 %884
    %v888 = vsel %vm256, %v882, 0
    %890 = vmatpush.msra.mxu0 0.0
    %891 = vmatpush.msra.mxu0 0.0
    %892 = vmatpush.msra.mxu0 0.0
    %893 = vmatpush.msra.mxu0 0.0
    %894 = vmatpush.msra.mxu0 0.0
    %895 = vmatpush.msra.mxu0 0.0
    %896 = vmatpush.msra.mxu0 0.0
    %897 = vmatpush.msra.mxu0 0.0
    %898 = vmatpush.msra.mxu0 0.0
    %899 = vmatpush.msra.mxu0 0.0
    %900 = vmatpush.msra.mxu0 0.0
    %901 = vmatpush.msra.mxu0 0.0
    %902 = vmatpush.msra.mxu0 0.0
    %903 = vmatpush.msra.mxu0 0.0
    %904 = vmatpush.msra.mxu0 0.0
    %905 = vmatpush.msra.mxu0 %v885
    %906 = vmatmul.f32.gmra.mxu0 %v888
    %v907 = vpop.f32.mrf.mxu0
    %v908 = vadd.f32 0.0, %v907
    %909 = vdwg.mxu0
    %910 = vrot.lane.b32.xlu0 %v663, 80
    %v911 = vpop.permute.xlu0 %910
    %v914 = vsel %vm256, %v883, 0
    %916 = vmatpush.msra.mxu0 0.0
    %917 = vmatpush.msra.mxu0 0.0
    %918 = vmatpush.msra.mxu0 0.0
    %919 = vmatpush.msra.mxu0 0.0
    %920 = vmatpush.msra.mxu0 0.0
    %921 = vmatpush.msra.mxu0 0.0
    %922 = vmatpush.msra.mxu0 0.0
    %923 = vmatpush.msra.mxu0 0.0
    %924 = vmatpush.msra.mxu0 0.0
    %925 = vmatpush.msra.mxu0 0.0
    %926 = vmatpush.msra.mxu0 0.0
    %927 = vmatpush.msra.mxu0 0.0
    %928 = vmatpush.msra.mxu0 0.0
    %929 = vmatpush.msra.mxu0 0.0
    %930 = vmatpush.msra.mxu0 0.0
    %931 = vmatpush.msra.mxu0 %v911
    %932 = vmatmul.f32.gmra.mxu0 %v914
    %v933 = vpop.f32.mrf.mxu0
    %v934 = vadd.f32 0.0, %v933
    %935 = vdwg.mxu0
    %v937 = vsel %vm200, %v908, 0
    %v940 = vsel %vm200, %v934, 0
    %942 = vmatpush.msra.mxu0 0.0
    %943 = vmatpush.msra.mxu0 0.0
    %944 = vmatpush.msra.mxu0 0.0
    %945 = vmatpush.msra.mxu0 0.0
    %946 = vmatpush.msra.mxu0 0.0
    %947 = vmatpush.msra.mxu0 0.0
    %948 = vmatpush.msra.mxu0 0.0
    %949 = vmatpush.msra.mxu0 0.0
    %950 = vmatpush.msra.mxu0 0.0
    %951 = vmatpush.msra.mxu0 0.0
    %952 = vmatpush.msra.mxu0 0.0
    %953 = vmatpush.msra.mxu0 0.0
    %954 = vmatpush.msra.mxu0 0.0
    %955 = vmatpush.msra.mxu0 0.0
    %956 = vmatpush.msra.mxu0 %v668
    %957 = vmatpush.msra.mxu0 %v667
    %958 = vmatmul.f32.gmra.mxu0 %v937
    %v959 = vpop.f32.mrf.mxu0
    %v960 = vadd.f32 0.0, %v959
    %961 = vmatmul.f32.gmra.mxu0 %v940
    %v962 = vpop.f32.mrf.mxu0
    %v963 = vadd.f32 0.0, %v962
    %964 = vdwg.mxu0
    %v966 = vsel %vm200, %v774, 0
    %v969 = vsel %vm200, %v800, 0
    %971 = vmatpush.msra.mxu0 0.0
    %972 = vmatpush.msra.mxu0 0.0
    %973 = vmatpush.msra.mxu0 0.0
    %974 = vmatpush.msra.mxu0 0.0
    %975 = vmatpush.msra.mxu0 0.0
    %976 = vmatpush.msra.mxu0 0.0
    %977 = vmatpush.msra.mxu0 0.0
    %978 = vmatpush.msra.mxu0 0.0
    %979 = vmatpush.msra.mxu0 0.0
    %980 = vmatpush.msra.mxu0 0.0
    %981 = vmatpush.msra.mxu0 0.0
    %982 = vmatpush.msra.mxu0 0.0
    %983 = vmatpush.msra.mxu0 0.0
    %984 = vmatpush.msra.mxu0 0.0
    %985 = vmatpush.msra.mxu0 %v666
    %986 = vmatpush.msra.mxu0 %v665
    %987 = vmatmul.f32.gmra.mxu0 %v966
    %v988 = vpop.f32.mrf.mxu0
    %v989 = vadd.f32 %v960, %v988
    %990 = vmatmul.f32.gmra.mxu0 %v969
    %v991 = vpop.f32.mrf.mxu0
    %v992 = vadd.f32 %v963, %v991
    %993 = vdwg.mxu0
    %v995 = vperm.slane %v669, 0
    %v997 = vadd.f32 %v989, %v995
    %v998 = vadd.f32 %v992, %v995
    %v999 = vadd.f32 %v997, %v589
    %v1000 = vadd.f32 %v998, %v590
    %v1001 = vsel %vm160, %v999, 0.0
    %1002 = vadd.xlane.f32.xlu0 %v1001
    %v1003 = vpop.xlane.xlu0 %1002
    %v1004 = vsel %vm160, %v1000, 0.0
    %1005 = vadd.xlane.f32.xlu0 %v1004
    %v1006 = vpop.xlane.xlu0 %1005
    %v1007 = vmul.f32 %v1003, %v542
    %v1008 = vmul.f32 %v1006, %v542
    %v1009 = vsub.f32 %v999, %v1007
    %v1010 = vsub.f32 %v1000, %v1008
    %v1011 = vmul.f32 %v1009, %v1009
    %v1012 = vmul.f32 %v1010, %v1010
    %v1013 = vsel %vm160, %v1011, 0.0
    %1014 = vadd.xlane.f32.xlu0 %v1013
    %v1015 = vpop.xlane.xlu0 %1014
    %v1016 = vsel %vm160, %v1012, 0.0
    %1017 = vadd.xlane.f32.xlu0 %v1016
    %v1018 = vpop.xlane.xlu0 %1017
    %v1019 = vmul.f32 %v1015, %v542
    %v1020 = vmul.f32 %v1018, %v542
    %v1021 = vadd.f32 %v1019, 1e-05
    %v1022 = vadd.f32 %v1020, 1e-05
    %v1023 = vrsqrt.pop %v1021
    %v1024 = vmul.f32 %v1023, %v1021
    %v1025 = vmul.f32 %v1024, %v1023
    %v1026 = vmul.f32 0.5, %v1025
    %v1027 = vsub.f32 1.5, %v1026
    %v1028 = vmul.f32 %v1023, %v1027
    %vm1029 = vweird.f32 %v1021
    %vm1030 = vweird.f32 %v1023
    %vm1031 = vmor %vm1029, %vm1030
    %v1032 = vsel %vm1031, %v1023, %v1028
    %v1033 = vrsqrt.pop %v1022
    %v1034 = vmul.f32 %v1033, %v1022
    %v1035 = vmul.f32 %v1034, %v1033
    %v1036 = vmul.f32 0.5, %v1035
    %v1037 = vsub.f32 1.5, %v1036
    %v1038 = vmul.f32 %v1033, %v1037
    %vm1039 = vweird.f32 %v1022
    %vm1040 = vweird.f32 %v1033
    %vm1041 = vmor %vm1039, %vm1040
    %v1042 = vsel %vm1041, %v1033, %v1038
    %v1043 = vmul.f32 %v1009, %v1032
    %v1044 = vmul.f32 %v1010, %v1042
    %v1046 = vperm.slane %v670, 0
    %v1048 = vmul.f32 %v1043, %v1046
    %v1049 = vmul.f32 %v1044, %v1046
    %v1051 = vperm.slane %v671, 0
    %v1053 = vadd.f32 %v1048, %v1051
    %v1054 = vadd.f32 %v1049, %v1051
    %v1055 = vld [vmem:[%s18] sm:$0xff]
    %v1056 = vld [vmem:[%s18 + $0x8] sm:$0xff]
    %v1057 = vld [vmem:[%s18 + $0x10] sm:$0xff]
    %v1058 = vld [vmem:[%s18 + $0x18] sm:$0xff]
    %v1059 = vld [vmem:[#allocation2] sm:$0x1]
    %v1060 = vld [vmem:[%s20] sm:$0xff]
    %v1061 = vld [vmem:[%s20 + $0x8] sm:$0xff]
    %v1062 = vld [vmem:[%s20 + $0x10] sm:$0xff]
    %v1063 = vld [vmem:[%s20 + $0x18] sm:$0xff]
    %v1064 = vld [vmem:[%s20 + $0x20] sm:$0xff]
    %v1065 = vld [vmem:[%s20 + $0x28] sm:$0xff]
    %v1066 = vld [vmem:[%s20 + $0x30] sm:$0xff]
    %v1067 = vld [vmem:[%s20 + $0x38] sm:$0xff]
    %v1068 = vld [vmem:[#allocation5] sm:$0x1]
    %v1069 = vld [vmem:[#allocation7] sm:$0x1]
    %v1070 = vld [vmem:[#allocation8] sm:$0x1]
    %v1072 = vperm.slane %v1059, 0
    %v1075 = vsel %vm160, %v1053, 0
    %v1078 = vsel %vm160, %v1054, 0
    %1080 = vmatpush.msra.mxu0 0.0
    %1081 = vmatpush.msra.mxu0 0.0
    %1082 = vmatpush.msra.mxu0 0.0
    %1083 = vmatpush.msra.mxu0 0.0
    %1084 = vmatpush.msra.mxu0 0.0
    %1085 = vmatpush.msra.mxu0 0.0
    %1086 = vmatpush.msra.mxu0 0.0
    %1087 = vmatpush.msra.mxu0 0.0
    %1088 = vmatpush.msra.mxu0 0.0
    %1089 = vmatpush.msra.mxu0 0.0
    %1090 = vmatpush.msra.mxu0 0.0
    %1091 = vmatpush.msra.mxu0 0.0
    %1092 = vmatpush.msra.mxu0 %v1058
    %1093 = vmatpush.msra.mxu0 %v1057
    %1094 = vmatpush.msra.mxu0 %v1056
    %1095 = vmatpush.msra.mxu0 %v1055
    %1096 = vmatmul.f32.gmra.mxu0 %v1075
    %v1097 = vpop.f32.mrf.mxu0
    %v1098 = vadd.f32 %v1072, %v1097
    %1099 = vmatmul.f32.gmra.mxu0 %v1078
    %v1100 = vpop.f32.mrf.mxu0
    %v1101 = vadd.f32 %v1072, %v1100
    %1102 = vdwg.mxu0
    %v1103 = vmul.f32 %v1098, 0.5
    %v1104 = vmul.f32 %v1101, 0.5
    %v1105 = vmul.f32 %v1098, 0.044715
    %v1106 = vmul.f32 %v1101, 0.044715
    %v1107 = vmul.f32 %v1105, %v1098
    %v1108 = vmul.f32 %v1106, %v1101
    %v1109 = vmul.f32 %v1107, %v1098
    %v1110 = vmul.f32 %v1108, %v1101
    %v1111 = vadd.f32 %v1098, %v1109
    %v1112 = vadd.f32 %v1101, %v1110
    %v1113 = vmul.f32 %v1111, 0.7978846
    %v1114 = vmul.f32 %v1112, 0.7978846
    %v1115 = vtanh.pop %v1113
    %v1116 = vtanh.pop %v1114
    %v1117 = vadd.f32 %v1115, 1.0
    %v1118 = vadd.f32 %v1116, 1.0
    %v1119 = vmul.f32 %v1103, %v1117
    %v1120 = vmul.f32 %v1104, %v1118
    %v1122 = vperm.slane %v1068, 0
    %vm1124 = vcmask 523264
    %v1126 = vsel %vm1124, %v1119, 0
    %v1129 = vsel %vm1124, %v1120, 0
    %1131 = vmatpush.msra.mxu0 0.0
    %1132 = vmatpush.msra.mxu0 0.0
    %1133 = vmatpush.msra.mxu0 0.0
    %1134 = vmatpush.msra.mxu0 0.0
    %1135 = vmatpush.msra.mxu0 0.0
    %1136 = vmatpush.msra.mxu0 0.0
    %1137 = vmatpush.msra.mxu0 0.0
    %1138 = vmatpush.msra.mxu0 0.0
    %1139 = vmatpush.msra.mxu0 %v1067
    %1140 = vmatpush.msra.mxu0 %v1066
    %1141 = vmatpush.msra.mxu0 %v1065
    %1142 = vmatpush.msra.mxu0 %v1064
    %1143 = vmatpush.msra.mxu0 %v1063
    %1144 = vmatpush.msra.mxu0 %v1062
    %1145 = vmatpush.msra.mxu0 %v1061
    %1146 = vmatpush.msra.mxu0 %v1060
    %1147 = vmatmul.f32.gmra.mxu0 %v1126
    %v1148 = vpop.f32.mrf.mxu0
    %v1149 = vadd.f32 %v1122, %v1148
    %1150 = vmatmul.f32.gmra.mxu0 %v1129
    %v1151 = vpop.f32.mrf.mxu0
    %v1152 = vadd.f32 %v1122, %v1151
    %1153 = vdwg.mxu0
    %v1154 = vadd.f32 %v1149, %v1053
    %v1155 = vadd.f32 %v1152, %v1054
    %v1156 = vsel %vm160, %v1154, 0.0
    %1157 = vadd.xlane.f32.xlu0 %v1156
    %v1158 = vpop.xlane.xlu0 %1157
    %v1159 = vsel %vm160, %v1155, 0.0
    %1160 = vadd.xlane.f32.xlu0 %v1159
    %v1161 = vpop.xlane.xlu0 %1160
    %v1162 = vmul.f32 %v1158, %v542
    %v1163 = vmul.f32 %v1161, %v542
    %v1164 = vsub.f32 %v1154, %v1162
    %v1165 = vsub.f32 %v1155, %v1163
    %v1166 = vmul.f32 %v1164, %v1164
    %v1167 = vmul.f32 %v1165, %v1165
    %v1168 = vsel %vm160, %v1166, 0.0
    %1169 = vadd.xlane.f32.xlu0 %v1168
    %v1170 = vpop.xlane.xlu0 %1169
    %v1171 = vsel %vm160, %v1167, 0.0
    %1172 = vadd.xlane.f32.xlu0 %v1171
    %v1173 = vpop.xlane.xlu0 %1172
    %v1174 = vmul.f32 %v1170, %v542
    %v1175 = vmul.f32 %v1173, %v542
    %v1176 = vadd.f32 %v1174, 1e-05
    %v1177 = vadd.f32 %v1175, 1e-05
    %v1178 = vrsqrt.pop %v1176
    %v1179 = vmul.f32 %v1178, %v1176
    %v1180 = vmul.f32 %v1179, %v1178
    %v1181 = vmul.f32 0.5, %v1180
    %v1182 = vsub.f32 1.5, %v1181
    %v1183 = vmul.f32 %v1178, %v1182
    %vm1184 = vweird.f32 %v1176
    %vm1185 = vweird.f32 %v1178
    %vm1186 = vmor %vm1184, %vm1185
    %v1187 = vsel %vm1186, %v1178, %v1183
    %v1188 = vrsqrt.pop %v1177
    %v1189 = vmul.f32 %v1188, %v1177
    %v1190 = vmul.f32 %v1189, %v1188
    %v1191 = vmul.f32 0.5, %v1190
    %v1192 = vsub.f32 1.5, %v1191
    %v1193 = vmul.f32 %v1188, %v1192
    %vm1194 = vweird.f32 %v1177
    %vm1195 = vweird.f32 %v1188
    %vm1196 = vmor %vm1194, %vm1195
    %v1197 = vsel %vm1196, %v1188, %v1193
    %v1198 = vmul.f32 %v1164, %v1187
    %v1199 = vmul.f32 %v1165, %v1197
    %v1201 = vperm.slane %v1069, 0
    %v1203 = vmul.f32 %v1198, %v1201
    %v1204 = vmul.f32 %v1199, %v1201
    %v1206 = vperm.slane %v1070, 0
    %v1208 = vadd.f32 %v1203, %v1206
    %v1209 = vadd.f32 %v1204, %v1206
    %1210 = vst.msk [vmem:[%s25] sm:$0xff] %vm256, %v277
    %1211 = vst.msk [vmem:[%s25 + $0x8] sm:$0xff] %vm256, %v411
    %1212 = vst.msk [vmem:[%s25 + $0x10] sm:$0xff] %vm256, %v278
    %1213 = vst.msk [vmem:[%s25 + $0x18] sm:$0xff] %vm256, %v412
    %1214 = vst.msk [vmem:[%s26] sm:$0xff] %vm256, %v748
    %1215 = vst.msk [vmem:[%s26 + $0x8] sm:$0xff] %vm256, %v882
    %1216 = vst.msk [vmem:[%s26 + $0x10] sm:$0xff] %vm256, %v749
    %1217 = vst.msk [vmem:[%s26 + $0x18] sm:$0xff] %vm256, %v883
    %s1218 = scalar_lea.vmem %s4, 32
    %v1219 = vld [vmem:[%s1218] sm:$0xff]
    %v1220 = vld [vmem:[%s1218 + $0x8] sm:$0xff]
    %v1221 = vld [vmem:[%s1218 + $0x10] sm:$0xff]
    %v1222 = vld [vmem:[%s1218 + $0x18] sm:$0xff]
    %s1223 = scalar_lea.vmem %s5, 1
    %v1224 = vld [vmem:[%s1223] sm:$0x1]
    %v1226 = vperm.slane %v1224, 0
    %v1229 = vsel %vm160, %v1208, 0
    %v1232 = vsel %vm160, %v1209, 0
    %1234 = vmatpush.msra.mxu0 0.0
    %1235 = vmatpush.msra.mxu0 0.0
    %1236 = vmatpush.msra.mxu0 0.0
    %1237 = vmatpush.msra.mxu0 0.0
    %1238 = vmatpush.msra.mxu0 0.0
    %1239 = vmatpush.msra.mxu0 0.0
    %1240 = vmatpush.msra.mxu0 0.0
    %1241 = vmatpush.msra.mxu0 0.0
    %1242 = vmatpush.msra.mxu0 0.0
    %1243 = vmatpush.msra.mxu0 0.0
    %1244 = vmatpush.msra.mxu0 0.0
    %1245 = vmatpush.msra.mxu0 0.0
    %1246 = vmatpush.msra.mxu0 %v1222
    %1247 = vmatpush.msra.mxu0 %v1221
    %1248 = vmatpush.msra.mxu0 %v1220
    %1249 = vmatpush.msra.mxu0 %v1219
    %1250 = vmatmul.f32.gmra.mxu0 %v1229
    %v1251 = vpop.f32.mrf.mxu0
    %v1252 = vadd.f32 %v1226, %v1251
    %1253 = vmatmul.f32.gmra.mxu0 %v1232
    %v1254 = vpop.f32.mrf.mxu0
    %v1255 = vadd.f32 %v1226, %v1254
    %1256 = vdwg.mxu0
    %s1257 = scalar_lea.vmem %s6, 32
    %v1258 = vld [vmem:[%s1257] sm:$0xff]
    %v1259 = vld [vmem:[%s1257 + $0x8] sm:$0xff]
    %v1260 = vld [vmem:[%s1257 + $0x10] sm:$0xff]
    %v1261 = vld [vmem:[%s1257 + $0x18] sm:$0xff]
    %s1262 = scalar_lea.vmem %s7, 1
    %v1263 = vld [vmem:[%s1262] sm:$0x1]
    %s1264 = scalar_lea.vmem %s8, 1
    %v1265 = vld [vmem:[%s1264] sm:$0x1]
    %s1266 = scalar_lea.vmem %s9, 1
    %v1267 = vld [vmem:[%s1266] sm:$0x1]
    %1269 = vrot.lane.b32.xlu0 %v1252, 96
    %v1270 = vpop.permute.xlu0 %1269
    %v1271 = vsel %vm200, %v1252, 0
    %v1273 = vsel %vm200, %v1270, 0
    %1275 = vmatpush.xpose.msra.mxu0 0.0
    %1276 = vmatpush.xpose.msra.mxu0 0.0
    %1277 = vmatpush.xpose.msra.mxu0 0.0
    %1278 = vmatpush.xpose.msra.mxu0 0.0
    %1279 = vmatpush.xpose.msra.mxu0 0.0
    %1280 = vmatpush.xpose.msra.mxu0 0.0
    %1281 = vmatpush.xpose.msra.mxu0 0.0
    %1282 = vmatpush.xpose.msra.mxu0 0.0
    %1283 = vmatpush.xpose.msra.mxu0 0.0
    %1284 = vmatpush.xpose.msra.mxu0 0.0
    %1285 = vmatpush.xpose.msra.mxu0 0.0
    %1286 = vmatpush.xpose.msra.mxu0 0.0
    %1287 = vmatpush.xpose.msra.mxu0 0.0
    %1288 = vmatpush.xpose.msra.mxu0 0.0
    %1289 = vmatpush.xpose.msra.mxu0 0.0
    %1290 = vmatpush.xpose.msra.mxu0 %v1273
    %1291 = vmatmul.f32.gmra.mxu0 %v1271
    %v1292 = vpop.f32.mrf.mxu0
    %v1293 = vadd.f32 0.0, %v1292
    %1294 = vdwg.mxu0
    %1296 = vrot.lane.b32.xlu0 %v1255, 96
    %v1297 = vpop.permute.xlu0 %1296
    %v1298 = vsel %vm200, %v1255, 0
    %v1300 = vsel %vm200, %v1297, 0
    %1302 = vmatpush.xpose.msra.mxu0 0.0
    %1303 = vmatpush.xpose.msra.mxu0 0.0
    %1304 = vmatpush.xpose.msra.mxu0 0.0
    %1305 = vmatpush.xpose.msra.mxu0 0.0
    %1306 = vmatpush.xpose.msra.mxu0 0.0
    %1307 = vmatpush.xpose.msra.mxu0 0.0
    %1308 = vmatpush.xpose.msra.mxu0 0.0
    %1309 = vmatpush.xpose.msra.mxu0 0.0
    %1310 = vmatpush.xpose.msra.mxu0 0.0
    %1311 = vmatpush.xpose.msra.mxu0 0.0
    %1312 = vmatpush.xpose.msra.mxu0 0.0
    %1313 = vmatpush.xpose.msra.mxu0 0.0
    %1314 = vmatpush.xpose.msra.mxu0 0.0
    %1315 = vmatpush.xpose.msra.mxu0 0.0
    %1316 = vmatpush.xpose.msra.mxu0 0.0
    %1317 = vmatpush.xpose.msra.mxu0 %v1300
    %1318 = vmatmul.f32.gmra.mxu0 %v1298
    %v1319 = vpop.f32.mrf.mxu0
    %v1320 = vadd.f32 0.0, %v1319
    %1321 = vdwg.mxu0
    %v1322 = vmul.f32 %v1293, 0.25
    %v1323 = vmul.f32 %v1320, 0.25
    %v1324 = vadd.f32 %v1322, %v148
    %v1325 = vadd.f32 %v1323, %v149
    %v1326 = vsel %vm256, %v1324, -inf
    %1327 = vmax.xlane.f32.xlu0 %v1326
    %v1328 = vpop.xlane.xlu0 %1327
    %v1329 = vsel %vm256, %v1325, -inf
    %1330 = vmax.xlane.f32.xlu0 %v1329
    %v1331 = vpop.xlane.xlu0 %1330
    %v1332 = vsub.f32 %v1324, %v1328
    %v1333 = vsub.f32 %v1325, %v1331
    %v1334 = vmul.f32 %v1332, 1.442695
    %v1335 = vpow.pop %v1334
    %v1336 = vmul.f32 %v1333, 1.442695
    %v1337 = vpow.pop %v1336
    %v1338 = vsel %vm256, %v1335, 0.0
    %1339 = vadd.xlane.f32.xlu0 %v1338
    %v1340 = vpop.xlane.xlu0 %1339
    %v1341 = vsel %vm256, %v1337, 0.0
    %1342 = vadd.xlane.f32.xlu0 %v1341
    %v1343 = vpop.xlane.xlu0 %1342
    %v1344 = vrcp.pop %v1340
    %v1345 = vrcp.pop %v1343
    %v1346 = vmul.f32 %v1335, %v1344
    %v1347 = vmul.f32 %v1337, %v1345
    %1348 = vrot.lane.b32.xlu0 %v1252, 64
    %v1349 = vpop.permute.xlu0 %1348
    %v1352 = vsel %vm256, %v1346, 0
    %1354 = vmatpush.msra.mxu0 0.0
    %1355 = vmatpush.msra.mxu0 0.0
    %1356 = vmatpush.msra.mxu0 0.0
    %1357 = vmatpush.msra.mxu0 0.0
    %1358 = vmatpush.msra.mxu0 0.0
    %1359 = vmatpush.msra.mxu0 0.0
    %1360 = vmatpush.msra.mxu0 0.0
    %1361 = vmatpush.msra.mxu0 0.0
    %1362 = vmatpush.msra.mxu0 0.0
    %1363 = vmatpush.msra.mxu0 0.0
    %1364 = vmatpush.msra.mxu0 0.0
    %1365 = vmatpush.msra.mxu0 0.0
    %1366 = vmatpush.msra.mxu0 0.0
    %1367 = vmatpush.msra.mxu0 0.0
    %1368 = vmatpush.msra.mxu0 0.0
    %1369 = vmatpush.msra.mxu0 %v1349
    %1370 = vmatmul.f32.gmra.mxu0 %v1352
    %v1371 = vpop.f32.mrf.mxu0
    %v1372 = vadd.f32 0.0, %v1371
    %1373 = vdwg.mxu0
    %1374 = vrot.lane.b32.xlu0 %v1255, 64
    %v1375 = vpop.permute.xlu0 %1374
    %v1378 = vsel %vm256, %v1347, 0
    %1380 = vmatpush.msra.mxu0 0.0
    %1381 = vmatpush.msra.mxu0 0.0
    %1382 = vmatpush.msra.mxu0 0.0
    %1383 = vmatpush.msra.mxu0 0.0
    %1384 = vmatpush.msra.mxu0 0.0
    %1385 = vmatpush.msra.mxu0 0.0
    %1386 = vmatpush.msra.mxu0 0.0
    %1387 = vmatpush.msra.mxu0 0.0
    %1388 = vmatpush.msra.mxu0 0.0
    %1389 = vmatpush.msra.mxu0 0.0
    %1390 = vmatpush.msra.mxu0 0.0
    %1391 = vmatpush.msra.mxu0 0.0
    %1392 = vmatpush.msra.mxu0 0.0
    %1393 = vmatpush.msra.mxu0 0.0
    %1394 = vmatpush.msra.mxu0 0.0
    %1395 = vmatpush.msra.mxu0 %v1375
    %1396 = vmatmul.f32.gmra.mxu0 %v1378
    %v1397 = vpop.f32.mrf.mxu0
    %v1398 = vadd.f32 0.0, %v1397
    %1399 = vdwg.mxu0
    %1400 = vrot.lane.b32.xlu0 %v1252, 112
    %v1401 = vpop.permute.xlu0 %1400
    %1402 = vrot.lane.b32.xlu0 %v1252, 80
    %v1403 = vpop.permute.xlu0 %1402
    %v1404 = vsel %vm200, %v1401, 0
    %v1406 = vsel %vm200, %v1403, 0
    %1408 = vmatpush.xpose.msra.mxu0 0.0
    %1409 = vmatpush.xpose.msra.mxu0 0.0
    %1410 = vmatpush.xpose.msra.mxu0 0.0
    %1411 = vmatpush.xpose.msra.mxu0 0.0
    %1412 = vmatpush.xpose.msra.mxu0 0.0
    %1413 = vmatpush.xpose.msra.mxu0 0.0
    %1414 = vmatpush.xpose.msra.mxu0 0.0
    %1415 = vmatpush.xpose.msra.mxu0 0.0
    %1416 = vmatpush.xpose.msra.mxu0 0.0
    %1417 = vmatpush.xpose.msra.mxu0 0.0
    %1418 = vmatpush.xpose.msra.mxu0 0.0
    %1419 = vmatpush.xpose.msra.mxu0 0.0
    %1420 = vmatpush.xpose.msra.mxu0 0.0
    %1421 = vmatpush.xpose.msra.mxu0 0.0
    %1422 = vmatpush.xpose.msra.mxu0 0.0
    %1423 = vmatpush.xpose.msra.mxu0 %v1406
    %1424 = vmatmul.f32.gmra.mxu0 %v1404
    %v1425 = vpop.f32.mrf.mxu0
    %v1426 = vadd.f32 0.0, %v1425
    %1427 = vdwg.mxu0
    %1428 = vrot.lane.b32.xlu0 %v1255, 112
    %v1429 = vpop.permute.xlu0 %1428
    %1430 = vrot.lane.b32.xlu0 %v1255, 80
    %v1431 = vpop.permute.xlu0 %1430
    %v1432 = vsel %vm200, %v1429, 0
    %v1434 = vsel %vm200, %v1431, 0
    %1436 = vmatpush.xpose.msra.mxu0 0.0
    %1437 = vmatpush.xpose.msra.mxu0 0.0
    %1438 = vmatpush.xpose.msra.mxu0 0.0
    %1439 = vmatpush.xpose.msra.mxu0 0.0
    %1440 = vmatpush.xpose.msra.mxu0 0.0
    %1441 = vmatpush.xpose.msra.mxu0 0.0
    %1442 = vmatpush.xpose.msra.mxu0 0.0
    %1443 = vmatpush.xpose.msra.mxu0 0.0
    %1444 = vmatpush.xpose.msra.mxu0 0.0
    %1445 = vmatpush.xpose.msra.mxu0 0.0
    %1446 = vmatpush.xpose.msra.mxu0 0.0
    %1447 = vmatpush.xpose.msra.mxu0 0.0
    %1448 = vmatpush.xpose.msra.mxu0 0.0
    %1449 = vmatpush.xpose.msra.mxu0 0.0
    %1450 = vmatpush.xpose.msra.mxu0 0.0
    %1451 = vmatpush.xpose.msra.mxu0 %v1434
    %1452 = vmatmul.f32.gmra.mxu0 %v1432
    %v1453 = vpop.f32.mrf.mxu0
    %v1454 = vadd.f32 0.0, %v1453
    %1455 = vdwg.mxu0
    %v1456 = vmul.f32 %v1426, 0.25
    %v1457 = vmul.f32 %v1454, 0.25
    %v1458 = vadd.f32 %v1456, %v148
    %v1459 = vadd.f32 %v1457, %v149
    %v1460 = vsel %vm256, %v1458, -inf
    %1461 = vmax.xlane.f32.xlu0 %v1460
    %v1462 = vpop.xlane.xlu0 %1461
    %v1463 = vsel %vm256, %v1459, -inf
    %1464 = vmax.xlane.f32.xlu0 %v1463
    %v1465 = vpop.xlane.xlu0 %1464
    %v1466 = vsub.f32 %v1458, %v1462
    %v1467 = vsub.f32 %v1459, %v1465
    %v1468 = vmul.f32 %v1466, 1.442695
    %v1469 = vpow.pop %v1468
    %v1470 = vmul.f32 %v1467, 1.442695
    %v1471 = vpow.pop %v1470
    %v1472 = vsel %vm256, %v1469, 0.0
    %1473 = vadd.xlane.f32.xlu0 %v1472
    %v1474 = vpop.xlane.xlu0 %1473
    %v1475 = vsel %vm256, %v1471, 0.0
    %1476 = vadd.xlane.f32.xlu0 %v1475
    %v1477 = vpop.xlane.xlu0 %1476
    %v1478 = vrcp.pop %v1474
    %v1479 = vrcp.pop %v1477
    %v1480 = vmul.f32 %v1469, %v1478
    %v1481 = vmul.f32 %v1471, %v1479
    %1482 = vrot.lane.b32.xlu0 %v1252, 48
    %v1483 = vpop.permute.xlu0 %1482
    %v1486 = vsel %vm256, %v1480, 0
    %1488 = vmatpush.msra.mxu0 0.0
    %1489 = vmatpush.msra.mxu0 0.0
    %1490 = vmatpush.msra.mxu0 0.0
    %1491 = vmatpush.msra.mxu0 0.0
    %1492 = vmatpush.msra.mxu0 0.0
    %1493 = vmatpush.msra.mxu0 0.0
    %1494 = vmatpush.msra.mxu0 0.0
    %1495 = vmatpush.msra.mxu0 0.0
    %1496 = vmatpush.msra.mxu0 0.0
    %1497 = vmatpush.msra.mxu0 0.0
    %1498 = vmatpush.msra.mxu0 0.0
    %1499 = vmatpush.msra.mxu0 0.0
    %1500 = vmatpush.msra.mxu0 0.0
    %1501 = vmatpush.msra.mxu0 0.0
    %1502 = vmatpush.msra.mxu0 0.0
    %1503 = vmatpush.msra.mxu0 %v1483
    %1504 = vmatmul.f32.gmra.mxu0 %v1486
    %v1505 = vpop.f32.mrf.mxu0
    %v1506 = vadd.f32 0.0, %v1505
    %1507 = vdwg.mxu0
    %1508 = vrot.lane.b32.xlu0 %v1255, 48
    %v1509 = vpop.permute.xlu0 %1508
    %v1512 = vsel %vm256, %v1481, 0
    %1514 = vmatpush.msra.mxu0 0.0
    %1515 = vmatpush.msra.mxu0 0.0
    %1516 = vmatpush.msra.mxu0 0.0
    %1517 = vmatpush.msra.mxu0 0.0
    %1518 = vmatpush.msra.mxu0 0.0
    %1519 = vmatpush.msra.mxu0 0.0
    %1520 = vmatpush.msra.mxu0 0.0
    %1521 = vmatpush.msra.mxu0 0.0
    %1522 = vmatpush.msra.mxu0 0.0
    %1523 = vmatpush.msra.mxu0 0.0
    %1524 = vmatpush.msra.mxu0 0.0
    %1525 = vmatpush.msra.mxu0 0.0
    %1526 = vmatpush.msra.mxu0 0.0
    %1527 = vmatpush.msra.mxu0 0.0
    %1528 = vmatpush.msra.mxu0 0.0
    %1529 = vmatpush.msra.mxu0 %v1509
    %1530 = vmatmul.f32.gmra.mxu0 %v1512
    %v1531 = vpop.f32.mrf.mxu0
    %v1532 = vadd.f32 0.0, %v1531
    %1533 = vdwg.mxu0
    %v1535 = vsel %vm200, %v1506, 0
    %v1538 = vsel %vm200, %v1532, 0
    %1540 = vmatpush.msra.mxu0 0.0
    %1541 = vmatpush.msra.mxu0 0.0
    %1542 = vmatpush.msra.mxu0 0.0
    %1543 = vmatpush.msra.mxu0 0.0
    %1544 = vmatpush.msra.mxu0 0.0
    %1545 = vmatpush.msra.mxu0 0.0
    %1546 = vmatpush.msra.mxu0 0.0
    %1547 = vmatpush.msra.mxu0 0.0
    %1548 = vmatpush.msra.mxu0 0.0
    %1549 = vmatpush.msra.mxu0 0.0
    %1550 = vmatpush.msra.mxu0 0.0
    %1551 = vmatpush.msra.mxu0 0.0
    %1552 = vmatpush.msra.mxu0 0.0
    %1553 = vmatpush.msra.mxu0 0.0
    %1554 = vmatpush.msra.mxu0 %v1261
    %1555 = vmatpush.msra.mxu0 %v1260
    %1556 = vmatmul.f32.gmra.mxu0 %v1535
    %v1557 = vpop.f32.mrf.mxu0
    %v1558 = vadd.f32 0.0, %v1557
    %1559 = vmatmul.f32.gmra.mxu0 %v1538
    %v1560 = vpop.f32.mrf.mxu0
    %v1561 = vadd.f32 0.0, %v1560
    %1562 = vdwg.mxu0
    %v1564 = vsel %vm200, %v1372, 0
    %v1567 = vsel %vm200, %v1398, 0
    %1569 = vmatpush.msra.mxu0 0.0
    %1570 = vmatpush.msra.mxu0 0.0
    %1571 = vmatpush.msra.mxu0 0.0
    %1572 = vmatpush.msra.mxu0 0.0
    %1573 = vmatpush.msra.mxu0 0.0
    %1574 = vmatpush.msra.mxu0 0.0
    %1575 = vmatpush.msra.mxu0 0.0
    %1576 = vmatpush.msra.mxu0 0.0
    %1577 = vmatpush.msra.mxu0 0.0
    %1578 = vmatpush.msra.mxu0 0.0
    %1579 = vmatpush.msra.mxu0 0.0
    %1580 = vmatpush.msra.mxu0 0.0
    %1581 = vmatpush.msra.mxu0 0.0
    %1582 = vmatpush.msra.mxu0 0.0
    %1583 = vmatpush.msra.mxu0 %v1259
    %1584 = vmatpush.msra.mxu0 %v1258
    %1585 = vmatmul.f32.gmra.mxu0 %v1564
    %v1586 = vpop.f32.mrf.mxu0
    %v1587 = vadd.f32 %v1558, %v1586
    %1588 = vmatmul.f32.gmra.mxu0 %v1567
    %v1589 = vpop.f32.mrf.mxu0
    %v1590 = vadd.f32 %v1561, %v1589
    %1591 = vdwg.mxu0
    %v1593 = vperm.slane %v1263, 0
    %v1595 = vadd.f32 %v1587, %v1593
    %v1596 = vadd.f32 %v1590, %v1593
    %v1597 = vadd.f32 %v1595, %v1208
    %v1598 = vadd.f32 %v1596, %v1209
    %v1599 = vsel %vm160, %v1597, 0.0
    %1600 = vadd.xlane.f32.xlu0 %v1599
    %v1601 = vpop.xlane.xlu0 %1600
    %v1602 = vsel %vm160, %v1598, 0.0
    %1603 = vadd.xlane.f32.xlu0 %v1602
    %v1604 = vpop.xlane.xlu0 %1603
    %v1605 = vmul.f32 %v1601, %v542
    %v1606 = vmul.f32 %v1604, %v542
    %v1607 = vsub.f32 %v1597, %v1605
    %v1608 = vsub.f32 %v1598, %v1606
    %v1609 = vmul.f32 %v1607, %v1607
    %v1610 = vmul.f32 %v1608, %v1608
    %v1611 = vsel %vm160, %v1609, 0.0
    %1612 = vadd.xlane.f32.xlu0 %v1611
    %v1613 = vpop.xlane.xlu0 %1612
    %v1614 = vsel %vm160, %v1610, 0.0
    %1615 = vadd.xlane.f32.xlu0 %v1614
    %v1616 = vpop.xlane.xlu0 %1615
    %v1617 = vmul.f32 %v1613, %v542
    %v1618 = vmul.f32 %v1616, %v542
    %v1619 = vadd.f32 %v1617, 1e-05
    %v1620 = vadd.f32 %v1618, 1e-05
    %v1621 = vrsqrt.pop %v1619
    %v1622 = vmul.f32 %v1621, %v1619
    %v1623 = vmul.f32 %v1622, %v1621
    %v1624 = vmul.f32 0.5, %v1623
    %v1625 = vsub.f32 1.5, %v1624
    %v1626 = vmul.f32 %v1621, %v1625
    %vm1627 = vweird.f32 %v1619
    %vm1628 = vweird.f32 %v1621
    %vm1629 = vmor %vm1627, %vm1628
    %v1630 = vsel %vm1629, %v1621, %v1626
    %v1631 = vrsqrt.pop %v1620
    %v1632 = vmul.f32 %v1631, %v1620
    %v1633 = vmul.f32 %v1632, %v1631
    %v1634 = vmul.f32 0.5, %v1633
    %v1635 = vsub.f32 1.5, %v1634
    %v1636 = vmul.f32 %v1631, %v1635
    %vm1637 = vweird.f32 %v1620
    %vm1638 = vweird.f32 %v1631
    %vm1639 = vmor %vm1637, %vm1638
    %v1640 = vsel %vm1639, %v1631, %v1636
    %v1641 = vmul.f32 %v1607, %v1630
    %v1642 = vmul.f32 %v1608, %v1640
    %v1644 = vperm.slane %v1265, 0
    %v1646 = vmul.f32 %v1641, %v1644
    %v1647 = vmul.f32 %v1642, %v1644
    %v1649 = vperm.slane %v1267, 0
    %v1651 = vadd.f32 %v1646, %v1649
    %v1652 = vadd.f32 %v1647, %v1649
    %s1653 = scalar_lea.vmem %s10, 32
    %v1654 = vld [vmem:[%s1653] sm:$0xff]
    %v1655 = vld [vmem:[%s1653 + $0x8] sm:$0xff]
    %v1656 = vld [vmem:[%s1653 + $0x10] sm:$0xff]
    %v1657 = vld [vmem:[%s1653 + $0x18] sm:$0xff]
    %s1658 = scalar_lea.vmem %s11, 1
    %v1659 = vld [vmem:[%s1658] sm:$0x1]
    %v1661 = vperm.slane %v1659, 0
    %v1664 = vsel %vm160, %v1651, 0
    %v1667 = vsel %vm160, %v1652, 0
    %1669 = vmatpush.msra.mxu0 0.0
    %1670 = vmatpush.msra.mxu0 0.0
    %1671 = vmatpush.msra.mxu0 0.0
    %1672 = vmatpush.msra.mxu0 0.0
    %1673 = vmatpush.msra.mxu0 0.0
    %1674 = vmatpush.msra.mxu0 0.0
    %1675 = vmatpush.msra.mxu0 0.0
    %1676 = vmatpush.msra.mxu0 0.0
    %1677 = vmatpush.msra.mxu0 0.0
    %1678 = vmatpush.msra.mxu0 0.0
    %1679 = vmatpush.msra.mxu0 0.0
    %1680 = vmatpush.msra.mxu0 0.0
    %1681 = vmatpush.msra.mxu0 %v1657
    %1682 = vmatpush.msra.mxu0 %v1656
    %1683 = vmatpush.msra.mxu0 %v1655
    %1684 = vmatpush.msra.mxu0 %v1654
    %1685 = vmatmul.f32.gmra.mxu0 %v1664
    %v1686 = vpop.f32.mrf.mxu0
    %v1687 = vadd.f32 %v1661, %v1686
    %1688 = vmatmul.f32.gmra.mxu0 %v1667
    %v1689 = vpop.f32.mrf.mxu0
    %v1690 = vadd.f32 %v1661, %v1689
    %1691 = vdwg.mxu0
    %s1692 = scalar_lea.vmem %s12, 32
    %v1693 = vld [vmem:[%s1692] sm:$0xff]
    %v1694 = vld [vmem:[%s1692 + $0x8] sm:$0xff]
    %v1695 = vld [vmem:[%s1692 + $0x10] sm:$0xff]
    %v1696 = vld [vmem:[%s1692 + $0x18] sm:$0xff]
    %s1697 = scalar_lea.vmem %s13, 1
    %v1698 = vld [vmem:[%s1697] sm:$0x1]
    %v1700 = vperm.slane %v1698, 0
    %1702 = vmatpush.msra.mxu0 0.0
    %1703 = vmatpush.msra.mxu0 0.0
    %1704 = vmatpush.msra.mxu0 0.0
    %1705 = vmatpush.msra.mxu0 0.0
    %1706 = vmatpush.msra.mxu0 0.0
    %1707 = vmatpush.msra.mxu0 0.0
    %1708 = vmatpush.msra.mxu0 0.0
    %1709 = vmatpush.msra.mxu0 0.0
    %1710 = vmatpush.msra.mxu0 0.0
    %1711 = vmatpush.msra.mxu0 0.0
    %1712 = vmatpush.msra.mxu0 0.0
    %1713 = vmatpush.msra.mxu0 0.0
    %1714 = vmatpush.msra.mxu0 %v1696
    %1715 = vmatpush.msra.mxu0 %v1695
    %1716 = vmatpush.msra.mxu0 %v1694
    %1717 = vmatpush.msra.mxu0 %v1693
    %1718 = vmatmul.f32.gmra.mxu0 %v637
    %v1719 = vpop.f32.mrf.mxu0
    %v1720 = vadd.f32 %v1700, %v1719
    %1721 = vmatmul.f32.gmra.mxu0 %v640
    %v1722 = vpop.f32.mrf.mxu0
    %v1723 = vadd.f32 %v1700, %v1722
    %1724 = vdwg.mxu0
    %s1725 = scalar_lea.vmem %s14, 32
    %v1726 = vld [vmem:[%s1725] sm:$0xff]
    %v1727 = vld [vmem:[%s1725 + $0x8] sm:$0xff]
    %v1728 = vld [vmem:[%s1725 + $0x10] sm:$0xff]
    %v1729 = vld [vmem:[%s1725 + $0x18] sm:$0xff]
    %s1730 = scalar_lea.vmem %s15, 1
    %v1731 = vld [vmem:[%s1730] sm:$0x1]
    %s1732 = scalar_lea.vmem %s16, 1
    %v1733 = vld [vmem:[%s1732] sm:$0x1]
    %s1734 = scalar_lea.vmem %s17, 1
    %v1735 = vld [vmem:[%s1734] sm:$0x1]
    %v1737 = vsel %vm200, %v1687, 0
    %v1740 = vsel %vm200, %v1720, 0
    %1742 = vmatpush.xpose.msra.mxu0 0.0
    %1743 = vmatpush.xpose.msra.mxu0 0.0
    %1744 = vmatpush.xpose.msra.mxu0 0.0
    %1745 = vmatpush.xpose.msra.mxu0 0.0
    %1746 = vmatpush.xpose.msra.mxu0 0.0
    %1747 = vmatpush.xpose.msra.mxu0 0.0
    %1748 = vmatpush.xpose.msra.mxu0 0.0
    %1749 = vmatpush.xpose.msra.mxu0 0.0
    %1750 = vmatpush.xpose.msra.mxu0 0.0
    %1751 = vmatpush.xpose.msra.mxu0 0.0
    %1752 = vmatpush.xpose.msra.mxu0 0.0
    %1753 = vmatpush.xpose.msra.mxu0 0.0
    %1754 = vmatpush.xpose.msra.mxu0 0.0
    %1755 = vmatpush.xpose.msra.mxu0 0.0
    %1756 = vmatpush.xpose.msra.mxu0 0.0
    %1757 = vmatpush.xpose.msra.mxu0 %v1740
    %1758 = vmatmul.f32.gmra.mxu0 %v1737
    %v1759 = vpop.f32.mrf.mxu0
    %v1760 = vadd.f32 0.0, %v1759
    %1761 = vdwg.mxu0
    %v1763 = vsel %vm200, %v1690, 0
    %v1766 = vsel %vm200, %v1723, 0
    %1768 = vmatpush.xpose.msra.mxu0 0.0
    %1769 = vmatpush.xpose.msra.mxu0 0.0
    %1770 = vmatpush.xpose.msra.mxu0 0.0
    %1771 = vmatpush.xpose.msra.mxu0 0.0
    %1772 = vmatpush.xpose.msra.mxu0 0.0
    %1773 = vmatpush.xpose.msra.mxu0 0.0
    %1774 = vmatpush.xpose.msra.mxu0 0.0
    %1775 = vmatpush.xpose.msra.mxu0 0.0
    %1776 = vmatpush.xpose.msra.mxu0 0.0
    %1777 = vmatpush.xpose.msra.mxu0 0.0
    %1778 = vmatpush.xpose.msra.mxu0 0.0
    %1779 = vmatpush.xpose.msra.mxu0 0.0
    %1780 = vmatpush.xpose.msra.mxu0 0.0
    %1781 = vmatpush.xpose.msra.mxu0 0.0
    %1782 = vmatpush.xpose.msra.mxu0 0.0
    %1783 = vmatpush.xpose.msra.mxu0 %v1766
    %1784 = vmatmul.f32.gmra.mxu0 %v1763
    %v1785 = vpop.f32.mrf.mxu0
    %v1786 = vadd.f32 0.0, %v1785
    %1787 = vdwg.mxu0
    %v1788 = vmul.f32 %v1760, 0.25
    %v1789 = vmul.f32 %v1786, 0.25
    %v1790 = vadd.f32 %v1788, %v150
    %v1791 = vadd.f32 %v1789, %v151
    %v1792 = vsel %vm256, %v1790, -inf
    %1793 = vmax.xlane.f32.xlu0 %v1792
    %v1794 = vpop.xlane.xlu0 %1793
    %v1795 = vsel %vm256, %v1791, -inf
    %1796 = vmax.xlane.f32.xlu0 %v1795
    %v1797 = vpop.xlane.xlu0 %1796
    %v1798 = vsub.f32 %v1790, %v1794
    %v1799 = vsub.f32 %v1791, %v1797
    %v1800 = vmul.f32 %v1798, 1.442695
    %v1801 = vpow.pop %v1800
    %v1802 = vmul.f32 %v1799, 1.442695
    %v1803 = vpow.pop %v1802
    %v1804 = vsel %vm256, %v1801, 0.0
    %1805 = vadd.xlane.f32.xlu0 %v1804
    %v1806 = vpop.xlane.xlu0 %1805
    %v1807 = vsel %vm256, %v1803, 0.0
    %1808 = vadd.xlane.f32.xlu0 %v1807
    %v1809 = vpop.xlane.xlu0 %1808
    %v1810 = vrcp.pop %v1806
    %v1811 = vrcp.pop %v1809
    %v1812 = vmul.f32 %v1801, %v1810
    %v1813 = vmul.f32 %v1803, %v1811
    %1814 = vrot.lane.b32.xlu0 %v1720, 96
    %v1815 = vpop.permute.xlu0 %1814
    %v1818 = vsel %vm256, %v1812, 0
    %1820 = vmatpush.msra.mxu0 0.0
    %1821 = vmatpush.msra.mxu0 0.0
    %1822 = vmatpush.msra.mxu0 0.0
    %1823 = vmatpush.msra.mxu0 0.0
    %1824 = vmatpush.msra.mxu0 0.0
    %1825 = vmatpush.msra.mxu0 0.0
    %1826 = vmatpush.msra.mxu0 0.0
    %1827 = vmatpush.msra.mxu0 0.0
    %1828 = vmatpush.msra.mxu0 0.0
    %1829 = vmatpush.msra.mxu0 0.0
    %1830 = vmatpush.msra.mxu0 0.0
    %1831 = vmatpush.msra.mxu0 0.0
    %1832 = vmatpush.msra.mxu0 0.0
    %1833 = vmatpush.msra.mxu0 0.0
    %1834 = vmatpush.msra.mxu0 0.0
    %1835 = vmatpush.msra.mxu0 %v1815
    %1836 = vmatmul.f32.gmra.mxu0 %v1818
    %v1837 = vpop.f32.mrf.mxu0
    %v1838 = vadd.f32 0.0, %v1837
    %1839 = vdwg.mxu0
    %1840 = vrot.lane.b32.xlu0 %v1723, 96
    %v1841 = vpop.permute.xlu0 %1840
    %v1844 = vsel %vm256, %v1813, 0
    %1846 = vmatpush.msra.mxu0 0.0
    %1847 = vmatpush.msra.mxu0 0.0
    %1848 = vmatpush.msra.mxu0 0.0
    %1849 = vmatpush.msra.mxu0 0.0
    %1850 = vmatpush.msra.mxu0 0.0
    %1851 = vmatpush.msra.mxu0 0.0
    %1852 = vmatpush.msra.mxu0 0.0
    %1853 = vmatpush.msra.mxu0 0.0
    %1854 = vmatpush.msra.mxu0 0.0
    %1855 = vmatpush.msra.mxu0 0.0
    %1856 = vmatpush.msra.mxu0 0.0
    %1857 = vmatpush.msra.mxu0 0.0
    %1858 = vmatpush.msra.mxu0 0.0
    %1859 = vmatpush.msra.mxu0 0.0
    %1860 = vmatpush.msra.mxu0 0.0
    %1861 = vmatpush.msra.mxu0 %v1841
    %1862 = vmatmul.f32.gmra.mxu0 %v1844
    %v1863 = vpop.f32.mrf.mxu0
    %v1864 = vadd.f32 0.0, %v1863
    %1865 = vdwg.mxu0
    %1866 = vrot.lane.b32.xlu0 %v1687, 112
    %v1867 = vpop.permute.xlu0 %1866
    %1868 = vrot.lane.b32.xlu0 %v1720, 112
    %v1869 = vpop.permute.xlu0 %1868
    %v1870 = vsel %vm200, %v1867, 0
    %v1872 = vsel %vm200, %v1869, 0
    %1874 = vmatpush.xpose.msra.mxu0 0.0
    %1875 = vmatpush.xpose.msra.mxu0 0.0
    %1876 = vmatpush.xpose.msra.mxu0 0.0
    %1877 = vmatpush.xpose.msra.mxu0 0.0
    %1878 = vmatpush.xpose.msra.mxu0 0.0
    %1879 = vmatpush.xpose.msra.mxu0 0.0
    %1880 = vmatpush.xpose.msra.mxu0 0.0
    %1881 = vmatpush.xpose.msra.mxu0 0.0
    %1882 = vmatpush.xpose.msra.mxu0 0.0
    %1883 = vmatpush.xpose.msra.mxu0 0.0
    %1884 = vmatpush.xpose.msra.mxu0 0.0
    %1885 = vmatpush.xpose.msra.mxu0 0.0
    %1886 = vmatpush.xpose.msra.mxu0 0.0
    %1887 = vmatpush.xpose.msra.mxu0 0.0
    %1888 = vmatpush.xpose.msra.mxu0 0.0
    %1889 = vmatpush.xpose.msra.mxu0 %v1872
    %1890 = vmatmul.f32.gmra.mxu0 %v1870
    %v1891 = vpop.f32.mrf.mxu0
    %v1892 = vadd.f32 0.0, %v1891
    %1893 = vdwg.mxu0
    %1894 = vrot.lane.b32.xlu0 %v1690, 112
    %v1895 = vpop.permute.xlu0 %1894
    %1896 = vrot.lane.b32.xlu0 %v1723, 112
    %v1897 = vpop.permute.xlu0 %1896
    %v1898 = vsel %vm200, %v1895, 0
    %v1900 = vsel %vm200, %v1897, 0
    %1902 = vmatpush.xpose.msra.mxu0 0.0
    %1903 = vmatpush.xpose.msra.mxu0 0.0
    %1904 = vmatpush.xpose.msra.mxu0 0.0
    %1905 = vmatpush.xpose.msra.mxu0 0.0
    %1906 = vmatpush.xpose.msra.mxu0 0.0
    %1907 = vmatpush.xpose.msra.mxu0 0.0
    %1908 = vmatpush.xpose.msra.mxu0 0.0
    %1909 = vmatpush.xpose.msra.mxu0 0.0
    %1910 = vmatpush.xpose.msra.mxu0 0.0
    %1911 = vmatpush.xpose.msra.mxu0 0.0
    %1912 = vmatpush.xpose.msra.mxu0 0.0
    %1913 = vmatpush.xpose.msra.mxu0 0.0
    %1914 = vmatpush.xpose.msra.mxu0 0.0
    %1915 = vmatpush.xpose.msra.mxu0 0.0
    %1916 = vmatpush.xpose.msra.mxu0 0.0
    %1917 = vmatpush.xpose.msra.mxu0 %v1900
    %1918 = vmatmul.f32.gmra.mxu0 %v1898
    %v1919 = vpop.f32.mrf.mxu0
    %v1920 = vadd.f32 0.0, %v1919
    %1921 = vdwg.mxu0
    %v1922 = vmul.f32 %v1892, 0.25
    %v1923 = vmul.f32 %v1920, 0.25
    %v1924 = vadd.f32 %v1922, %v150
    %v1925 = vadd.f32 %v1923, %v151
    %v1926 = vsel %vm256, %v1924, -inf
    %1927 = vmax.xlane.f32.xlu0 %v1926
    %v1928 = vpop.xlane.xlu0 %1927
    %v1929 = vsel %vm256, %v1925, -inf
    %1930 = vmax.xlane.f32.xlu0 %v1929
    %v1931 = vpop.xlane.xlu0 %1930
    %v1932 = vsub.f32 %v1924, %v1928
    %v1933 = vsub.f32 %v1925, %v1931
    %v1934 = vmul.f32 %v1932, 1.442695
    %v1935 = vpow.pop %v1934
    %v1936 = vmul.f32 %v1933, 1.442695
    %v1937 = vpow.pop %v1936
    %v1938 = vsel %vm256, %v1935, 0.0
    %1939 = vadd.xlane.f32.xlu0 %v1938
    %v1940 = vpop.xlane.xlu0 %1939
    %v1941 = vsel %vm256, %v1937, 0.0
    %1942 = vadd.xlane.f32.xlu0 %v1941
    %v1943 = vpop.xlane.xlu0 %1942
    %v1944 = vrcp.pop %v1940
    %v1945 = vrcp.pop %v1943
    %v1946 = vmul.f32 %v1935, %v1944
    %v1947 = vmul.f32 %v1937, %v1945
    %1948 = vrot.lane.b32.xlu0 %v1720, 80
    %v1949 = vpop.permute.xlu0 %1948
    %v1952 = vsel %vm256, %v1946, 0
    %1954 = vmatpush.msra.mxu0 0.0
    %1955 = vmatpush.msra.mxu0 0.0
    %1956 = vmatpush.msra.mxu0 0.0
    %1957 = vmatpush.msra.mxu0 0.0
    %1958 = vmatpush.msra.mxu0 0.0
    %1959 = vmatpush.msra.mxu0 0.0
    %1960 = vmatpush.msra.mxu0 0.0
    %1961 = vmatpush.msra.mxu0 0.0
    %1962 = vmatpush.msra.mxu0 0.0
    %1963 = vmatpush.msra.mxu0 0.0
    %1964 = vmatpush.msra.mxu0 0.0
    %1965 = vmatpush.msra.mxu0 0.0
    %1966 = vmatpush.msra.mxu0 0.0
    %1967 = vmatpush.msra.mxu0 0.0
    %1968 = vmatpush.msra.mxu0 0.0
    %1969 = vmatpush.msra.mxu0 %v1949
    %1970 = vmatmul.f32.gmra.mxu0 %v1952
    %v1971 = vpop.f32.mrf.mxu0
    %v1972 = vadd.f32 0.0, %v1971
    %1973 = vdwg.mxu0
    %1974 = vrot.lane.b32.xlu0 %v1723, 80
    %v1975 = vpop.permute.xlu0 %1974
    %v1978 = vsel %vm256, %v1947, 0
    %1980 = vmatpush.msra.mxu0 0.0
    %1981 = vmatpush.msra.mxu0 0.0
    %1982 = vmatpush.msra.mxu0 0.0
    %1983 = vmatpush.msra.mxu0 0.0
    %1984 = vmatpush.msra.mxu0 0.0
    %1985 = vmatpush.msra.mxu0 0.0
    %1986 = vmatpush.msra.mxu0 0.0
    %1987 = vmatpush.msra.mxu0 0.0
    %1988 = vmatpush.msra.mxu0 0.0
    %1989 = vmatpush.msra.mxu0 0.0
    %1990 = vmatpush.msra.mxu0 0.0
    %1991 = vmatpush.msra.mxu0 0.0
    %1992 = vmatpush.msra.mxu0 0.0
    %1993 = vmatpush.msra.mxu0 0.0
    %1994 = vmatpush.msra.mxu0 0.0
    %1995 = vmatpush.msra.mxu0 %v1975
    %1996 = vmatmul.f32.gmra.mxu0 %v1978
    %v1997 = vpop.f32.mrf.mxu0
    %v1998 = vadd.f32 0.0, %v1997
    %1999 = vdwg.mxu0
    %v2001 = vsel %vm200, %v1972, 0
    %v2004 = vsel %vm200, %v1998, 0
    %2006 = vmatpush.msra.mxu0 0.0
    %2007 = vmatpush.msra.mxu0 0.0
    %2008 = vmatpush.msra.mxu0 0.0
    %2009 = vmatpush.msra.mxu0 0.0
    %2010 = vmatpush.msra.mxu0 0.0
    %2011 = vmatpush.msra.mxu0 0.0
    %2012 = vmatpush.msra.mxu0 0.0
    %2013 = vmatpush.msra.mxu0 0.0
    %2014 = vmatpush.msra.mxu0 0.0
    %2015 = vmatpush.msra.mxu0 0.0
    %2016 = vmatpush.msra.mxu0 0.0
    %2017 = vmatpush.msra.mxu0 0.0
    %2018 = vmatpush.msra.mxu0 0.0
    %2019 = vmatpush.msra.mxu0 0.0
    %2020 = vmatpush.msra.mxu0 %v1729
    %2021 = vmatpush.msra.mxu0 %v1728
    %2022 = vmatmul.f32.gmra.mxu0 %v2001
    %v2023 = vpop.f32.mrf.mxu0
    %v2024 = vadd.f32 0.0, %v2023
    %2025 = vmatmul.f32.gmra.mxu0 %v2004
    %v2026 = vpop.f32.mrf.mxu0
    %v2027 = vadd.f32 0.0, %v2026
    %2028 = vdwg.mxu0
    %v2030 = vsel %vm200, %v1838, 0
    %v2033 = vsel %vm200, %v1864, 0
    %2035 = vmatpush.msra.mxu0 0.0
    %2036 = vmatpush.msra.mxu0 0.0
    %2037 = vmatpush.msra.mxu0 0.0
    %2038 = vmatpush.msra.mxu0 0.0
    %2039 = vmatpush.msra.mxu0 0.0
    %2040 = vmatpush.msra.mxu0 0.0
    %2041 = vmatpush.msra.mxu0 0.0
    %2042 = vmatpush.msra.mxu0 0.0
    %2043 = vmatpush.msra.mxu0 0.0
    %2044 = vmatpush.msra.mxu0 0.0
    %2045 = vmatpush.msra.mxu0 0.0
    %2046 = vmatpush.msra.mxu0 0.0
    %2047 = vmatpush.msra.mxu0 0.0
    %2048 = vmatpush.msra.mxu0 0.0
    %2049 = vmatpush.msra.mxu0 %v1727
    %2050 = vmatpush.msra.mxu0 %v1726
    %2051 = vmatmul.f32.gmra.mxu0 %v2030
    %v2052 = vpop.f32.mrf.mxu0
    %v2053 = vadd.f32 %v2024, %v2052
    %2054 = vmatmul.f32.gmra.mxu0 %v2033
    %v2055 = vpop.f32.mrf.mxu0
    %v2056 = vadd.f32 %v2027, %v2055
    %2057 = vdwg.mxu0
    %v2059 = vperm.slane %v1731, 0
    %v2061 = vadd.f32 %v2053, %v2059
    %v2062 = vadd.f32 %v2056, %v2059
    %v2063 = vadd.f32 %v2061, %v1651
    %v2064 = vadd.f32 %v2062, %v1652
    %v2065 = vsel %vm160, %v2063, 0.0
    %2066 = vadd.xlane.f32.xlu0 %v2065
    %v2067 = vpop.xlane.xlu0 %2066
    %v2068 = vsel %vm160, %v2064, 0.0
    %2069 = vadd.xlane.f32.xlu0 %v2068
    %v2070 = vpop.xlane.xlu0 %2069
    %v2071 = vmul.f32 %v2067, %v542
    %v2072 = vmul.f32 %v2070, %v542
    %v2073 = vsub.f32 %v2063, %v2071
    %v2074 = vsub.f32 %v2064, %v2072
    %v2075 = vmul.f32 %v2073, %v2073
    %v2076 = vmul.f32 %v2074, %v2074
    %v2077 = vsel %vm160, %v2075, 0.0
    %2078 = vadd.xlane.f32.xlu0 %v2077
    %v2079 = vpop.xlane.xlu0 %2078
    %v2080 = vsel %vm160, %v2076, 0.0
    %2081 = vadd.xlane.f32.xlu0 %v2080
    %v2082 = vpop.xlane.xlu0 %2081
    %v2083 = vmul.f32 %v2079, %v542
    %v2084 = vmul.f32 %v2082, %v542
    %v2085 = vadd.f32 %v2083, 1e-05
    %v2086 = vadd.f32 %v2084, 1e-05
    %v2087 = vrsqrt.pop %v2085
    %v2088 = vmul.f32 %v2087, %v2085
    %v2089 = vmul.f32 %v2088, %v2087
    %v2090 = vmul.f32 0.5, %v2089
    %v2091 = vsub.f32 1.5, %v2090
    %v2092 = vmul.f32 %v2087, %v2091
    %vm2093 = vweird.f32 %v2085
    %vm2094 = vweird.f32 %v2087
    %vm2095 = vmor %vm2093, %vm2094
    %v2096 = vsel %vm2095, %v2087, %v2092
    %v2097 = vrsqrt.pop %v2086
    %v2098 = vmul.f32 %v2097, %v2086
    %v2099 = vmul.f32 %v2098, %v2097
    %v2100 = vmul.f32 0.5, %v2099
    %v2101 = vsub.f32 1.5, %v2100
    %v2102 = vmul.f32 %v2097, %v2101
    %vm2103 = vweird.f32 %v2086
    %vm2104 = vweird.f32 %v2097
    %vm2105 = vmor %vm2103, %vm2104
    %v2106 = vsel %vm2105, %v2097, %v2102
    %v2107 = vmul.f32 %v2073, %v2096
    %v2108 = vmul.f32 %v2074, %v2106
    %v2110 = vperm.slane %v1733, 0
    %v2112 = vmul.f32 %v2107, %v2110
    %v2113 = vmul.f32 %v2108, %v2110
    %v2115 = vperm.slane %v1735, 0
    %v2117 = vadd.f32 %v2112, %v2115
    %v2118 = vadd.f32 %v2113, %v2115
    %s2119 = scalar_lea.vmem %s18, 32
    %v2120 = vld [vmem:[%s2119] sm:$0xff]
    %v2121 = vld [vmem:[%s2119 + $0x8] sm:$0xff]
    %v2122 = vld [vmem:[%s2119 + $0x10] sm:$0xff]
    %v2123 = vld [vmem:[%s2119 + $0x18] sm:$0xff]
    %s2124 = scalar_lea.vmem [#allocation2], 1
    %v2125 = vld [vmem:[%s2124] sm:$0x1]
    %s2126 = scalar_lea.vmem %s20, 64
    %v2127 = vld [vmem:[%s2126] sm:$0xff]
    %v2128 = vld [vmem:[%s2126 + $0x8] sm:$0xff]
    %v2129 = vld [vmem:[%s2126 + $0x10] sm:$0xff]
    %v2130 = vld [vmem:[%s2126 + $0x18] sm:$0xff]
    %v2131 = vld [vmem:[%s2126 + $0x20] sm:$0xff]
    %v2132 = vld [vmem:[%s2126 + $0x28] sm:$0xff]
    %v2133 = vld [vmem:[%s2126 + $0x30] sm:$0xff]
    %v2134 = vld [vmem:[%s2126 + $0x38] sm:$0xff]
    %s2135 = scalar_lea.vmem [#allocation5], 1
    %v2136 = vld [vmem:[%s2135] sm:$0x1]
    %s2137 = scalar_lea.vmem [#allocation7], 1
    %v2138 = vld [vmem:[%s2137] sm:$0x1]
    %s2139 = scalar_lea.vmem [#allocation8], 1
    %v2140 = vld [vmem:[%s2139] sm:$0x1]
    %v2142 = vperm.slane %v2125, 0
    %v2145 = vsel %vm160, %v2117, 0
    %v2148 = vsel %vm160, %v2118, 0
    %2150 = vmatpush.msra.mxu0 0.0
    %2151 = vmatpush.msra.mxu0 0.0
    %2152 = vmatpush.msra.mxu0 0.0
    %2153 = vmatpush.msra.mxu0 0.0
    %2154 = vmatpush.msra.mxu0 0.0
    %2155 = vmatpush.msra.mxu0 0.0
    %2156 = vmatpush.msra.mxu0 0.0
    %2157 = vmatpush.msra.mxu0 0.0
    %2158 = vmatpush.msra.mxu0 0.0
    %2159 = vmatpush.msra.mxu0 0.0
    %2160 = vmatpush.msra.mxu0 0.0
    %2161 = vmatpush.msra.mxu0 0.0
    %2162 = vmatpush.msra.mxu0 %v2123
    %2163 = vmatpush.msra.mxu0 %v2122
    %2164 = vmatpush.msra.mxu0 %v2121
    %2165 = vmatpush.msra.mxu0 %v2120
    %2166 = vmatmul.f32.gmra.mxu0 %v2145
    %v2167 = vpop.f32.mrf.mxu0
    %v2168 = vadd.f32 %v2142, %v2167
    %2169 = vmatmul.f32.gmra.mxu0 %v2148
    %v2170 = vpop.f32.mrf.mxu0
    %v2171 = vadd.f32 %v2142, %v2170
    %2172 = vdwg.mxu0
    %v2173 = vmul.f32 %v2168, 0.5
    %v2174 = vmul.f32 %v2171, 0.5
    %v2175 = vmul.f32 %v2168, 0.044715
    %v2176 = vmul.f32 %v2171, 0.044715
    %v2177 = vmul.f32 %v2175, %v2168
    %v2178 = vmul.f32 %v2176, %v2171
    %v2179 = vmul.f32 %v2177, %v2168
    %v2180 = vmul.f32 %v2178, %v2171
    %v2181 = vadd.f32 %v2168, %v2179
    %v2182 = vadd.f32 %v2171, %v2180
    %v2183 = vmul.f32 %v2181, 0.7978846
    %v2184 = vmul.f32 %v2182, 0.7978846
    %v2185 = vtanh.pop %v2183
    %v2186 = vtanh.pop %v2184
    %v2187 = vadd.f32 %v2185, 1.0
    %v2188 = vadd.f32 %v2186, 1.0
    %v2189 = vmul.f32 %v2173, %v2187
    %v2190 = vmul.f32 %v2174, %v2188
    %v2192 = vperm.slane %v2136, 0
    %v2195 = vsel %vm1124, %v2189, 0
    %v2198 = vsel %vm1124, %v2190, 0
    %2200 = vmatpush.msra.mxu0 0.0
    %2201 = vmatpush.msra.mxu0 0.0
    %2202 = vmatpush.msra.mxu0 0.0
    %2203 = vmatpush.msra.mxu0 0.0
    %2204 = vmatpush.msra.mxu0 0.0
    %2205 = vmatpush.msra.mxu0 0.0
    %2206 = vmatpush.msra.mxu0 0.0
    %2207 = vmatpush.msra.mxu0 0.0
    %2208 = vmatpush.msra.mxu0 %v2134
    %2209 = vmatpush.msra.mxu0 %v2133
    %2210 = vmatpush.msra.mxu0 %v2132
    %2211 = vmatpush.msra.mxu0 %v2131
    %2212 = vmatpush.msra.mxu0 %v2130
    %2213 = vmatpush.msra.mxu0 %v2129
    %2214 = vmatpush.msra.mxu0 %v2128
    %2215 = vmatpush.msra.mxu0 %v2127
    %2216 = vmatmul.f32.gmra.mxu0 %v2195
    %v2217 = vpop.f32.mrf.mxu0
    %v2218 = vadd.f32 %v2192, %v2217
    %2219 = vmatmul.f32.gmra.mxu0 %v2198
    %v2220 = vpop.f32.mrf.mxu0
    %v2221 = vadd.f32 %v2192, %v2220
    %2222 = vdwg.mxu0
    %v2223 = vadd.f32 %v2218, %v2117
    %v2224 = vadd.f32 %v2221, %v2118
    %v2225 = vsel %vm160, %v2223, 0.0
    %2226 = vadd.xlane.f32.xlu0 %v2225
    %v2227 = vpop.xlane.xlu0 %2226
    %v2228 = vsel %vm160, %v2224, 0.0
    %2229 = vadd.xlane.f32.xlu0 %v2228
    %v2230 = vpop.xlane.xlu0 %2229
    %v2231 = vmul.f32 %v2227, %v542
    %v2232 = vmul.f32 %v2230, %v542
    %v2233 = vsub.f32 %v2223, %v2231
    %v2234 = vsub.f32 %v2224, %v2232
    %v2235 = vmul.f32 %v2233, %v2233
    %v2236 = vmul.f32 %v2234, %v2234
    %v2237 = vsel %vm160, %v2235, 0.0
    %2238 = vadd.xlane.f32.xlu0 %v2237
    %v2239 = vpop.xlane.xlu0 %2238
    %v2240 = vsel %vm160, %v2236, 0.0
    %2241 = vadd.xlane.f32.xlu0 %v2240
    %v2242 = vpop.xlane.xlu0 %2241
    %v2243 = vmul.f32 %v2239, %v542
    %v2244 = vmul.f32 %v2242, %v542
    %v2245 = vadd.f32 %v2243, 1e-05
    %v2246 = vadd.f32 %v2244, 1e-05
    %v2247 = vrsqrt.pop %v2245
    %v2248 = vmul.f32 %v2247, %v2245
    %v2249 = vmul.f32 %v2248, %v2247
    %v2250 = vmul.f32 0.5, %v2249
    %v2251 = vsub.f32 1.5, %v2250
    %v2252 = vmul.f32 %v2247, %v2251
    %vm2253 = vweird.f32 %v2245
    %vm2254 = vweird.f32 %v2247
    %vm2255 = vmor %vm2253, %vm2254
    %v2256 = vsel %vm2255, %v2247, %v2252
    %v2257 = vrsqrt.pop %v2246
    %v2258 = vmul.f32 %v2257, %v2246
    %v2259 = vmul.f32 %v2258, %v2257
    %v2260 = vmul.f32 0.5, %v2259
    %v2261 = vsub.f32 1.5, %v2260
    %v2262 = vmul.f32 %v2257, %v2261
    %vm2263 = vweird.f32 %v2246
    %vm2264 = vweird.f32 %v2257
    %vm2265 = vmor %vm2263, %vm2264
    %v2266 = vsel %vm2265, %v2257, %v2262
    %v2267 = vmul.f32 %v2233, %v2256
    %v2268 = vmul.f32 %v2234, %v2266
    %v2270 = vperm.slane %v2138, 0
    %v2272 = vmul.f32 %v2267, %v2270
    %v2273 = vmul.f32 %v2268, %v2270
    %v2275 = vperm.slane %v2140, 0
    %v2277 = vadd.f32 %v2272, %v2275
    %v2278 = vadd.f32 %v2273, %v2275
    %s2279 = scalar_lea.vmem %s25, 32
    %2280 = vst.msk [vmem:[%s2279] sm:$0xff] %vm256, %v1346
    %2281 = vst.msk [vmem:[%s2279 + $0x8] sm:$0xff] %vm256, %v1480
    %2282 = vst.msk [vmem:[%s2279 + $0x10] sm:$0xff] %vm256, %v1347
    %2283 = vst.msk [vmem:[%s2279 + $0x18] sm:$0xff] %vm256, %v1481
    %s2284 = scalar_lea.vmem %s26, 32
    %2285 = vst.msk [vmem:[%s2284] sm:$0xff] %vm256, %v1812
    %2286 = vst.msk [vmem:[%s2284 + $0x8] sm:$0xff] %vm256, %v1946
    %2287 = vst.msk [vmem:[%s2284 + $0x10] sm:$0xff] %vm256, %v1813
    %2288 = vst.msk [vmem:[%s2284 + $0x18] sm:$0xff] %vm256, %v1947
    %2289 = vst.msk [vmem:[#allocation10] sm:$0xff] %vm160, %v2277
    %2290 = vst.msk [vmem:[#allocation10 + $0x8] sm:$0xff] %vm160, %v2278
    // Predicated region
    $region114: #{opinion_transformer_forward.3} parent=1 // pred_check
      _
    $region115: #{opinion_transformer_forward.3} parent=1 // pred_check_branch
      %2292 = sbr.rel (0) target = $region117
    $region116: #{opinion_transformer_forward.3} parent=1 // pred_region
      %2294 = vsyncadd [#allocation4], 0
      %s2295 = sshll.u32 [#allocation10], 4
      %s2296 = int_to_ptr.vmem [resolvable:$true] %s2295
      %s2297 = sshll.u32 %s24, 4
      %s2298 = int_to_ptr.hbm [resolvable:$true] %s2297
      %2303 = dma.vmem_to_hbm [thread:$0]  %s2296, 256, %s2298, [#allocation4], 128, 128, 8
    $region117: #{opinion_transformer_forward.3} parent=1 // pred_fallthru
      _
    // Predicated region
    $region118: #{opinion_transformer_forward.3} parent=1 // pred_check
      _
    $region119: #{opinion_transformer_forward.3} parent=1 // pred_check_branch
      %2305 = sbr.rel (0) target = $region121
    $region120: #{opinion_transformer_forward.3} parent=1 // pred_region
      _
    $region121: #{opinion_transformer_forward.3} parent=1 // pred_fallthru
      _
    // Predicated region
    $region122: #{opinion_transformer_forward.3} parent=1 // pred_check
      _
    $region123: #{opinion_transformer_forward.3} parent=1 // pred_check_branch
      %2307 = sbr.rel (0) target = $region125
    $region124: #{opinion_transformer_forward.3} parent=1 // pred_region
      _
    $region125: #{opinion_transformer_forward.3} parent=1 // pred_fallthru
      _
    // Predicated region
    $region126: #{opinion_transformer_forward.3} parent=1 // pred_check
      _
    $region127: #{opinion_transformer_forward.3} parent=1 // pred_check_branch
      %2309 = sbr.rel (0) target = $region129
    $region128: #{opinion_transformer_forward.3} parent=1 // pred_region
      %2311 = dma.done [#allocation4], 256
    $region129: #{opinion_transformer_forward.3} parent=1 // pred_fallthru
      _
    // Predicated region
    $region130: #{opinion_transformer_forward.3} parent=1 // pred_check
      _
    $region131: #{opinion_transformer_forward.3} parent=1 // pred_check_branch
      %2313 = sbr.rel (0) target = $region133
    $region132: #{opinion_transformer_forward.3} parent=1 // pred_region
      _
    $region133: #{opinion_transformer_forward.3} parent=1 // pred_fallthru
      _
    // Predicated region
    $region134: #{opinion_transformer_forward.3} parent=1 // pred_check
      _
    $region135: #{opinion_transformer_forward.3} parent=1 // pred_check_branch
      %2315 = sbr.rel (0) target = $region137
    $region136: #{opinion_transformer_forward.3} parent=1 // pred_region
      _
    $region137: #{opinion_transformer_forward.3} parent=1 // pred_fallthru
      _
    %2316 = vsyncpa [#allocation3], 1
    %2317 = vsyncpa [#allocation6], 1
    %2318 = vsyncpa [#allocation9], 1
    %2319 = vsyncpa [#allocation4], 1

</llo_original>
